<compile_context>
chip_gen: v5e
topology: v5e:2x2
jax: 0.10.0
libtpu: 0.0.40
codegen_flags: <defaults>
</compile_context>

<pallas_src>
import functools

import jax
import jax.numpy as jnp
from jax.experimental import pallas as pl
from jax.experimental.pallas import tpu as pltpu


_N_LAYERS = 6
_MXU_DTYPE = jnp.bfloat16   # MXU-native; halves weight DMA everywhere.


def _layer_dims(input_size, middle_size):
    # encoder: input -> 1024 -> 512 -> middle   (Tanh after each)
    # decoder: middle -> 512 -> 1024 -> input   (Tanh after first two only)
    return [
        (input_size, 1024),
        (1024, 512),
        (512, middle_size),
        (middle_size, 512),
        (512, 1024),
        (1024, input_size),
    ]


def _round_up(n, m):
    return ((n + m - 1) // m) * m


def _device_kind():
    try:
        return jax.devices()[0].device_kind.lower()
    except Exception:
        return ""


# ----------------------------------------------------------------------------
# Fused Pallas kernel: the entire 6-layer MLP per batch tile
# ----------------------------------------------------------------------------
def _autoencoder_kernel(x_ref, *refs, epi_dtype):
    """refs = (w0, b0, w1, b1, ..., w5, b5, recon_ref, middle_ref)."""
    param_refs = refs[: 2 * _N_LAYERS]
    recon_ref = refs[2 * _N_LAYERS]
    middle_ref = refs[2 * _N_LAYERS + 1]

    h = x_ref[...]                            # (bm, input_size), f32 (cast below)
    for li in range(_N_LAYERS):
        w_ref = param_refs[2 * li]
        b_ref = param_refs[2 * li + 1]
        # bf16 MXU matmul with f32 accumulation.
        y = jnp.dot(h.astype(_MXU_DTYPE), w_ref[...],
                    preferred_element_type=jnp.float32)
        # Epilogue (bias + tanh) in bf16 on v6e/v7x, f32 on v5e and older.
        y = y.astype(epi_dtype) + b_ref[...]  # (1, N) bias row broadcasts
        h = jnp.tanh(y) if li != _N_LAYERS - 1 else y
        if li == 2:                           # encoder output = middle_x
            middle_ref[...] = h.astype(middle_ref.dtype)
    recon_ref[...] = h.astype(recon_ref.dtype)


# ----------------------------------------------------------------------------
# Wrapper: builds specs, picks batch tile, handles padding / dtype casts
# ----------------------------------------------------------------------------
def autoencoder_forward(params, x, *, max_bm=None, out_dtype=jnp.bfloat16):
    """Returns (reconstruction, middle_x), matching autoencoder.forward."""
    M, input_size = x.shape
    middle_size = params[2][0].shape[1]

    kind = _device_kind()
    is_v7 = ("7x" in kind) or ("v7" in kind)
    bf16_vpu = any(tag in kind for tag in ("v6", "v7", "7x"))
    epi_dtype = jnp.bfloat16 if bf16_vpu else jnp.float32

    if max_bm is None:
        # Larger tiles amortize per-grid-step overhead on v5e/v6e (128 MiB VMEM);
        # keep 256 on v7x (64 MiB/TC).
        max_bm = 256 if is_v7 else 512

    # ---- Batch tiling ------------------------------------------------------
    if M <= max_bm:
        if is_v7 and M > 32:
            # Ensure >= 2 grid steps so the parallel axis shards across both
            # v7x TensorCores.
            bm = _round_up(pl.cdiv(M, 2), 16)
            Mp = 2 * bm
        else:
            bm, Mp = M, M
    else:
        bm = max_bm
        Mp = _round_up(M, bm)

    xp = x if Mp == M else jnp.pad(x, ((0, Mp - M), (0, 0)))
    # Note: no wrapper-side bf16 cast of x; the in-kernel cast is free VPU work.

    # ---- Pad output feature dims to multiples of 128 (lane-dense stores) ----
    input_pad = _round_up(input_size, 128)
    middle_pad = _round_up(middle_size, 128)

    padded = [list(p) for p in params]
    if middle_pad != middle_size:
        w2, b2 = padded[2]
        padded[2] = [jnp.pad(w2, ((0, 0), (0, middle_pad - middle_size))),
                     jnp.pad(b2, (0, middle_pad - middle_size))]
        w3, b3 = padded[3]
        padded[3] = [jnp.pad(w3, ((0, middle_pad - middle_size), (0, 0))), b3]
    if input_pad != input_size:
        w5, b5 = padded[5]
        padded[5] = [jnp.pad(w5, ((0, 0), (0, input_pad - input_size))),
                     jnp.pad(b5, (0, input_pad - input_size))]

    # ---- Specs / flattened params ------------------------------------------
    flat_params = []
    in_specs = [pl.BlockSpec((bm, input_size), lambda i: (i, 0))]
    for w, b in padded:
        din, dout = w.shape
        flat_params.append(w.astype(_MXU_DTYPE))
        flat_params.append(b.reshape(1, dout).astype(epi_dtype))
        # Constant block index -> resident; Buffered(1) -> no double-buffering.
        in_specs.append(pl.BlockSpec((din, dout), lambda i: (0, 0),
                                     pipeline_mode=pl.Buffered(1)))
        in_specs.append(pl.BlockSpec((1, dout), lambda i: (0, 0),
                                     pipeline_mode=pl.Buffered(1)))

    out_shape = (
        jax.ShapeDtypeStruct((Mp, input_pad), out_dtype),
        jax.ShapeDtypeStruct((Mp, middle_pad), out_dtype),
    )
    out_specs = (
        pl.BlockSpec((bm, input_pad), lambda i: (i, 0)),
        pl.BlockSpec((bm, middle_pad), lambda i: (i, 0)),
    )

    # ---- VMEM budget & compiler params --------------------------------------
    out_bytes = jnp.dtype(out_dtype).itemsize
    epi_bytes = jnp.dtype(epi_dtype).itemsize
    x_bytes = jnp.dtype(x.dtype).itemsize
    w_bytes = sum(w.size * 2 + b.size * epi_bytes for w, b in padded)  # single-buffered
    io_bytes = 2 * bm * (input_size * x_bytes                          # x tile (2 bufs)
                         + (input_pad + middle_pad) * out_bytes)       # out tiles (2 bufs)
    act_bytes = 3 * bm * max(1024, input_pad, middle_pad) * 4          # live activations
    total = w_bytes + io_bytes + act_bytes + (2 << 20)

    compiler_kwargs = {}
    if total > (32 << 20):
        try:
            vmem_cap = pltpu.get_tpu_info().vmem_capacity_bytes
        except Exception:
            vmem_cap = 64 << 20                       # conservative (v7x per-TC)
        compiler_kwargs["vmem_limit_bytes"] = int(min(total, 0.85 * vmem_cap))

    kernel = functools.partial(_autoencoder_kernel, epi_dtype=epi_dtype)
    recon, middle = pl.pallas_call(
        kernel,
        out_shape=out_shape,
        grid_spec=pltpu.PrefetchScalarGridSpec(
            num_scalar_prefetch=0,
            grid=(Mp // bm,),
            in_specs=in_specs,
            out_specs=out_specs,
        ),
        compiler_params=pltpu.CompilerParams(
            dimension_semantics=("parallel",),   # batch tiles shard across v7x cores
            **compiler_kwargs,
        ),
    )(xp, *flat_params)

    recon = recon[:M, :input_size]
    middle = middle[:M, :middle_size]
    return recon, middle


# ----------------------------------------------------------------------------
# Parameter construction (deterministic, PyTorch-like uniform init)
# ----------------------------------------------------------------------------
def _init_linear(key, fan_in, fan_out, dtype=jnp.float32):
    kw, kb = jax.random.split(key)
    bound = 1.0 / jnp.sqrt(float(fan_in))
    w = jax.random.uniform(kw, (fan_in, fan_out), dtype, minval=-bound, maxval=bound)
    b = jax.random.uniform(kb, (fan_out,), dtype, minval=-bound, maxval=bound)
    return w, b


def init_autoencoder_params(key, input_size, middle_size):
    keys = jax.random.split(key, _N_LAYERS)
    dims = _layer_dims(input_size, middle_size)
    return [_init_linear(k, i, o) for k, (i, o) in zip(keys, dims)]


# ----------------------------------------------------------------------------
# Pure-JAX reference (bf16 matmul inputs, f32 accumulate/epilogue)
# ----------------------------------------------------------------------------
def autoencoder_reference(params, x):
    def layer(h, w, b, act):
        y = jnp.dot(h.astype(_MXU_DTYPE), w.astype(_MXU_DTYPE),
                    preferred_element_type=jnp.float32) + b
        return jnp.tanh(y) if act else y

    h = x
    mid = None
    for li, (w, b) in enumerate(params):
        h = layer(h, w, b, li != _N_LAYERS - 1)
        if li == 2:
            mid = h
    return h, mid


if __name__ == "__main__":
    batch = 8
    input_size = 256
    middle_size = 128

    key = jax.random.PRNGKey(0)
    kparams, kx = jax.random.split(key)
    params = init_autoencoder_params(kparams, input_size, middle_size)
    x = jax.random.normal(kx, (batch, input_size), dtype=jnp.float32)

    fwd = jax.jit(autoencoder_forward)
    recon, middle = fwd(params, x)
    jax.block_until_ready((recon, middle))

    recon_ref, middle_ref = autoencoder_reference(params, x)
    assert recon.shape == (batch, input_size)
    assert middle.shape == (batch, middle_size)
    # bf16 MXU inputs + bf16 epilogue/outputs -> loosened tolerances.
    recon32 = recon.astype(jnp.float32)
    middle32 = middle.astype(jnp.float32)
    assert jnp.allclose(recon32, recon_ref, atol=3e-2, rtol=3e-2), \
        float(jnp.max(jnp.abs(recon32 - recon_ref)))
    assert jnp.allclose(middle32, middle_ref, atol=3e-2, rtol=3e-2), \
        float(jnp.max(jnp.abs(middle32 - middle_ref)))

    print("KERNEL_OK")
</pallas_src>

<mosaic_0001>
module attributes {stable_mosaic.version = 11 : i64} {
  func.func @_autoencoder_kernel(%arg0: i32, %arg1: memref<8x256xf32, #tpu.memory_space<vmem>>, %arg2: memref<256x1024xbf16, #tpu.memory_space<vmem>>, %arg3: memref<1x1024xf32, #tpu.memory_space<vmem>>, %arg4: memref<1024x512xbf16, #tpu.memory_space<vmem>>, %arg5: memref<1x512xf32, #tpu.memory_space<vmem>>, %arg6: memref<512x128xbf16, #tpu.memory_space<vmem>>, %arg7: memref<1x128xf32, #tpu.memory_space<vmem>>, %arg8: memref<128x512xbf16, #tpu.memory_space<vmem>>, %arg9: memref<1x512xf32, #tpu.memory_space<vmem>>, %arg10: memref<512x1024xbf16, #tpu.memory_space<vmem>>, %arg11: memref<1x1024xf32, #tpu.memory_space<vmem>>, %arg12: memref<1024x256xbf16, #tpu.memory_space<vmem>>, %arg13: memref<1x256xf32, #tpu.memory_space<vmem>>, %arg14: memref<8x256xbf16, #tpu.memory_space<vmem>>, %arg15: memref<8x128xbf16, #tpu.memory_space<vmem>>) attributes {dimension_semantics = [#tpu.dimension_semantics<parallel>], iteration_bounds = array<i64: 1>, scalar_prefetch = 0 : i64, scratch_operands = 0 : i64, tpu.core_type = #tpu.core_type<tc>, window_params = [{transform_indices = @transform_0, window_bounds = array<i64: 8, 256>}, {pipeline_mode = #tpu.pipeline_mode<synchronous>, transform_indices = @transform_1, window_bounds = array<i64: 256, 1024>}, {pipeline_mode = #tpu.pipeline_mode<synchronous>, transform_indices = @transform_2, window_bounds = array<i64: 1, 1024>}, {pipeline_mode = #tpu.pipeline_mode<synchronous>, transform_indices = @transform_3, window_bounds = array<i64: 1024, 512>}, {pipeline_mode = #tpu.pipeline_mode<synchronous>, transform_indices = @transform_4, window_bounds = array<i64: 1, 512>}, {pipeline_mode = #tpu.pipeline_mode<synchronous>, transform_indices = @transform_5, window_bounds = array<i64: 512, 128>}, {pipeline_mode = #tpu.pipeline_mode<synchronous>, transform_indices = @transform_6, window_bounds = array<i64: 1, 128>}, {pipeline_mode = #tpu.pipeline_mode<synchronous>, transform_indices = @transform_7, window_bounds = array<i64: 128, 512>}, {pipeline_mode = #tpu.pipeline_mode<synchronous>, transform_indices = @transform_8, window_bounds = array<i64: 1, 512>}, {pipeline_mode = #tpu.pipeline_mode<synchronous>, transform_indices = @transform_9, window_bounds = array<i64: 512, 1024>}, {pipeline_mode = #tpu.pipeline_mode<synchronous>, transform_indices = @transform_10, window_bounds = array<i64: 1, 1024>}, {pipeline_mode = #tpu.pipeline_mode<synchronous>, transform_indices = @transform_11, window_bounds = array<i64: 1024, 256>}, {pipeline_mode = #tpu.pipeline_mode<synchronous>, transform_indices = @transform_12, window_bounds = array<i64: 1, 256>}, {transform_indices = @transform_13, window_bounds = array<i64: 8, 256>}, {transform_indices = @transform_14, window_bounds = array<i64: 8, 128>}]} {
    %c0 = arith.constant 0 : index
    %c0_0 = arith.constant 0 : index
    %0 = vector.load %arg1[%c0, %c0_0] : memref<8x256xf32, #tpu.memory_space<vmem>>, vector<8x256xf32>
    %1 = arith.truncf %0 : vector<8x256xf32> to vector<8x256xbf16>
    %c0_1 = arith.constant 0 : index
    %c0_2 = arith.constant 0 : index
    %2 = vector.load %arg2[%c0_1, %c0_2] : memref<256x1024xbf16, #tpu.memory_space<vmem>>, vector<256x1024xbf16>
    %cst = arith.constant dense<0.000000e+00> : vector<8x1024xf32>
    %3 = tpu.matmul %1, %2, %cst {dimension_numbers = #tpu.dot_dimension_numbers<[1], [0], [0], [1], [0, 0, 1, 1], [], []>} : vector<8x256xbf16>, vector<256x1024xbf16>, vector<8x1024xf32> -> vector<8x1024xf32>
    %c0_3 = arith.constant 0 : index
    %c0_4 = arith.constant 0 : index
    %4 = vector.load %arg3[%c0_3, %c0_4] : memref<1x1024xf32, #tpu.memory_space<vmem>>, vector<1x1024xf32>
    %5 = vector.broadcast %4 : vector<1x1024xf32> to vector<8x1024xf32>
    %6 = arith.addf %3, %5 : vector<8x1024xf32>
    %7 = math.tanh %6 : vector<8x1024xf32>
    %8 = arith.truncf %7 : vector<8x1024xf32> to vector<8x1024xbf16>
    %c0_5 = arith.constant 0 : index
    %c0_6 = arith.constant 0 : index
    %9 = vector.load %arg4[%c0_5, %c0_6] : memref<1024x512xbf16, #tpu.memory_space<vmem>>, vector<1024x512xbf16>
    %cst_7 = arith.constant dense<0.000000e+00> : vector<8x512xf32>
    %10 = tpu.matmul %8, %9, %cst_7 {dimension_numbers = #tpu.dot_dimension_numbers<[1], [0], [0], [1], [0, 0, 1, 1], [], []>} : vector<8x1024xbf16>, vector<1024x512xbf16>, vector<8x512xf32> -> vector<8x512xf32>
    %c0_8 = arith.constant 0 : index
    %c0_9 = arith.constant 0 : index
    %11 = vector.load %arg5[%c0_8, %c0_9] : memref<1x512xf32, #tpu.memory_space<vmem>>, vector<1x512xf32>
    %12 = vector.broadcast %11 : vector<1x512xf32> to vector<8x512xf32>
    %13 = arith.addf %10, %12 : vector<8x512xf32>
    %14 = math.tanh %13 : vector<8x512xf32>
    %15 = arith.truncf %14 : vector<8x512xf32> to vector<8x512xbf16>
    %c0_10 = arith.constant 0 : index
    %c0_11 = arith.constant 0 : index
    %16 = vector.load %arg6[%c0_10, %c0_11] : memref<512x128xbf16, #tpu.memory_space<vmem>>, vector<512x128xbf16>
    %cst_12 = arith.constant dense<0.000000e+00> : vector<8x128xf32>
    %17 = tpu.matmul %15, %16, %cst_12 {dimension_numbers = #tpu.dot_dimension_numbers<[1], [0], [0], [1], [0, 0, 1, 1], [], []>} : vector<8x512xbf16>, vector<512x128xbf16>, vector<8x128xf32> -> vector<8x128xf32>
    %c0_13 = arith.constant 0 : index
    %c0_14 = arith.constant 0 : index
    %18 = vector.load %arg7[%c0_13, %c0_14] : memref<1x128xf32, #tpu.memory_space<vmem>>, vector<1x128xf32>
    %19 = vector.broadcast %18 : vector<1x128xf32> to vector<8x128xf32>
    %20 = arith.addf %17, %19 : vector<8x128xf32>
    %21 = math.tanh %20 : vector<8x128xf32>
    %22 = arith.truncf %21 : vector<8x128xf32> to vector<8x128xbf16>
    %c0_15 = arith.constant 0 : index
    %c0_16 = arith.constant 0 : index
    %23 = vector.load %arg15[%c0_15, %c0_16] : memref<8x128xbf16, #tpu.memory_space<vmem>>, vector<8x128xbf16>
    tpu.vector_store %arg15[%c0_15, %c0_16], %22 {strides = array<i32>} : memref<8x128xbf16, #tpu.memory_space<vmem>>, vector<8x128xbf16>,
    %24 = arith.truncf %21 : vector<8x128xf32> to vector<8x128xbf16>
    %c0_17 = arith.constant 0 : index
    %c0_18 = arith.constant 0 : index
    %25 = vector.load %arg8[%c0_17, %c0_18] : memref<128x512xbf16, #tpu.memory_space<vmem>>, vector<128x512xbf16>
    %cst_19 = arith.constant dense<0.000000e+00> : vector<8x512xf32>
    %26 = tpu.matmul %24, %25, %cst_19 {dimension_numbers = #tpu.dot_dimension_numbers<[1], [0], [0], [1], [0, 0, 1, 1], [], []>} : vector<8x128xbf16>, vector<128x512xbf16>, vector<8x512xf32> -> vector<8x512xf32>
    %c0_20 = arith.constant 0 : index
    %c0_21 = arith.constant 0 : index
    %27 = vector.load %arg9[%c0_20, %c0_21] : memref<1x512xf32, #tpu.memory_space<vmem>>, vector<1x512xf32>
    %28 = vector.broadcast %27 : vector<1x512xf32> to vector<8x512xf32>
    %29 = arith.addf %26, %28 : vector<8x512xf32>
    %30 = math.tanh %29 : vector<8x512xf32>
    %31 = arith.truncf %30 : vector<8x512xf32> to vector<8x512xbf16>
    %c0_22 = arith.constant 0 : index
    %c0_23 = arith.constant 0 : index
    %32 = vector.load %arg10[%c0_22, %c0_23] : memref<512x1024xbf16, #tpu.memory_space<vmem>>, vector<512x1024xbf16>
    %cst_24 = arith.constant dense<0.000000e+00> : vector<8x1024xf32>
    %33 = tpu.matmul %31, %32, %cst_24 {dimension_numbers = #tpu.dot_dimension_numbers<[1], [0], [0], [1], [0, 0, 1, 1], [], []>} : vector<8x512xbf16>, vector<512x1024xbf16>, vector<8x1024xf32> -> vector<8x1024xf32>
    %c0_25 = arith.constant 0 : index
    %c0_26 = arith.constant 0 : index
    %34 = vector.load %arg11[%c0_25, %c0_26] : memref<1x1024xf32, #tpu.memory_space<vmem>>, vector<1x1024xf32>
    %35 = vector.broadcast %34 : vector<1x1024xf32> to vector<8x1024xf32>
    %36 = arith.addf %33, %35 : vector<8x1024xf32>
    %37 = math.tanh %36 : vector<8x1024xf32>
    %38 = arith.truncf %37 : vector<8x1024xf32> to vector<8x1024xbf16>
    %c0_27 = arith.constant 0 : index
    %c0_28 = arith.constant 0 : index
    %39 = vector.load %arg12[%c0_27, %c0_28] : memref<1024x256xbf16, #tpu.memory_space<vmem>>, vector<1024x256xbf16>
    %cst_29 = arith.constant dense<0.000000e+00> : vector<8x256xf32>
    %40 = tpu.matmul %38, %39, %cst_29 {dimension_numbers = #tpu.dot_dimension_numbers<[1], [0], [0], [1], [0, 0, 1, 1], [], []>} : vector<8x1024xbf16>, vector<1024x256xbf16>, vector<8x256xf32> -> vector<8x256xf32>
    %c0_30 = arith.constant 0 : index
    %c0_31 = arith.constant 0 : index
    %41 = vector.load %arg13[%c0_30, %c0_31] : memref<1x256xf32, #tpu.memory_space<vmem>>, vector<1x256xf32>
    %42 = vector.broadcast %41 : vector<1x256xf32> to vector<8x256xf32>
    %43 = arith.addf %40, %42 : vector<8x256xf32>
    %44 = arith.truncf %43 : vector<8x256xf32> to vector<8x256xbf16>
    %c0_32 = arith.constant 0 : index
    %c0_33 = arith.constant 0 : index
    %45 = vector.load %arg14[%c0_32, %c0_33] : memref<8x256xbf16, #tpu.memory_space<vmem>>, vector<8x256xbf16>
    tpu.vector_store %arg14[%c0_32, %c0_33], %44 {strides = array<i32>} : memref<8x256xbf16, #tpu.memory_space<vmem>>, vector<8x256xbf16>,
    return
  }
  func.func @transform_0(%arg0: i32) -> (i32, i32) {
    %c0_i32 = arith.constant 0 : i32
    %c0_i32_0 = arith.constant 0 : i32
    return %arg0, %c0_i32 : i32, i32
  }
  func.func @transform_1(%arg0: i32) -> (i32, i32) {
    %c0_i32 = arith.constant 0 : i32
    %c0_i32_0 = arith.constant 0 : i32
    %c0_i32_1 = arith.constant 0 : i32
    return %c0_i32, %c0_i32_0 : i32, i32
  }
  func.func @transform_2(%arg0: i32) -> (i32, i32) {
    %c0_i32 = arith.constant 0 : i32
    %c0_i32_0 = arith.constant 0 : i32
    %c0_i32_1 = arith.constant 0 : i32
    return %c0_i32, %c0_i32_0 : i32, i32
  }
  func.func @transform_3(%arg0: i32) -> (i32, i32) {
    %c0_i32 = arith.constant 0 : i32
    %c0_i32_0 = arith.constant 0 : i32
    %c0_i32_1 = arith.constant 0 : i32
    return %c0_i32, %c0_i32_0 : i32, i32
  }
  func.func @transform_4(%arg0: i32) -> (i32, i32) {
    %c0_i32 = arith.constant 0 : i32
    %c0_i32_0 = arith.constant 0 : i32
    %c0_i32_1 = arith.constant 0 : i32
    return %c0_i32, %c0_i32_0 : i32, i32
  }
  func.func @transform_5(%arg0: i32) -> (i32, i32) {
    %c0_i32 = arith.constant 0 : i32
    %c0_i32_0 = arith.constant 0 : i32
    %c0_i32_1 = arith.constant 0 : i32
    return %c0_i32, %c0_i32_0 : i32, i32
  }
  func.func @transform_6(%arg0: i32) -> (i32, i32) {
    %c0_i32 = arith.constant 0 : i32
    %c0_i32_0 = arith.constant 0 : i32
    %c0_i32_1 = arith.constant 0 : i32
    return %c0_i32, %c0_i32_0 : i32, i32
  }
  func.func @transform_7(%arg0: i32) -> (i32, i32) {
    %c0_i32 = arith.constant 0 : i32
    %c0_i32_0 = arith.constant 0 : i32
    %c0_i32_1 = arith.constant 0 : i32
    return %c0_i32, %c0_i32_0 : i32, i32
  }
  func.func @transform_8(%arg0: i32) -> (i32, i32) {
    %c0_i32 = arith.constant 0 : i32
    %c0_i32_0 = arith.constant 0 : i32
    %c0_i32_1 = arith.constant 0 : i32
    return %c0_i32, %c0_i32_0 : i32, i32
  }
  func.func @transform_9(%arg0: i32) -> (i32, i32) {
    %c0_i32 = arith.constant 0 : i32
    %c0_i32_0 = arith.constant 0 : i32
    %c0_i32_1 = arith.constant 0 : i32
    return %c0_i32, %c0_i32_0 : i32, i32
  }
  func.func @transform_10(%arg0: i32) -> (i32, i32) {
    %c0_i32 = arith.constant 0 : i32
    %c0_i32_0 = arith.constant 0 : i32
    %c0_i32_1 = arith.constant 0 : i32
    return %c0_i32, %c0_i32_0 : i32, i32
  }
  func.func @transform_11(%arg0: i32) -> (i32, i32) {
    %c0_i32 = arith.constant 0 : i32
    %c0_i32_0 = arith.constant 0 : i32
    %c0_i32_1 = arith.constant 0 : i32
    return %c0_i32, %c0_i32_0 : i32, i32
  }
  func.func @transform_12(%arg0: i32) -> (i32, i32) {
    %c0_i32 = arith.constant 0 : i32
    %c0_i32_0 = arith.constant 0 : i32
    %c0_i32_1 = arith.constant 0 : i32
    return %c0_i32, %c0_i32_0 : i32, i32
  }
  func.func @transform_13(%arg0: i32) -> (i32, i32) {
    %c0_i32 = arith.constant 0 : i32
    %c0_i32_0 = arith.constant 0 : i32
    return %arg0, %c0_i32 : i32, i32
  }
  func.func @transform_14(%arg0: i32) -> (i32, i32) {
    %c0_i32 = arith.constant 0 : i32
    %c0_i32_0 = arith.constant 0 : i32
    return %arg0, %c0_i32 : i32, i32
  }
}

</mosaic_0001>

<llo_original>
// kernel: autoencoder_forward.1
$region0: #{autoencoder_forward.1}
  #allocation0 [shape = 'u32[]', space=smem, size = 0x4, offset = 0x4, fixed_abs, tag = 'smem constant byte address 0x4 - core index']
  #allocation1 [shape = 'u32[72,128]{1,0:T(1,128)}', space=vmem, size = 0x9000, scoped, tag = 'internal scratch']
  %s0 = inlined_call_operand.vmem [shape: f32[8,256], index: 0, kind: input, shape index: {}]
  %s1 = inlined_call_operand.vmem [shape: bf16[256,1024], index: 1, kind: input, shape index: {}]
  %s2 = inlined_call_operand.vmem [shape: f32[1,1024], index: 2, kind: input, shape index: {}]
  %s3 = inlined_call_operand.vmem [shape: bf16[1024,512], index: 3, kind: input, shape index: {}]
  %s4 = inlined_call_operand.vmem [shape: f32[1,512], index: 4, kind: input, shape index: {}]
  %s5 = inlined_call_operand.vmem [shape: bf16[512,128], index: 5, kind: input, shape index: {}]
  %s6 = inlined_call_operand.vmem [shape: f32[1,128], index: 6, kind: input, shape index: {}]
  %s7 = inlined_call_operand.vmem [shape: bf16[128,512], index: 7, kind: input, shape index: {}]
  %s8 = inlined_call_operand.vmem [shape: f32[1,512], index: 8, kind: input, shape index: {}]
  %s9 = inlined_call_operand.vmem [shape: bf16[512,1024], index: 9, kind: input, shape index: {}]
  %s10 = inlined_call_operand.vmem [shape: f32[1,1024], index: 10, kind: input, shape index: {}]
  %s11 = inlined_call_operand.vmem [shape: bf16[1024,256], index: 11, kind: input, shape index: {}]
  %s12 = inlined_call_operand.vmem [shape: f32[1,256], index: 12, kind: input, shape index: {}]
  %s13 = inlined_call_operand.hbm [shape: bf16[8,256], index: 13, kind: output, shape index: {0}]
  %s14 = inlined_call_operand.hbm [shape: bf16[8,128], index: 14, kind: output, shape index: {1}]
  %15 = xla_tuple %s13, %s14
  %s16 = sld [smem:[#allocation0]]
  $region70: #{autoencoder_forward.1} parent=0
    _
  %s18 = ssub.s32 1, %s16
  %s19 = scalar_select 0, %s18, %s16
  $region1: #{autoencoder_forward.1} parent=0
    #allocation2 [shape = 'u8[4096]{0}', space=vmem, size = 0x1000, scoped, tag = 'output window, operand 0, single buffered']
    #allocation3 [shape = 's32[1]{0}', space=sflag, size = 0x4, scoped, tag = 'scoped memory for autoencoder_forward.1']
    #allocation4 [shape = 'u8[2048]{0}', space=vmem, size = 0x800, scoped, tag = 'output window, operand 1, single buffered']
    #allocation5 [shape = 's32[1]{0}', space=sflag, size = 0x4, scoped, tag = 'scoped memory for autoencoder_forward.1']
    %20 = vsyncpa [#allocation3], 0
    %21 = vsyncpa [#allocation5], 0
    // Predicated region
    $region2: #{autoencoder_forward.1} parent=1 // pred_check
      _
    $region3: #{autoencoder_forward.1} parent=1 // pred_check_branch
      %23 = sbr.rel (0) target = $region5
    $region4: #{autoencoder_forward.1} parent=1 // pred_region
      _
    $region5: #{autoencoder_forward.1} parent=1 // pred_fallthru
      _
    // Predicated region
    $region6: #{autoencoder_forward.1} parent=1 // pred_check
      _
    $region7: #{autoencoder_forward.1} parent=1 // pred_check_branch
      %25 = sbr.rel (0) target = $region9
    $region8: #{autoencoder_forward.1} parent=1 // pred_region
      _
    $region9: #{autoencoder_forward.1} parent=1 // pred_fallthru
      _
    // Predicated region
    $region10: #{autoencoder_forward.1} parent=1 // pred_check
      _
    $region11: #{autoencoder_forward.1} parent=1 // pred_check_branch
      %27 = sbr.rel (0) target = $region13
    $region12: #{autoencoder_forward.1} parent=1 // pred_region
      _
    $region13: #{autoencoder_forward.1} parent=1 // pred_fallthru
      _
    // Predicated region
    $region14: #{autoencoder_forward.1} parent=1 // pred_check
      _
    $region15: #{autoencoder_forward.1} parent=1 // pred_check_branch
      %29 = sbr.rel (0) target = $region17
    $region16: #{autoencoder_forward.1} parent=1 // pred_region
      _
    $region17: #{autoencoder_forward.1} parent=1 // pred_fallthru
      _
    // Predicated region
    $region18: #{autoencoder_forward.1} parent=1 // pred_check
      _
    $region19: #{autoencoder_forward.1} parent=1 // pred_check_branch
      %31 = sbr.rel (0) target = $region21
    $region20: #{autoencoder_forward.1} parent=1 // pred_region
      _
    $region21: #{autoencoder_forward.1} parent=1 // pred_fallthru
      _
    // Predicated region
    $region22: #{autoencoder_forward.1} parent=1 // pred_check
      _
    $region23: #{autoencoder_forward.1} parent=1 // pred_check_branch
      %33 = sbr.rel (0) target = $region25
    $region24: #{autoencoder_forward.1} parent=1 // pred_region
      _
    $region25: #{autoencoder_forward.1} parent=1 // pred_fallthru
      _
    // Predicated region
    $region26: #{autoencoder_forward.1} parent=1 // pred_check
      _
    $region27: #{autoencoder_forward.1} parent=1 // pred_check_branch
      %35 = sbr.rel (0) target = $region29
    $region28: #{autoencoder_forward.1} parent=1 // pred_region
      _
    $region29: #{autoencoder_forward.1} parent=1 // pred_fallthru
      _
    // Predicated region
    $region30: #{autoencoder_forward.1} parent=1 // pred_check
      _
    $region31: #{autoencoder_forward.1} parent=1 // pred_check_branch
      %37 = sbr.rel (0) target = $region33
    $region32: #{autoencoder_forward.1} parent=1 // pred_region
      _
    $region33: #{autoencoder_forward.1} parent=1 // pred_fallthru
      _
    // Predicated region
    $region34: #{autoencoder_forward.1} parent=1 // pred_check
      _
    $region35: #{autoencoder_forward.1} parent=1 // pred_check_branch
      %39 = sbr.rel (0) target = $region37
    $region36: #{autoencoder_forward.1} parent=1 // pred_region
      _
    $region37: #{autoencoder_forward.1} parent=1 // pred_fallthru
      _
    // Predicated region
    $region38: #{autoencoder_forward.1} parent=1 // pred_check
      _
    $region39: #{autoencoder_forward.1} parent=1 // pred_check_branch
      %41 = sbr.rel (0) target = $region41
    $region40: #{autoencoder_forward.1} parent=1 // pred_region
      _
    $region41: #{autoencoder_forward.1} parent=1 // pred_fallthru
      _
    // Predicated region
    $region42: #{autoencoder_forward.1} parent=1 // pred_check
      _
    $region43: #{autoencoder_forward.1} parent=1 // pred_check_branch
      %43 = sbr.rel (0) target = $region45
    $region44: #{autoencoder_forward.1} parent=1 // pred_region
      _
    $region45: #{autoencoder_forward.1} parent=1 // pred_fallthru
      _
    // Predicated region
    $region46: #{autoencoder_forward.1} parent=1 // pred_check
      _
    $region47: #{autoencoder_forward.1} parent=1 // pred_check_branch
      %45 = sbr.rel (0) target = $region49
    $region48: #{autoencoder_forward.1} parent=1 // pred_region
      _
    $region49: #{autoencoder_forward.1} parent=1 // pred_fallthru
      _
    // Predicated region
    $region50: #{autoencoder_forward.1} parent=1 // pred_check
      _
    $region51: #{autoencoder_forward.1} parent=1 // pred_check_branch
      %47 = sbr.rel (0) target = $region53
    $region52: #{autoencoder_forward.1} parent=1 // pred_region
      _
    $region53: #{autoencoder_forward.1} parent=1 // pred_fallthru
      _
    %v48 = vld [vmem:[%s0] sm:$0xff]
    %v49 = vld [vmem:[%s0 + $0x8] sm:$0xff]
    %v50 = vpack.c.bf16 %v48, %v48
    %v51 = vpack.c.bf16 %v49, %v49
    %v52 = vld [vmem:[%s1] sm:$0xff]
    %v53 = vld [vmem:[%s1 + $0x8] sm:$0xff]
    %v54 = vld [vmem:[%s1 + $0x10] sm:$0xff]
    %v55 = vld [vmem:[%s1 + $0x18] sm:$0xff]
    %v56 = vld [vmem:[%s1 + $0x20] sm:$0xff]
    %v57 = vld [vmem:[%s1 + $0x28] sm:$0xff]
    %v58 = vld [vmem:[%s1 + $0x30] sm:$0xff]
    %v59 = vld [vmem:[%s1 + $0x38] sm:$0xff]
    %v60 = vld [vmem:[%s1 + $0x40] sm:$0xff]
    %v61 = vld [vmem:[%s1 + $0x48] sm:$0xff]
    %v62 = vld [vmem:[%s1 + $0x50] sm:$0xff]
    %v63 = vld [vmem:[%s1 + $0x58] sm:$0xff]
    %v64 = vld [vmem:[%s1 + $0x60] sm:$0xff]
    %v65 = vld [vmem:[%s1 + $0x68] sm:$0xff]
    %v66 = vld [vmem:[%s1 + $0x70] sm:$0xff]
    %v67 = vld [vmem:[%s1 + $0x78] sm:$0xff]
    %v68 = vld [vmem:[%s1 + $0x80] sm:$0xff]
    %v69 = vld [vmem:[%s1 + $0x88] sm:$0xff]
    %v70 = vld [vmem:[%s1 + $0x90] sm:$0xff]
    %v71 = vld [vmem:[%s1 + $0x98] sm:$0xff]
    %v72 = vld [vmem:[%s1 + $0xa0] sm:$0xff]
    %v73 = vld [vmem:[%s1 + $0xa8] sm:$0xff]
    %v74 = vld [vmem:[%s1 + $0xb0] sm:$0xff]
    %v75 = vld [vmem:[%s1 + $0xb8] sm:$0xff]
    %v76 = vld [vmem:[%s1 + $0xc0] sm:$0xff]
    %v77 = vld [vmem:[%s1 + $0xc8] sm:$0xff]
    %v78 = vld [vmem:[%s1 + $0xd0] sm:$0xff]
    %v79 = vld [vmem:[%s1 + $0xd8] sm:$0xff]
    %v80 = vld [vmem:[%s1 + $0xe0] sm:$0xff]
    %v81 = vld [vmem:[%s1 + $0xe8] sm:$0xff]
    %v82 = vld [vmem:[%s1 + $0xf0] sm:$0xff]
    %v83 = vld [vmem:[%s1 + $0xf8] sm:$0xff]
    %v84 = vld [vmem:[%s1 + $0x100] sm:$0xff]
    %v85 = vld [vmem:[%s1 + $0x108] sm:$0xff]
    %v86 = vld [vmem:[%s1 + $0x110] sm:$0xff]
    %v87 = vld [vmem:[%s1 + $0x118] sm:$0xff]
    %v88 = vld [vmem:[%s1 + $0x120] sm:$0xff]
    %v89 = vld [vmem:[%s1 + $0x128] sm:$0xff]
    %v90 = vld [vmem:[%s1 + $0x130] sm:$0xff]
    %v91 = vld [vmem:[%s1 + $0x138] sm:$0xff]
    %v92 = vld [vmem:[%s1 + $0x140] sm:$0xff]
    %v93 = vld [vmem:[%s1 + $0x148] sm:$0xff]
    %v94 = vld [vmem:[%s1 + $0x150] sm:$0xff]
    %v95 = vld [vmem:[%s1 + $0x158] sm:$0xff]
    %v96 = vld [vmem:[%s1 + $0x160] sm:$0xff]
    %v97 = vld [vmem:[%s1 + $0x168] sm:$0xff]
    %v98 = vld [vmem:[%s1 + $0x170] sm:$0xff]
    %v99 = vld [vmem:[%s1 + $0x178] sm:$0xff]
    %v100 = vld [vmem:[%s1 + $0x180] sm:$0xff]
    %v101 = vld [vmem:[%s1 + $0x188] sm:$0xff]
    %v102 = vld [vmem:[%s1 + $0x190] sm:$0xff]
    %v103 = vld [vmem:[%s1 + $0x198] sm:$0xff]
    %v104 = vld [vmem:[%s1 + $0x1a0] sm:$0xff]
    %v105 = vld [vmem:[%s1 + $0x1a8] sm:$0xff]
    %v106 = vld [vmem:[%s1 + $0x1b0] sm:$0xff]
    %v107 = vld [vmem:[%s1 + $0x1b8] sm:$0xff]
    %v108 = vld [vmem:[%s1 + $0x1c0] sm:$0xff]
    %v109 = vld [vmem:[%s1 + $0x1c8] sm:$0xff]
    %v110 = vld [vmem:[%s1 + $0x1d0] sm:$0xff]
    %v111 = vld [vmem:[%s1 + $0x1d8] sm:$0xff]
    %v112 = vld [vmem:[%s1 + $0x1e0] sm:$0xff]
    %v113 = vld [vmem:[%s1 + $0x1e8] sm:$0xff]
    %v114 = vld [vmem:[%s1 + $0x1f0] sm:$0xff]
    %v115 = vld [vmem:[%s1 + $0x1f8] sm:$0xff]
    %v116 = vld [vmem:[%s1 + $0x200] sm:$0xff]
    %v117 = vld [vmem:[%s1 + $0x208] sm:$0xff]
    %v118 = vld [vmem:[%s1 + $0x210] sm:$0xff]
    %v119 = vld [vmem:[%s1 + $0x218] sm:$0xff]
    %v120 = vld [vmem:[%s1 + $0x220] sm:$0xff]
    %v121 = vld [vmem:[%s1 + $0x228] sm:$0xff]
    %v122 = vld [vmem:[%s1 + $0x230] sm:$0xff]
    %v123 = vld [vmem:[%s1 + $0x238] sm:$0xff]
    %v124 = vld [vmem:[%s1 + $0x240] sm:$0xff]
    %v125 = vld [vmem:[%s1 + $0x248] sm:$0xff]
    %v126 = vld [vmem:[%s1 + $0x250] sm:$0xff]
    %v127 = vld [vmem:[%s1 + $0x258] sm:$0xff]
    %v128 = vld [vmem:[%s1 + $0x260] sm:$0xff]
    %v129 = vld [vmem:[%s1 + $0x268] sm:$0xff]
    %v130 = vld [vmem:[%s1 + $0x270] sm:$0xff]
    %v131 = vld [vmem:[%s1 + $0x278] sm:$0xff]
    %v132 = vld [vmem:[%s1 + $0x280] sm:$0xff]
    %v133 = vld [vmem:[%s1 + $0x288] sm:$0xff]
    %v134 = vld [vmem:[%s1 + $0x290] sm:$0xff]
    %v135 = vld [vmem:[%s1 + $0x298] sm:$0xff]
    %v136 = vld [vmem:[%s1 + $0x2a0] sm:$0xff]
    %v137 = vld [vmem:[%s1 + $0x2a8] sm:$0xff]
    %v138 = vld [vmem:[%s1 + $0x2b0] sm:$0xff]
    %v139 = vld [vmem:[%s1 + $0x2b8] sm:$0xff]
    %v140 = vld [vmem:[%s1 + $0x2c0] sm:$0xff]
    %v141 = vld [vmem:[%s1 + $0x2c8] sm:$0xff]
    %v142 = vld [vmem:[%s1 + $0x2d0] sm:$0xff]
    %v143 = vld [vmem:[%s1 + $0x2d8] sm:$0xff]
    %v144 = vld [vmem:[%s1 + $0x2e0] sm:$0xff]
    %v145 = vld [vmem:[%s1 + $0x2e8] sm:$0xff]
    %v146 = vld [vmem:[%s1 + $0x2f0] sm:$0xff]
    %v147 = vld [vmem:[%s1 + $0x2f8] sm:$0xff]
    %v148 = vld [vmem:[%s1 + $0x300] sm:$0xff]
    %v149 = vld [vmem:[%s1 + $0x308] sm:$0xff]
    %v150 = vld [vmem:[%s1 + $0x310] sm:$0xff]
    %v151 = vld [vmem:[%s1 + $0x318] sm:$0xff]
    %v152 = vld [vmem:[%s1 + $0x320] sm:$0xff]
    %v153 = vld [vmem:[%s1 + $0x328] sm:$0xff]
    %v154 = vld [vmem:[%s1 + $0x330] sm:$0xff]
    %v155 = vld [vmem:[%s1 + $0x338] sm:$0xff]
    %v156 = vld [vmem:[%s1 + $0x340] sm:$0xff]
    %v157 = vld [vmem:[%s1 + $0x348] sm:$0xff]
    %v158 = vld [vmem:[%s1 + $0x350] sm:$0xff]
    %v159 = vld [vmem:[%s1 + $0x358] sm:$0xff]
    %v160 = vld [vmem:[%s1 + $0x360] sm:$0xff]
    %v161 = vld [vmem:[%s1 + $0x368] sm:$0xff]
    %v162 = vld [vmem:[%s1 + $0x370] sm:$0xff]
    %v163 = vld [vmem:[%s1 + $0x378] sm:$0xff]
    %v164 = vld [vmem:[%s1 + $0x380] sm:$0xff]
    %v165 = vld [vmem:[%s1 + $0x388] sm:$0xff]
    %v166 = vld [vmem:[%s1 + $0x390] sm:$0xff]
    %v167 = vld [vmem:[%s1 + $0x398] sm:$0xff]
    %v168 = vld [vmem:[%s1 + $0x3a0] sm:$0xff]
    %v169 = vld [vmem:[%s1 + $0x3a8] sm:$0xff]
    %v170 = vld [vmem:[%s1 + $0x3b0] sm:$0xff]
    %v171 = vld [vmem:[%s1 + $0x3b8] sm:$0xff]
    %v172 = vld [vmem:[%s1 + $0x3c0] sm:$0xff]
    %v173 = vld [vmem:[%s1 + $0x3c8] sm:$0xff]
    %v174 = vld [vmem:[%s1 + $0x3d0] sm:$0xff]
    %v175 = vld [vmem:[%s1 + $0x3d8] sm:$0xff]
    %v176 = vld [vmem:[%s1 + $0x3e0] sm:$0xff]
    %v177 = vld [vmem:[%s1 + $0x3e8] sm:$0xff]
    %v178 = vld [vmem:[%s1 + $0x3f0] sm:$0xff]
    %v179 = vld [vmem:[%s1 + $0x3f8] sm:$0xff]
    %v180 = vld [vmem:[%s2] sm:$0xff]
    %v182 = vperm.slane %v180, 0
    %v183 = vperm.slane %v180, 1
    %v184 = vperm.slane %v180, 2
    %v185 = vperm.slane %v180, 3
    %v186 = vperm.slane %v180, 4
    %v187 = vperm.slane %v180, 5
    %v188 = vperm.slane %v180, 6
    %v189 = vperm.slane %v180, 7
    %v326 = vunpack.c.l.b16 %v52
    %v327 = vunpack.c.h.b16 %v52
    %v328 = vunpack.c.l.b16 %v53
    %v329 = vunpack.c.h.b16 %v53
    %v330 = vunpack.c.l.b16 %v54
    %v331 = vunpack.c.h.b16 %v54
    %v332 = vunpack.c.l.b16 %v55
    %v333 = vunpack.c.h.b16 %v55
    %v334 = vunpack.c.l.b16 %v56
    %v335 = vunpack.c.h.b16 %v56
    %v336 = vunpack.c.l.b16 %v57
    %v337 = vunpack.c.h.b16 %v57
    %v338 = vunpack.c.l.b16 %v58
    %v339 = vunpack.c.h.b16 %v58
    %v340 = vunpack.c.l.b16 %v59
    %v341 = vunpack.c.h.b16 %v59
    %v342 = vunpack.c.l.b16 %v60
    %v343 = vunpack.c.h.b16 %v60
    %v344 = vunpack.c.l.b16 %v61
    %v345 = vunpack.c.h.b16 %v61
    %v346 = vunpack.c.l.b16 %v62
    %v347 = vunpack.c.h.b16 %v62
    %v348 = vunpack.c.l.b16 %v63
    %v349 = vunpack.c.h.b16 %v63
    %v350 = vunpack.c.l.b16 %v64
    %v351 = vunpack.c.h.b16 %v64
    %v352 = vunpack.c.l.b16 %v65
    %v353 = vunpack.c.h.b16 %v65
    %v354 = vunpack.c.l.b16 %v66
    %v355 = vunpack.c.h.b16 %v66
    %v356 = vunpack.c.l.b16 %v67
    %v357 = vunpack.c.h.b16 %v67
    %v358 = vunpack.c.l.b16 %v68
    %v359 = vunpack.c.h.b16 %v68
    %v360 = vunpack.c.l.b16 %v69
    %v361 = vunpack.c.h.b16 %v69
    %v362 = vunpack.c.l.b16 %v70
    %v363 = vunpack.c.h.b16 %v70
    %v364 = vunpack.c.l.b16 %v71
    %v365 = vunpack.c.h.b16 %v71
    %v366 = vunpack.c.l.b16 %v72
    %v367 = vunpack.c.h.b16 %v72
    %v368 = vunpack.c.l.b16 %v73
    %v369 = vunpack.c.h.b16 %v73
    %v370 = vunpack.c.l.b16 %v74
    %v371 = vunpack.c.h.b16 %v74
    %v372 = vunpack.c.l.b16 %v75
    %v373 = vunpack.c.h.b16 %v75
    %v374 = vunpack.c.l.b16 %v76
    %v375 = vunpack.c.h.b16 %v76
    %v376 = vunpack.c.l.b16 %v77
    %v377 = vunpack.c.h.b16 %v77
    %v378 = vunpack.c.l.b16 %v78
    %v379 = vunpack.c.h.b16 %v78
    %v380 = vunpack.c.l.b16 %v79
    %v381 = vunpack.c.h.b16 %v79
    %v382 = vunpack.c.l.b16 %v80
    %v383 = vunpack.c.h.b16 %v80
    %v384 = vunpack.c.l.b16 %v81
    %v385 = vunpack.c.h.b16 %v81
    %v386 = vunpack.c.l.b16 %v82
    %v387 = vunpack.c.h.b16 %v82
    %v388 = vunpack.c.l.b16 %v83
    %v389 = vunpack.c.h.b16 %v83
    %v390 = vunpack.c.l.b16 %v84
    %v391 = vunpack.c.h.b16 %v84
    %v392 = vunpack.c.l.b16 %v85
    %v393 = vunpack.c.h.b16 %v85
    %v394 = vunpack.c.l.b16 %v86
    %v395 = vunpack.c.h.b16 %v86
    %v396 = vunpack.c.l.b16 %v87
    %v397 = vunpack.c.h.b16 %v87
    %v398 = vunpack.c.l.b16 %v88
    %v399 = vunpack.c.h.b16 %v88
    %v400 = vunpack.c.l.b16 %v89
    %v401 = vunpack.c.h.b16 %v89
    %v402 = vunpack.c.l.b16 %v90
    %v403 = vunpack.c.h.b16 %v90
    %v404 = vunpack.c.l.b16 %v91
    %v405 = vunpack.c.h.b16 %v91
    %v406 = vunpack.c.l.b16 %v92
    %v407 = vunpack.c.h.b16 %v92
    %v408 = vunpack.c.l.b16 %v93
    %v409 = vunpack.c.h.b16 %v93
    %v410 = vunpack.c.l.b16 %v94
    %v411 = vunpack.c.h.b16 %v94
    %v412 = vunpack.c.l.b16 %v95
    %v413 = vunpack.c.h.b16 %v95
    %v414 = vunpack.c.l.b16 %v96
    %v415 = vunpack.c.h.b16 %v96
    %v416 = vunpack.c.l.b16 %v97
    %v417 = vunpack.c.h.b16 %v97
    %v418 = vunpack.c.l.b16 %v98
    %v419 = vunpack.c.h.b16 %v98
    %v420 = vunpack.c.l.b16 %v99
    %v421 = vunpack.c.h.b16 %v99
    %v422 = vunpack.c.l.b16 %v100
    %v423 = vunpack.c.h.b16 %v100
    %v424 = vunpack.c.l.b16 %v101
    %v425 = vunpack.c.h.b16 %v101
    %v426 = vunpack.c.l.b16 %v102
    %v427 = vunpack.c.h.b16 %v102
    %v428 = vunpack.c.l.b16 %v103
    %v429 = vunpack.c.h.b16 %v103
    %v430 = vunpack.c.l.b16 %v104
    %v431 = vunpack.c.h.b16 %v104
    %v432 = vunpack.c.l.b16 %v105
    %v433 = vunpack.c.h.b16 %v105
    %v434 = vunpack.c.l.b16 %v106
    %v435 = vunpack.c.h.b16 %v106
    %v436 = vunpack.c.l.b16 %v107
    %v437 = vunpack.c.h.b16 %v107
    %v438 = vunpack.c.l.b16 %v108
    %v439 = vunpack.c.h.b16 %v108
    %v440 = vunpack.c.l.b16 %v109
    %v441 = vunpack.c.h.b16 %v109
    %v442 = vunpack.c.l.b16 %v110
    %v443 = vunpack.c.h.b16 %v110
    %v444 = vunpack.c.l.b16 %v111
    %v445 = vunpack.c.h.b16 %v111
    %v446 = vunpack.c.l.b16 %v112
    %v447 = vunpack.c.h.b16 %v112
    %v448 = vunpack.c.l.b16 %v113
    %v449 = vunpack.c.h.b16 %v113
    %v450 = vunpack.c.l.b16 %v114
    %v451 = vunpack.c.h.b16 %v114
    %v452 = vunpack.c.l.b16 %v115
    %v453 = vunpack.c.h.b16 %v115
    %v454 = vunpack.c.l.b16 %v116
    %v455 = vunpack.c.h.b16 %v116
    %v456 = vunpack.c.l.b16 %v117
    %v457 = vunpack.c.h.b16 %v117
    %v458 = vunpack.c.l.b16 %v118
    %v459 = vunpack.c.h.b16 %v118
    %v460 = vunpack.c.l.b16 %v119
    %v461 = vunpack.c.h.b16 %v119
    %v462 = vunpack.c.l.b16 %v120
    %v463 = vunpack.c.h.b16 %v120
    %v464 = vunpack.c.l.b16 %v121
    %v465 = vunpack.c.h.b16 %v121
    %v466 = vunpack.c.l.b16 %v122
    %v467 = vunpack.c.h.b16 %v122
    %v468 = vunpack.c.l.b16 %v123
    %v469 = vunpack.c.h.b16 %v123
    %v470 = vunpack.c.l.b16 %v124
    %v471 = vunpack.c.h.b16 %v124
    %v472 = vunpack.c.l.b16 %v125
    %v473 = vunpack.c.h.b16 %v125
    %v474 = vunpack.c.l.b16 %v126
    %v475 = vunpack.c.h.b16 %v126
    %v476 = vunpack.c.l.b16 %v127
    %v477 = vunpack.c.h.b16 %v127
    %v478 = vunpack.c.l.b16 %v128
    %v479 = vunpack.c.h.b16 %v128
    %v480 = vunpack.c.l.b16 %v129
    %v481 = vunpack.c.h.b16 %v129
    %v482 = vunpack.c.l.b16 %v130
    %v483 = vunpack.c.h.b16 %v130
    %v484 = vunpack.c.l.b16 %v131
    %v485 = vunpack.c.h.b16 %v131
    %v486 = vunpack.c.l.b16 %v132
    %v487 = vunpack.c.h.b16 %v132
    %v488 = vunpack.c.l.b16 %v133
    %v489 = vunpack.c.h.b16 %v133
    %v490 = vunpack.c.l.b16 %v134
    %v491 = vunpack.c.h.b16 %v134
    %v492 = vunpack.c.l.b16 %v135
    %v493 = vunpack.c.h.b16 %v135
    %v494 = vunpack.c.l.b16 %v136
    %v495 = vunpack.c.h.b16 %v136
    %v496 = vunpack.c.l.b16 %v137
    %v497 = vunpack.c.h.b16 %v137
    %v498 = vunpack.c.l.b16 %v138
    %v499 = vunpack.c.h.b16 %v138
    %v500 = vunpack.c.l.b16 %v139
    %v501 = vunpack.c.h.b16 %v139
    %v502 = vunpack.c.l.b16 %v140
    %v503 = vunpack.c.h.b16 %v140
    %v504 = vunpack.c.l.b16 %v141
    %v505 = vunpack.c.h.b16 %v141
    %v506 = vunpack.c.l.b16 %v142
    %v507 = vunpack.c.h.b16 %v142
    %v508 = vunpack.c.l.b16 %v143
    %v509 = vunpack.c.h.b16 %v143
    %v510 = vunpack.c.l.b16 %v144
    %v511 = vunpack.c.h.b16 %v144
    %v512 = vunpack.c.l.b16 %v145
    %v513 = vunpack.c.h.b16 %v145
    %v514 = vunpack.c.l.b16 %v146
    %v515 = vunpack.c.h.b16 %v146
    %v516 = vunpack.c.l.b16 %v147
    %v517 = vunpack.c.h.b16 %v147
    %v518 = vunpack.c.l.b16 %v148
    %v519 = vunpack.c.h.b16 %v148
    %v520 = vunpack.c.l.b16 %v149
    %v521 = vunpack.c.h.b16 %v149
    %v522 = vunpack.c.l.b16 %v150
    %v523 = vunpack.c.h.b16 %v150
    %v524 = vunpack.c.l.b16 %v151
    %v525 = vunpack.c.h.b16 %v151
    %v526 = vunpack.c.l.b16 %v152
    %v527 = vunpack.c.h.b16 %v152
    %v528 = vunpack.c.l.b16 %v153
    %v529 = vunpack.c.h.b16 %v153
    %v530 = vunpack.c.l.b16 %v154
    %v531 = vunpack.c.h.b16 %v154
    %v532 = vunpack.c.l.b16 %v155
    %v533 = vunpack.c.h.b16 %v155
    %v534 = vunpack.c.l.b16 %v156
    %v535 = vunpack.c.h.b16 %v156
    %v536 = vunpack.c.l.b16 %v157
    %v537 = vunpack.c.h.b16 %v157
    %v538 = vunpack.c.l.b16 %v158
    %v539 = vunpack.c.h.b16 %v158
    %v540 = vunpack.c.l.b16 %v159
    %v541 = vunpack.c.h.b16 %v159
    %v542 = vunpack.c.l.b16 %v160
    %v543 = vunpack.c.h.b16 %v160
    %v544 = vunpack.c.l.b16 %v161
    %v545 = vunpack.c.h.b16 %v161
    %v546 = vunpack.c.l.b16 %v162
    %v547 = vunpack.c.h.b16 %v162
    %v548 = vunpack.c.l.b16 %v163
    %v549 = vunpack.c.h.b16 %v163
    %v550 = vunpack.c.l.b16 %v164
    %v551 = vunpack.c.h.b16 %v164
    %v552 = vunpack.c.l.b16 %v165
    %v553 = vunpack.c.h.b16 %v165
    %v554 = vunpack.c.l.b16 %v166
    %v555 = vunpack.c.h.b16 %v166
    %v556 = vunpack.c.l.b16 %v167
    %v557 = vunpack.c.h.b16 %v167
    %v558 = vunpack.c.l.b16 %v168
    %v559 = vunpack.c.h.b16 %v168
    %v560 = vunpack.c.l.b16 %v169
    %v561 = vunpack.c.h.b16 %v169
    %v562 = vunpack.c.l.b16 %v170
    %v563 = vunpack.c.h.b16 %v170
    %v564 = vunpack.c.l.b16 %v171
    %v565 = vunpack.c.h.b16 %v171
    %v566 = vunpack.c.l.b16 %v172
    %v567 = vunpack.c.h.b16 %v172
    %v568 = vunpack.c.l.b16 %v173
    %v569 = vunpack.c.h.b16 %v173
    %v570 = vunpack.c.l.b16 %v174
    %v571 = vunpack.c.h.b16 %v174
    %v572 = vunpack.c.l.b16 %v175
    %v573 = vunpack.c.h.b16 %v175
    %v574 = vunpack.c.l.b16 %v176
    %v575 = vunpack.c.h.b16 %v176
    %v576 = vunpack.c.l.b16 %v177
    %v577 = vunpack.c.h.b16 %v177
    %v578 = vunpack.c.l.b16 %v178
    %v579 = vunpack.c.h.b16 %v178
    %v580 = vunpack.c.l.b16 %v179
    %v581 = vunpack.c.h.b16 %v179
    %v582 = vpack.c.b16 %v334, %v326
    %v583 = vpack.c.b16 %v335, %v327
    %v584 = vpack.c.b16 %v336, %v328
    %v585 = vpack.c.b16 %v337, %v329
    %v586 = vpack.c.b16 %v338, %v330
    %v587 = vpack.c.b16 %v339, %v331
    %v588 = vpack.c.b16 %v340, %v332
    %v589 = vpack.c.b16 %v341, %v333
    %v590 = vpack.c.b16 %v350, %v342
    %v591 = vpack.c.b16 %v351, %v343
    %v592 = vpack.c.b16 %v352, %v344
    %v593 = vpack.c.b16 %v353, %v345
    %v594 = vpack.c.b16 %v354, %v346
    %v595 = vpack.c.b16 %v355, %v347
    %v596 = vpack.c.b16 %v356, %v348
    %v597 = vpack.c.b16 %v357, %v349
    %v598 = vpack.c.b16 %v366, %v358
    %v599 = vpack.c.b16 %v367, %v359
    %v600 = vpack.c.b16 %v368, %v360
    %v601 = vpack.c.b16 %v369, %v361
    %v602 = vpack.c.b16 %v370, %v362
    %v603 = vpack.c.b16 %v371, %v363
    %v604 = vpack.c.b16 %v372, %v364
    %v605 = vpack.c.b16 %v373, %v365
    %v606 = vpack.c.b16 %v382, %v374
    %v607 = vpack.c.b16 %v383, %v375
    %v608 = vpack.c.b16 %v384, %v376
    %v609 = vpack.c.b16 %v385, %v377
    %v610 = vpack.c.b16 %v386, %v378
    %v611 = vpack.c.b16 %v387, %v379
    %v612 = vpack.c.b16 %v388, %v380
    %v613 = vpack.c.b16 %v389, %v381
    %v614 = vpack.c.b16 %v398, %v390
    %v615 = vpack.c.b16 %v399, %v391
    %v616 = vpack.c.b16 %v400, %v392
    %v617 = vpack.c.b16 %v401, %v393
    %v618 = vpack.c.b16 %v402, %v394
    %v619 = vpack.c.b16 %v403, %v395
    %v620 = vpack.c.b16 %v404, %v396
    %v621 = vpack.c.b16 %v405, %v397
    %v622 = vpack.c.b16 %v414, %v406
    %v623 = vpack.c.b16 %v415, %v407
    %v624 = vpack.c.b16 %v416, %v408
    %v625 = vpack.c.b16 %v417, %v409
    %v626 = vpack.c.b16 %v418, %v410
    %v627 = vpack.c.b16 %v419, %v411
    %v628 = vpack.c.b16 %v420, %v412
    %v629 = vpack.c.b16 %v421, %v413
    %v630 = vpack.c.b16 %v430, %v422
    %v631 = vpack.c.b16 %v431, %v423
    %v632 = vpack.c.b16 %v432, %v424
    %v633 = vpack.c.b16 %v433, %v425
    %v634 = vpack.c.b16 %v434, %v426
    %v635 = vpack.c.b16 %v435, %v427
    %v636 = vpack.c.b16 %v436, %v428
    %v637 = vpack.c.b16 %v437, %v429
    %v638 = vpack.c.b16 %v446, %v438
    %v639 = vpack.c.b16 %v447, %v439
    %v640 = vpack.c.b16 %v448, %v440
    %v641 = vpack.c.b16 %v449, %v441
    %v642 = vpack.c.b16 %v450, %v442
    %v643 = vpack.c.b16 %v451, %v443
    %v644 = vpack.c.b16 %v452, %v444
    %v645 = vpack.c.b16 %v453, %v445
    %v646 = vpack.c.b16 %v462, %v454
    %v647 = vpack.c.b16 %v463, %v455
    %v648 = vpack.c.b16 %v464, %v456
    %v649 = vpack.c.b16 %v465, %v457
    %v650 = vpack.c.b16 %v466, %v458
    %v651 = vpack.c.b16 %v467, %v459
    %v652 = vpack.c.b16 %v468, %v460
    %v653 = vpack.c.b16 %v469, %v461
    %v654 = vpack.c.b16 %v478, %v470
    %v655 = vpack.c.b16 %v479, %v471
    %v656 = vpack.c.b16 %v480, %v472
    %v657 = vpack.c.b16 %v481, %v473
    %v658 = vpack.c.b16 %v482, %v474
    %v659 = vpack.c.b16 %v483, %v475
    %v660 = vpack.c.b16 %v484, %v476
    %v661 = vpack.c.b16 %v485, %v477
    %v662 = vpack.c.b16 %v494, %v486
    %v663 = vpack.c.b16 %v495, %v487
    %v664 = vpack.c.b16 %v496, %v488
    %v665 = vpack.c.b16 %v497, %v489
    %v666 = vpack.c.b16 %v498, %v490
    %v667 = vpack.c.b16 %v499, %v491
    %v668 = vpack.c.b16 %v500, %v492
    %v669 = vpack.c.b16 %v501, %v493
    %v670 = vpack.c.b16 %v510, %v502
    %v671 = vpack.c.b16 %v511, %v503
    %v672 = vpack.c.b16 %v512, %v504
    %v673 = vpack.c.b16 %v513, %v505
    %v674 = vpack.c.b16 %v514, %v506
    %v675 = vpack.c.b16 %v515, %v507
    %v676 = vpack.c.b16 %v516, %v508
    %v677 = vpack.c.b16 %v517, %v509
    %v678 = vpack.c.b16 %v526, %v518
    %v679 = vpack.c.b16 %v527, %v519
    %v680 = vpack.c.b16 %v528, %v520
    %v681 = vpack.c.b16 %v529, %v521
    %v682 = vpack.c.b16 %v530, %v522
    %v683 = vpack.c.b16 %v531, %v523
    %v684 = vpack.c.b16 %v532, %v524
    %v685 = vpack.c.b16 %v533, %v525
    %v686 = vpack.c.b16 %v542, %v534
    %v687 = vpack.c.b16 %v543, %v535
    %v688 = vpack.c.b16 %v544, %v536
    %v689 = vpack.c.b16 %v545, %v537
    %v690 = vpack.c.b16 %v546, %v538
    %v691 = vpack.c.b16 %v547, %v539
    %v692 = vpack.c.b16 %v548, %v540
    %v693 = vpack.c.b16 %v549, %v541
    %v694 = vpack.c.b16 %v558, %v550
    %v695 = vpack.c.b16 %v559, %v551
    %v696 = vpack.c.b16 %v560, %v552
    %v697 = vpack.c.b16 %v561, %v553
    %v698 = vpack.c.b16 %v562, %v554
    %v699 = vpack.c.b16 %v563, %v555
    %v700 = vpack.c.b16 %v564, %v556
    %v701 = vpack.c.b16 %v565, %v557
    %v702 = vpack.c.b16 %v574, %v566
    %v703 = vpack.c.b16 %v575, %v567
    %v704 = vpack.c.b16 %v576, %v568
    %v705 = vpack.c.b16 %v577, %v569
    %v706 = vpack.c.b16 %v578, %v570
    %v707 = vpack.c.b16 %v579, %v571
    %v708 = vpack.c.b16 %v580, %v572
    %v709 = vpack.c.b16 %v581, %v573
    %838 = vmatpush.bf16.msra.mxu0 %v638
    %839 = vmatpush.bf16.msra.mxu0 %v630
    %840 = vmatpush.bf16.msra.mxu0 %v622
    %841 = vmatpush.bf16.msra.mxu0 %v614
    %842 = vmatpush.bf16.msra.mxu0 %v606
    %843 = vmatpush.bf16.msra.mxu0 %v598
    %844 = vmatpush.bf16.msra.mxu0 %v590
    %845 = vmatpush.bf16.msra.mxu0 %v582
    %846 = vmatmul.bf16.gmra.mxu0 %v50
    %v847 = vpop.f32.mrf.mxu0
    %v848 = vadd.f32 %v182, %v847
    %v849 = vpop.f32.mrf.mxu0
    %850 = vdwg.mxu0
    %851 = vmatpush.bf16.msra.mxu0 %v702
    %852 = vmatpush.bf16.msra.mxu0 %v694
    %853 = vmatpush.bf16.msra.mxu0 %v686
    %854 = vmatpush.bf16.msra.mxu0 %v678
    %855 = vmatpush.bf16.msra.mxu0 %v670
    %856 = vmatpush.bf16.msra.mxu0 %v662
    %857 = vmatpush.bf16.msra.mxu0 %v654
    %858 = vmatpush.bf16.msra.mxu0 %v646
    %859 = vmatmul.bf16.gmra.mxu0 %v51
    %v860 = vpop.f32.mrf.mxu0
    %v861 = vadd.f32 %v848, %v860
    %v862 = vpop.f32.mrf.mxu0
    %863 = vdwg.mxu0
    %864 = vmatpush.bf16.msra.mxu0 %v639
    %865 = vmatpush.bf16.msra.mxu0 %v631
    %866 = vmatpush.bf16.msra.mxu0 %v623
    %867 = vmatpush.bf16.msra.mxu0 %v615
    %868 = vmatpush.bf16.msra.mxu0 %v607
    %869 = vmatpush.bf16.msra.mxu0 %v599
    %870 = vmatpush.bf16.msra.mxu0 %v591
    %871 = vmatpush.bf16.msra.mxu0 %v583
    %872 = vmatmul.bf16.gmra.mxu0 %v50
    %v873 = vpop.f32.mrf.mxu0
    %v874 = vadd.f32 %v183, %v873
    %v875 = vpop.f32.mrf.mxu0
    %876 = vdwg.mxu0
    %877 = vmatpush.bf16.msra.mxu0 %v703
    %878 = vmatpush.bf16.msra.mxu0 %v695
    %879 = vmatpush.bf16.msra.mxu0 %v687
    %880 = vmatpush.bf16.msra.mxu0 %v679
    %881 = vmatpush.bf16.msra.mxu0 %v671
    %882 = vmatpush.bf16.msra.mxu0 %v663
    %883 = vmatpush.bf16.msra.mxu0 %v655
    %884 = vmatpush.bf16.msra.mxu0 %v647
    %885 = vmatmul.bf16.gmra.mxu0 %v51
    %v886 = vpop.f32.mrf.mxu0
    %v887 = vadd.f32 %v874, %v886
    %v888 = vpop.f32.mrf.mxu0
    %889 = vdwg.mxu0
    %890 = vmatpush.bf16.msra.mxu0 %v640
    %891 = vmatpush.bf16.msra.mxu0 %v632
    %892 = vmatpush.bf16.msra.mxu0 %v624
    %893 = vmatpush.bf16.msra.mxu0 %v616
    %894 = vmatpush.bf16.msra.mxu0 %v608
    %895 = vmatpush.bf16.msra.mxu0 %v600
    %896 = vmatpush.bf16.msra.mxu0 %v592
    %897 = vmatpush.bf16.msra.mxu0 %v584
    %898 = vmatmul.bf16.gmra.mxu0 %v50
    %v899 = vpop.f32.mrf.mxu0
    %v900 = vadd.f32 %v184, %v899
    %v901 = vpop.f32.mrf.mxu0
    %902 = vdwg.mxu0
    %903 = vmatpush.bf16.msra.mxu0 %v704
    %904 = vmatpush.bf16.msra.mxu0 %v696
    %905 = vmatpush.bf16.msra.mxu0 %v688
    %906 = vmatpush.bf16.msra.mxu0 %v680
    %907 = vmatpush.bf16.msra.mxu0 %v672
    %908 = vmatpush.bf16.msra.mxu0 %v664
    %909 = vmatpush.bf16.msra.mxu0 %v656
    %910 = vmatpush.bf16.msra.mxu0 %v648
    %911 = vmatmul.bf16.gmra.mxu0 %v51
    %v912 = vpop.f32.mrf.mxu0
    %v913 = vadd.f32 %v900, %v912
    %v914 = vpop.f32.mrf.mxu0
    %915 = vdwg.mxu0
    %916 = vmatpush.bf16.msra.mxu0 %v641
    %917 = vmatpush.bf16.msra.mxu0 %v633
    %918 = vmatpush.bf16.msra.mxu0 %v625
    %919 = vmatpush.bf16.msra.mxu0 %v617
    %920 = vmatpush.bf16.msra.mxu0 %v609
    %921 = vmatpush.bf16.msra.mxu0 %v601
    %922 = vmatpush.bf16.msra.mxu0 %v593
    %923 = vmatpush.bf16.msra.mxu0 %v585
    %924 = vmatmul.bf16.gmra.mxu0 %v50
    %v925 = vpop.f32.mrf.mxu0
    %v926 = vadd.f32 %v185, %v925
    %v927 = vpop.f32.mrf.mxu0
    %928 = vdwg.mxu0
    %929 = vmatpush.bf16.msra.mxu0 %v705
    %930 = vmatpush.bf16.msra.mxu0 %v697
    %931 = vmatpush.bf16.msra.mxu0 %v689
    %932 = vmatpush.bf16.msra.mxu0 %v681
    %933 = vmatpush.bf16.msra.mxu0 %v673
    %934 = vmatpush.bf16.msra.mxu0 %v665
    %935 = vmatpush.bf16.msra.mxu0 %v657
    %936 = vmatpush.bf16.msra.mxu0 %v649
    %937 = vmatmul.bf16.gmra.mxu0 %v51
    %v938 = vpop.f32.mrf.mxu0
    %v939 = vadd.f32 %v926, %v938
    %v940 = vpop.f32.mrf.mxu0
    %941 = vdwg.mxu0
    %942 = vmatpush.bf16.msra.mxu0 %v642
    %943 = vmatpush.bf16.msra.mxu0 %v634
    %944 = vmatpush.bf16.msra.mxu0 %v626
    %945 = vmatpush.bf16.msra.mxu0 %v618
    %946 = vmatpush.bf16.msra.mxu0 %v610
    %947 = vmatpush.bf16.msra.mxu0 %v602
    %948 = vmatpush.bf16.msra.mxu0 %v594
    %949 = vmatpush.bf16.msra.mxu0 %v586
    %950 = vmatmul.bf16.gmra.mxu0 %v50
    %v951 = vpop.f32.mrf.mxu0
    %v952 = vadd.f32 %v186, %v951
    %v953 = vpop.f32.mrf.mxu0
    %954 = vdwg.mxu0
    %955 = vmatpush.bf16.msra.mxu0 %v706
    %956 = vmatpush.bf16.msra.mxu0 %v698
    %957 = vmatpush.bf16.msra.mxu0 %v690
    %958 = vmatpush.bf16.msra.mxu0 %v682
    %959 = vmatpush.bf16.msra.mxu0 %v674
    %960 = vmatpush.bf16.msra.mxu0 %v666
    %961 = vmatpush.bf16.msra.mxu0 %v658
    %962 = vmatpush.bf16.msra.mxu0 %v650
    %963 = vmatmul.bf16.gmra.mxu0 %v51
    %v964 = vpop.f32.mrf.mxu0
    %v965 = vadd.f32 %v952, %v964
    %v966 = vpop.f32.mrf.mxu0
    %967 = vdwg.mxu0
    %968 = vmatpush.bf16.msra.mxu0 %v643
    %969 = vmatpush.bf16.msra.mxu0 %v635
    %970 = vmatpush.bf16.msra.mxu0 %v627
    %971 = vmatpush.bf16.msra.mxu0 %v619
    %972 = vmatpush.bf16.msra.mxu0 %v611
    %973 = vmatpush.bf16.msra.mxu0 %v603
    %974 = vmatpush.bf16.msra.mxu0 %v595
    %975 = vmatpush.bf16.msra.mxu0 %v587
    %976 = vmatmul.bf16.gmra.mxu0 %v50
    %v977 = vpop.f32.mrf.mxu0
    %v978 = vadd.f32 %v187, %v977
    %v979 = vpop.f32.mrf.mxu0
    %980 = vdwg.mxu0
    %981 = vmatpush.bf16.msra.mxu0 %v707
    %982 = vmatpush.bf16.msra.mxu0 %v699
    %983 = vmatpush.bf16.msra.mxu0 %v691
    %984 = vmatpush.bf16.msra.mxu0 %v683
    %985 = vmatpush.bf16.msra.mxu0 %v675
    %986 = vmatpush.bf16.msra.mxu0 %v667
    %987 = vmatpush.bf16.msra.mxu0 %v659
    %988 = vmatpush.bf16.msra.mxu0 %v651
    %989 = vmatmul.bf16.gmra.mxu0 %v51
    %v990 = vpop.f32.mrf.mxu0
    %v991 = vadd.f32 %v978, %v990
    %v992 = vpop.f32.mrf.mxu0
    %993 = vdwg.mxu0
    %994 = vmatpush.bf16.msra.mxu0 %v644
    %995 = vmatpush.bf16.msra.mxu0 %v636
    %996 = vmatpush.bf16.msra.mxu0 %v628
    %997 = vmatpush.bf16.msra.mxu0 %v620
    %998 = vmatpush.bf16.msra.mxu0 %v612
    %999 = vmatpush.bf16.msra.mxu0 %v604
    %1000 = vmatpush.bf16.msra.mxu0 %v596
    %1001 = vmatpush.bf16.msra.mxu0 %v588
    %1002 = vmatmul.bf16.gmra.mxu0 %v50
    %v1003 = vpop.f32.mrf.mxu0
    %v1004 = vadd.f32 %v188, %v1003
    %v1005 = vpop.f32.mrf.mxu0
    %1006 = vdwg.mxu0
    %1007 = vmatpush.bf16.msra.mxu0 %v708
    %1008 = vmatpush.bf16.msra.mxu0 %v700
    %1009 = vmatpush.bf16.msra.mxu0 %v692
    %1010 = vmatpush.bf16.msra.mxu0 %v684
    %1011 = vmatpush.bf16.msra.mxu0 %v676
    %1012 = vmatpush.bf16.msra.mxu0 %v668
    %1013 = vmatpush.bf16.msra.mxu0 %v660
    %1014 = vmatpush.bf16.msra.mxu0 %v652
    %1015 = vmatmul.bf16.gmra.mxu0 %v51
    %v1016 = vpop.f32.mrf.mxu0
    %v1017 = vadd.f32 %v1004, %v1016
    %v1018 = vpop.f32.mrf.mxu0
    %1019 = vdwg.mxu0
    %1020 = vmatpush.bf16.msra.mxu0 %v645
    %1021 = vmatpush.bf16.msra.mxu0 %v637
    %1022 = vmatpush.bf16.msra.mxu0 %v629
    %1023 = vmatpush.bf16.msra.mxu0 %v621
    %1024 = vmatpush.bf16.msra.mxu0 %v613
    %1025 = vmatpush.bf16.msra.mxu0 %v605
    %1026 = vmatpush.bf16.msra.mxu0 %v597
    %1027 = vmatpush.bf16.msra.mxu0 %v589
    %1028 = vmatmul.bf16.gmra.mxu0 %v50
    %v1029 = vpop.f32.mrf.mxu0
    %v1030 = vadd.f32 %v189, %v1029
    %v1031 = vpop.f32.mrf.mxu0
    %1032 = vdwg.mxu0
    %1033 = vmatpush.bf16.msra.mxu0 %v709
    %1034 = vmatpush.bf16.msra.mxu0 %v701
    %1035 = vmatpush.bf16.msra.mxu0 %v693
    %1036 = vmatpush.bf16.msra.mxu0 %v685
    %1037 = vmatpush.bf16.msra.mxu0 %v677
    %1038 = vmatpush.bf16.msra.mxu0 %v669
    %1039 = vmatpush.bf16.msra.mxu0 %v661
    %1040 = vmatpush.bf16.msra.mxu0 %v653
    %1041 = vmatmul.bf16.gmra.mxu0 %v51
    %v1042 = vpop.f32.mrf.mxu0
    %v1043 = vadd.f32 %v1030, %v1042
    %v1044 = vpop.f32.mrf.mxu0
    %1045 = vdwg.mxu0
    %v1046 = vtanh.pop %v861
    %v1047 = vtanh.pop %v887
    %v1048 = vtanh.pop %v913
    %v1049 = vtanh.pop %v939
    %v1050 = vtanh.pop %v965
    %v1051 = vtanh.pop %v991
    %v1052 = vtanh.pop %v1017
    %v1053 = vtanh.pop %v1043
    %v1054 = vpack.c.bf16 %v1046, %v1046
    %v1055 = vpack.c.bf16 %v1047, %v1047
    %v1056 = vpack.c.bf16 %v1048, %v1048
    %v1057 = vpack.c.bf16 %v1049, %v1049
    %v1058 = vpack.c.bf16 %v1050, %v1050
    %v1059 = vpack.c.bf16 %v1051, %v1051
    %v1060 = vpack.c.bf16 %v1052, %v1052
    %v1061 = vpack.c.bf16 %v1053, %v1053
    %v1062 = vld [vmem:[%s3] sm:$0xff]
    %v1063 = vld [vmem:[%s3 + $0x8] sm:$0xff]
    %v1064 = vld [vmem:[%s3 + $0x10] sm:$0xff]
    %v1065 = vld [vmem:[%s3 + $0x18] sm:$0xff]
    %v1066 = vld [vmem:[%s3 + $0x20] sm:$0xff]
    %v1067 = vld [vmem:[%s3 + $0x28] sm:$0xff]
    %v1068 = vld [vmem:[%s3 + $0x30] sm:$0xff]
    %v1069 = vld [vmem:[%s3 + $0x38] sm:$0xff]
    %v1070 = vld [vmem:[%s3 + $0x40] sm:$0xff]
    %v1071 = vld [vmem:[%s3 + $0x48] sm:$0xff]
    %v1072 = vld [vmem:[%s3 + $0x50] sm:$0xff]
    %v1073 = vld [vmem:[%s3 + $0x58] sm:$0xff]
    %v1074 = vld [vmem:[%s3 + $0x60] sm:$0xff]
    %v1075 = vld [vmem:[%s3 + $0x68] sm:$0xff]
    %v1076 = vld [vmem:[%s3 + $0x70] sm:$0xff]
    %v1077 = vld [vmem:[%s3 + $0x78] sm:$0xff]
    %v1078 = vld [vmem:[%s3 + $0x80] sm:$0xff]
    %v1079 = vld [vmem:[%s3 + $0x88] sm:$0xff]
    %v1080 = vld [vmem:[%s3 + $0x90] sm:$0xff]
    %v1081 = vld [vmem:[%s3 + $0x98] sm:$0xff]
    %v1082 = vld [vmem:[%s3 + $0xa0] sm:$0xff]
    %v1083 = vld [vmem:[%s3 + $0xa8] sm:$0xff]
    %v1084 = vld [vmem:[%s3 + $0xb0] sm:$0xff]
    %v1085 = vld [vmem:[%s3 + $0xb8] sm:$0xff]
    %v1086 = vld [vmem:[%s3 + $0xc0] sm:$0xff]
    %v1087 = vld [vmem:[%s3 + $0xc8] sm:$0xff]
    %v1088 = vld [vmem:[%s3 + $0xd0] sm:$0xff]
    %v1089 = vld [vmem:[%s3 + $0xd8] sm:$0xff]
    %v1090 = vld [vmem:[%s3 + $0xe0] sm:$0xff]
    %v1091 = vld [vmem:[%s3 + $0xe8] sm:$0xff]
    %v1092 = vld [vmem:[%s3 + $0xf0] sm:$0xff]
    %v1093 = vld [vmem:[%s3 + $0xf8] sm:$0xff]
    %v1094 = vld [vmem:[%s3 + $0x100] sm:$0xff]
    %v1095 = vld [vmem:[%s3 + $0x108] sm:$0xff]
    %v1096 = vld [vmem:[%s3 + $0x110] sm:$0xff]
    %v1097 = vld [vmem:[%s3 + $0x118] sm:$0xff]
    %v1098 = vld [vmem:[%s3 + $0x120] sm:$0xff]
    %v1099 = vld [vmem:[%s3 + $0x128] sm:$0xff]
    %v1100 = vld [vmem:[%s3 + $0x130] sm:$0xff]
    %v1101 = vld [vmem:[%s3 + $0x138] sm:$0xff]
    %v1102 = vld [vmem:[%s3 + $0x140] sm:$0xff]
    %v1103 = vld [vmem:[%s3 + $0x148] sm:$0xff]
    %v1104 = vld [vmem:[%s3 + $0x150] sm:$0xff]
    %v1105 = vld [vmem:[%s3 + $0x158] sm:$0xff]
    %v1106 = vld [vmem:[%s3 + $0x160] sm:$0xff]
    %v1107 = vld [vmem:[%s3 + $0x168] sm:$0xff]
    %v1108 = vld [vmem:[%s3 + $0x170] sm:$0xff]
    %v1109 = vld [vmem:[%s3 + $0x178] sm:$0xff]
    %v1110 = vld [vmem:[%s3 + $0x180] sm:$0xff]
    %v1111 = vld [vmem:[%s3 + $0x188] sm:$0xff]
    %v1112 = vld [vmem:[%s3 + $0x190] sm:$0xff]
    %v1113 = vld [vmem:[%s3 + $0x198] sm:$0xff]
    %v1114 = vld [vmem:[%s3 + $0x1a0] sm:$0xff]
    %v1115 = vld [vmem:[%s3 + $0x1a8] sm:$0xff]
    %v1116 = vld [vmem:[%s3 + $0x1b0] sm:$0xff]
    %v1117 = vld [vmem:[%s3 + $0x1b8] sm:$0xff]
    %v1118 = vld [vmem:[%s3 + $0x1c0] sm:$0xff]
    %v1119 = vld [vmem:[%s3 + $0x1c8] sm:$0xff]
    %v1120 = vld [vmem:[%s3 + $0x1d0] sm:$0xff]
    %v1121 = vld [vmem:[%s3 + $0x1d8] sm:$0xff]
    %v1122 = vld [vmem:[%s3 + $0x1e0] sm:$0xff]
    %v1123 = vld [vmem:[%s3 + $0x1e8] sm:$0xff]
    %v1124 = vld [vmem:[%s3 + $0x1f0] sm:$0xff]
    %v1125 = vld [vmem:[%s3 + $0x1f8] sm:$0xff]
    %v1126 = vld [vmem:[%s3 + $0x200] sm:$0xff]
    %v1127 = vld [vmem:[%s3 + $0x208] sm:$0xff]
    %v1128 = vld [vmem:[%s3 + $0x210] sm:$0xff]
    %v1129 = vld [vmem:[%s3 + $0x218] sm:$0xff]
    %v1130 = vld [vmem:[%s3 + $0x220] sm:$0xff]
    %v1131 = vld [vmem:[%s3 + $0x228] sm:$0xff]
    %v1132 = vld [vmem:[%s3 + $0x230] sm:$0xff]
    %v1133 = vld [vmem:[%s3 + $0x238] sm:$0xff]
    %v1134 = vld [vmem:[%s3 + $0x240] sm:$0xff]
    %v1135 = vld [vmem:[%s3 + $0x248] sm:$0xff]
    %v1136 = vld [vmem:[%s3 + $0x250] sm:$0xff]
    %v1137 = vld [vmem:[%s3 + $0x258] sm:$0xff]
    %v1138 = vld [vmem:[%s3 + $0x260] sm:$0xff]
    %v1139 = vld [vmem:[%s3 + $0x268] sm:$0xff]
    %v1140 = vld [vmem:[%s3 + $0x270] sm:$0xff]
    %v1141 = vld [vmem:[%s3 + $0x278] sm:$0xff]
    %v1142 = vld [vmem:[%s3 + $0x280] sm:$0xff]
    %v1143 = vld [vmem:[%s3 + $0x288] sm:$0xff]
    %v1144 = vld [vmem:[%s3 + $0x290] sm:$0xff]
    %v1145 = vld [vmem:[%s3 + $0x298] sm:$0xff]
    %v1146 = vld [vmem:[%s3 + $0x2a0] sm:$0xff]
    %v1147 = vld [vmem:[%s3 + $0x2a8] sm:$0xff]
    %v1148 = vld [vmem:[%s3 + $0x2b0] sm:$0xff]
    %v1149 = vld [vmem:[%s3 + $0x2b8] sm:$0xff]
    %v1150 = vld [vmem:[%s3 + $0x2c0] sm:$0xff]
    %v1151 = vld [vmem:[%s3 + $0x2c8] sm:$0xff]
    %v1152 = vld [vmem:[%s3 + $0x2d0] sm:$0xff]
    %v1153 = vld [vmem:[%s3 + $0x2d8] sm:$0xff]
    %v1154 = vld [vmem:[%s3 + $0x2e0] sm:$0xff]
    %v1155 = vld [vmem:[%s3 + $0x2e8] sm:$0xff]
    %v1156 = vld [vmem:[%s3 + $0x2f0] sm:$0xff]
    %v1157 = vld [vmem:[%s3 + $0x2f8] sm:$0xff]
    %v1158 = vld [vmem:[%s3 + $0x300] sm:$0xff]
    %v1159 = vld [vmem:[%s3 + $0x308] sm:$0xff]
    %v1160 = vld [vmem:[%s3 + $0x310] sm:$0xff]
    %v1161 = vld [vmem:[%s3 + $0x318] sm:$0xff]
    %v1162 = vld [vmem:[%s3 + $0x320] sm:$0xff]
    %v1163 = vld [vmem:[%s3 + $0x328] sm:$0xff]
    %v1164 = vld [vmem:[%s3 + $0x330] sm:$0xff]
    %v1165 = vld [vmem:[%s3 + $0x338] sm:$0xff]
    %v1166 = vld [vmem:[%s3 + $0x340] sm:$0xff]
    %v1167 = vld [vmem:[%s3 + $0x348] sm:$0xff]
    %v1168 = vld [vmem:[%s3 + $0x350] sm:$0xff]
    %v1169 = vld [vmem:[%s3 + $0x358] sm:$0xff]
    %v1170 = vld [vmem:[%s3 + $0x360] sm:$0xff]
    %v1171 = vld [vmem:[%s3 + $0x368] sm:$0xff]
    %v1172 = vld [vmem:[%s3 + $0x370] sm:$0xff]
    %v1173 = vld [vmem:[%s3 + $0x378] sm:$0xff]
    %v1174 = vld [vmem:[%s3 + $0x380] sm:$0xff]
    %v1175 = vld [vmem:[%s3 + $0x388] sm:$0xff]
    %v1176 = vld [vmem:[%s3 + $0x390] sm:$0xff]
    %v1177 = vld [vmem:[%s3 + $0x398] sm:$0xff]
    %v1178 = vld [vmem:[%s3 + $0x3a0] sm:$0xff]
    %v1179 = vld [vmem:[%s3 + $0x3a8] sm:$0xff]
    %v1180 = vld [vmem:[%s3 + $0x3b0] sm:$0xff]
    %v1181 = vld [vmem:[%s3 + $0x3b8] sm:$0xff]
    %v1182 = vld [vmem:[%s3 + $0x3c0] sm:$0xff]
    %v1183 = vld [vmem:[%s3 + $0x3c8] sm:$0xff]
    %v1184 = vld [vmem:[%s3 + $0x3d0] sm:$0xff]
    %v1185 = vld [vmem:[%s3 + $0x3d8] sm:$0xff]
    %v1186 = vld [vmem:[%s3 + $0x3e0] sm:$0xff]
    %v1187 = vld [vmem:[%s3 + $0x3e8] sm:$0xff]
    %v1188 = vld [vmem:[%s3 + $0x3f0] sm:$0xff]
    %v1189 = vld [vmem:[%s3 + $0x3f8] sm:$0xff]
    %v1190 = vld [vmem:[%s3 + $0x400] sm:$0xff]
    %v1191 = vld [vmem:[%s3 + $0x408] sm:$0xff]
    %v1192 = vld [vmem:[%s3 + $0x410] sm:$0xff]
    %v1193 = vld [vmem:[%s3 + $0x418] sm:$0xff]
    %v1194 = vld [vmem:[%s3 + $0x420] sm:$0xff]
    %v1195 = vld [vmem:[%s3 + $0x428] sm:$0xff]
    %v1196 = vld [vmem:[%s3 + $0x430] sm:$0xff]
    %v1197 = vld [vmem:[%s3 + $0x438] sm:$0xff]
    %v1198 = vld [vmem:[%s3 + $0x440] sm:$0xff]
    %v1199 = vld [vmem:[%s3 + $0x448] sm:$0xff]
    %v1200 = vld [vmem:[%s3 + $0x450] sm:$0xff]
    %v1201 = vld [vmem:[%s3 + $0x458] sm:$0xff]
    %v1202 = vld [vmem:[%s3 + $0x460] sm:$0xff]
    %v1203 = vld [vmem:[%s3 + $0x468] sm:$0xff]
    %v1204 = vld [vmem:[%s3 + $0x470] sm:$0xff]
    %v1205 = vld [vmem:[%s3 + $0x478] sm:$0xff]
    %v1206 = vld [vmem:[%s3 + $0x480] sm:$0xff]
    %v1207 = vld [vmem:[%s3 + $0x488] sm:$0xff]
    %v1208 = vld [vmem:[%s3 + $0x490] sm:$0xff]
    %v1209 = vld [vmem:[%s3 + $0x498] sm:$0xff]
    %v1210 = vld [vmem:[%s3 + $0x4a0] sm:$0xff]
    %v1211 = vld [vmem:[%s3 + $0x4a8] sm:$0xff]
    %v1212 = vld [vmem:[%s3 + $0x4b0] sm:$0xff]
    %v1213 = vld [vmem:[%s3 + $0x4b8] sm:$0xff]
    %v1214 = vld [vmem:[%s3 + $0x4c0] sm:$0xff]
    %v1215 = vld [vmem:[%s3 + $0x4c8] sm:$0xff]
    %v1216 = vld [vmem:[%s3 + $0x4d0] sm:$0xff]
    %v1217 = vld [vmem:[%s3 + $0x4d8] sm:$0xff]
    %v1218 = vld [vmem:[%s3 + $0x4e0] sm:$0xff]
    %v1219 = vld [vmem:[%s3 + $0x4e8] sm:$0xff]
    %v1220 = vld [vmem:[%s3 + $0x4f0] sm:$0xff]
    %v1221 = vld [vmem:[%s3 + $0x4f8] sm:$0xff]
    %v1222 = vld [vmem:[%s3 + $0x500] sm:$0xff]
    %v1223 = vld [vmem:[%s3 + $0x508] sm:$0xff]
    %v1224 = vld [vmem:[%s3 + $0x510] sm:$0xff]
    %v1225 = vld [vmem:[%s3 + $0x518] sm:$0xff]
    %v1226 = vld [vmem:[%s3 + $0x520] sm:$0xff]
    %v1227 = vld [vmem:[%s3 + $0x528] sm:$0xff]
    %v1228 = vld [vmem:[%s3 + $0x530] sm:$0xff]
    %v1229 = vld [vmem:[%s3 + $0x538] sm:$0xff]
    %v1230 = vld [vmem:[%s3 + $0x540] sm:$0xff]
    %v1231 = vld [vmem:[%s3 + $0x548] sm:$0xff]
    %v1232 = vld [vmem:[%s3 + $0x550] sm:$0xff]
    %v1233 = vld [vmem:[%s3 + $0x558] sm:$0xff]
    %v1234 = vld [vmem:[%s3 + $0x560] sm:$0xff]
    %v1235 = vld [vmem:[%s3 + $0x568] sm:$0xff]
    %v1236 = vld [vmem:[%s3 + $0x570] sm:$0xff]
    %v1237 = vld [vmem:[%s3 + $0x578] sm:$0xff]
    %v1238 = vld [vmem:[%s3 + $0x580] sm:$0xff]
    %v1239 = vld [vmem:[%s3 + $0x588] sm:$0xff]
    %v1240 = vld [vmem:[%s3 + $0x590] sm:$0xff]
    %v1241 = vld [vmem:[%s3 + $0x598] sm:$0xff]
    %v1242 = vld [vmem:[%s3 + $0x5a0] sm:$0xff]
    %v1243 = vld [vmem:[%s3 + $0x5a8] sm:$0xff]
    %v1244 = vld [vmem:[%s3 + $0x5b0] sm:$0xff]
    %v1245 = vld [vmem:[%s3 + $0x5b8] sm:$0xff]
    %v1246 = vld [vmem:[%s3 + $0x5c0] sm:$0xff]
    %v1247 = vld [vmem:[%s3 + $0x5c8] sm:$0xff]
    %v1248 = vld [vmem:[%s3 + $0x5d0] sm:$0xff]
    %v1249 = vld [vmem:[%s3 + $0x5d8] sm:$0xff]
    %v1250 = vld [vmem:[%s3 + $0x5e0] sm:$0xff]
    %v1251 = vld [vmem:[%s3 + $0x5e8] sm:$0xff]
    %v1252 = vld [vmem:[%s3 + $0x5f0] sm:$0xff]
    %v1253 = vld [vmem:[%s3 + $0x5f8] sm:$0xff]
    %v1254 = vld [vmem:[%s3 + $0x600] sm:$0xff]
    %v1255 = vld [vmem:[%s3 + $0x608] sm:$0xff]
    %v1256 = vld [vmem:[%s3 + $0x610] sm:$0xff]
    %v1257 = vld [vmem:[%s3 + $0x618] sm:$0xff]
    %v1258 = vld [vmem:[%s3 + $0x620] sm:$0xff]
    %v1259 = vld [vmem:[%s3 + $0x628] sm:$0xff]
    %v1260 = vld [vmem:[%s3 + $0x630] sm:$0xff]
    %v1261 = vld [vmem:[%s3 + $0x638] sm:$0xff]
    %v1262 = vld [vmem:[%s3 + $0x640] sm:$0xff]
    %v1263 = vld [vmem:[%s3 + $0x648] sm:$0xff]
    %v1264 = vld [vmem:[%s3 + $0x650] sm:$0xff]
    %v1265 = vld [vmem:[%s3 + $0x658] sm:$0xff]
    %v1266 = vld [vmem:[%s3 + $0x660] sm:$0xff]
    %v1267 = vld [vmem:[%s3 + $0x668] sm:$0xff]
    %v1268 = vld [vmem:[%s3 + $0x670] sm:$0xff]
    %v1269 = vld [vmem:[%s3 + $0x678] sm:$0xff]
    %v1270 = vld [vmem:[%s3 + $0x680] sm:$0xff]
    %v1271 = vld [vmem:[%s3 + $0x688] sm:$0xff]
    %v1272 = vld [vmem:[%s3 + $0x690] sm:$0xff]
    %v1273 = vld [vmem:[%s3 + $0x698] sm:$0xff]
    %v1274 = vld [vmem:[%s3 + $0x6a0] sm:$0xff]
    %v1275 = vld [vmem:[%s3 + $0x6a8] sm:$0xff]
    %v1276 = vld [vmem:[%s3 + $0x6b0] sm:$0xff]
    %v1277 = vld [vmem:[%s3 + $0x6b8] sm:$0xff]
    %v1278 = vld [vmem:[%s3 + $0x6c0] sm:$0xff]
    %v1279 = vld [vmem:[%s3 + $0x6c8] sm:$0xff]
    %v1280 = vld [vmem:[%s3 + $0x6d0] sm:$0xff]
    %v1281 = vld [vmem:[%s3 + $0x6d8] sm:$0xff]
    %v1282 = vld [vmem:[%s3 + $0x6e0] sm:$0xff]
    %v1283 = vld [vmem:[%s3 + $0x6e8] sm:$0xff]
    %v1284 = vld [vmem:[%s3 + $0x6f0] sm:$0xff]
    %v1285 = vld [vmem:[%s3 + $0x6f8] sm:$0xff]
    %v1286 = vld [vmem:[%s3 + $0x700] sm:$0xff]
    %v1287 = vld [vmem:[%s3 + $0x708] sm:$0xff]
    %v1288 = vld [vmem:[%s3 + $0x710] sm:$0xff]
    %v1289 = vld [vmem:[%s3 + $0x718] sm:$0xff]
    %v1290 = vld [vmem:[%s3 + $0x720] sm:$0xff]
    %v1291 = vld [vmem:[%s3 + $0x728] sm:$0xff]
    %v1292 = vld [vmem:[%s3 + $0x730] sm:$0xff]
    %v1293 = vld [vmem:[%s3 + $0x738] sm:$0xff]
    %v1294 = vld [vmem:[%s3 + $0x740] sm:$0xff]
    %v1295 = vld [vmem:[%s3 + $0x748] sm:$0xff]
    %v1296 = vld [vmem:[%s3 + $0x750] sm:$0xff]
    %v1297 = vld [vmem:[%s3 + $0x758] sm:$0xff]
    %v1298 = vld [vmem:[%s3 + $0x760] sm:$0xff]
    %v1299 = vld [vmem:[%s3 + $0x768] sm:$0xff]
    %v1300 = vld [vmem:[%s3 + $0x770] sm:$0xff]
    %v1301 = vld [vmem:[%s3 + $0x778] sm:$0xff]
    %v1302 = vld [vmem:[%s3 + $0x780] sm:$0xff]
    %v1303 = vld [vmem:[%s3 + $0x788] sm:$0xff]
    %v1304 = vld [vmem:[%s3 + $0x790] sm:$0xff]
    %v1305 = vld [vmem:[%s3 + $0x798] sm:$0xff]
    %v1306 = vld [vmem:[%s3 + $0x7a0] sm:$0xff]
    %v1307 = vld [vmem:[%s3 + $0x7a8] sm:$0xff]
    %v1308 = vld [vmem:[%s3 + $0x7b0] sm:$0xff]
    %v1309 = vld [vmem:[%s3 + $0x7b8] sm:$0xff]
    %v1310 = vld [vmem:[%s3 + $0x7c0] sm:$0xff]
    %v1311 = vld [vmem:[%s3 + $0x7c8] sm:$0xff]
    %v1312 = vld [vmem:[%s3 + $0x7d0] sm:$0xff]
    %v1313 = vld [vmem:[%s3 + $0x7d8] sm:$0xff]
    %v1314 = vld [vmem:[%s3 + $0x7e0] sm:$0xff]
    %v1315 = vld [vmem:[%s3 + $0x7e8] sm:$0xff]
    %v1316 = vld [vmem:[%s3 + $0x7f0] sm:$0xff]
    %v1317 = vld [vmem:[%s3 + $0x7f8] sm:$0xff]
    %v1318 = vld [vmem:[%s4] sm:$0xf]
    %v1320 = vperm.slane %v1318, 0
    %v1321 = vperm.slane %v1318, 1
    %v1322 = vperm.slane %v1318, 2
    %v1323 = vperm.slane %v1318, 3
    %v1584 = vunpack.c.l.b16 %v1062
    %v1585 = vunpack.c.h.b16 %v1062
    %v1586 = vunpack.c.l.b16 %v1063
    %v1587 = vunpack.c.h.b16 %v1063
    %v1588 = vunpack.c.l.b16 %v1064
    %v1589 = vunpack.c.h.b16 %v1064
    %v1590 = vunpack.c.l.b16 %v1065
    %v1591 = vunpack.c.h.b16 %v1065
    %v1592 = vunpack.c.l.b16 %v1066
    %v1593 = vunpack.c.h.b16 %v1066
    %v1594 = vunpack.c.l.b16 %v1067
    %v1595 = vunpack.c.h.b16 %v1067
    %v1596 = vunpack.c.l.b16 %v1068
    %v1597 = vunpack.c.h.b16 %v1068
    %v1598 = vunpack.c.l.b16 %v1069
    %v1599 = vunpack.c.h.b16 %v1069
    %v1600 = vunpack.c.l.b16 %v1070
    %v1601 = vunpack.c.h.b16 %v1070
    %v1602 = vunpack.c.l.b16 %v1071
    %v1603 = vunpack.c.h.b16 %v1071
    %v1604 = vunpack.c.l.b16 %v1072
    %v1605 = vunpack.c.h.b16 %v1072
    %v1606 = vunpack.c.l.b16 %v1073
    %v1607 = vunpack.c.h.b16 %v1073
    %v1608 = vunpack.c.l.b16 %v1074
    %v1609 = vunpack.c.h.b16 %v1074
    %v1610 = vunpack.c.l.b16 %v1075
    %v1611 = vunpack.c.h.b16 %v1075
    %v1612 = vunpack.c.l.b16 %v1076
    %v1613 = vunpack.c.h.b16 %v1076
    %v1614 = vunpack.c.l.b16 %v1077
    %v1615 = vunpack.c.h.b16 %v1077
    %v1616 = vunpack.c.l.b16 %v1078
    %v1617 = vunpack.c.h.b16 %v1078
    %v1618 = vunpack.c.l.b16 %v1079
    %v1619 = vunpack.c.h.b16 %v1079
    %v1620 = vunpack.c.l.b16 %v1080
    %v1621 = vunpack.c.h.b16 %v1080
    %v1622 = vunpack.c.l.b16 %v1081
    %v1623 = vunpack.c.h.b16 %v1081
    %v1624 = vunpack.c.l.b16 %v1082
    %v1625 = vunpack.c.h.b16 %v1082
    %v1626 = vunpack.c.l.b16 %v1083
    %v1627 = vunpack.c.h.b16 %v1083
    %v1628 = vunpack.c.l.b16 %v1084
    %v1629 = vunpack.c.h.b16 %v1084
    %v1630 = vunpack.c.l.b16 %v1085
    %v1631 = vunpack.c.h.b16 %v1085
    %v1632 = vunpack.c.l.b16 %v1086
    %v1633 = vunpack.c.h.b16 %v1086
    %v1634 = vunpack.c.l.b16 %v1087
    %v1635 = vunpack.c.h.b16 %v1087
    %v1636 = vunpack.c.l.b16 %v1088
    %v1637 = vunpack.c.h.b16 %v1088
    %v1638 = vunpack.c.l.b16 %v1089
    %v1639 = vunpack.c.h.b16 %v1089
    %v1640 = vunpack.c.l.b16 %v1090
    %v1641 = vunpack.c.h.b16 %v1090
    %v1642 = vunpack.c.l.b16 %v1091
    %v1643 = vunpack.c.h.b16 %v1091
    %v1644 = vunpack.c.l.b16 %v1092
    %v1645 = vunpack.c.h.b16 %v1092
    %v1646 = vunpack.c.l.b16 %v1093
    %v1647 = vunpack.c.h.b16 %v1093
    %v1648 = vunpack.c.l.b16 %v1094
    %v1649 = vunpack.c.h.b16 %v1094
    %v1650 = vunpack.c.l.b16 %v1095
    %v1651 = vunpack.c.h.b16 %v1095
    %v1652 = vunpack.c.l.b16 %v1096
    %v1653 = vunpack.c.h.b16 %v1096
    %v1654 = vunpack.c.l.b16 %v1097
    %v1655 = vunpack.c.h.b16 %v1097
    %v1656 = vunpack.c.l.b16 %v1098
    %v1657 = vunpack.c.h.b16 %v1098
    %v1658 = vunpack.c.l.b16 %v1099
    %v1659 = vunpack.c.h.b16 %v1099
    %v1660 = vunpack.c.l.b16 %v1100
    %v1661 = vunpack.c.h.b16 %v1100
    %v1662 = vunpack.c.l.b16 %v1101
    %v1663 = vunpack.c.h.b16 %v1101
    %v1664 = vunpack.c.l.b16 %v1102
    %v1665 = vunpack.c.h.b16 %v1102
    %v1666 = vunpack.c.l.b16 %v1103
    %v1667 = vunpack.c.h.b16 %v1103
    %v1668 = vunpack.c.l.b16 %v1104
    %v1669 = vunpack.c.h.b16 %v1104
    %v1670 = vunpack.c.l.b16 %v1105
    %v1671 = vunpack.c.h.b16 %v1105
    %v1672 = vunpack.c.l.b16 %v1106
    %v1673 = vunpack.c.h.b16 %v1106
    %v1674 = vunpack.c.l.b16 %v1107
    %v1675 = vunpack.c.h.b16 %v1107
    %v1676 = vunpack.c.l.b16 %v1108
    %v1677 = vunpack.c.h.b16 %v1108
    %v1678 = vunpack.c.l.b16 %v1109
    %v1679 = vunpack.c.h.b16 %v1109
    %v1680 = vunpack.c.l.b16 %v1110
    %v1681 = vunpack.c.h.b16 %v1110
    %v1682 = vunpack.c.l.b16 %v1111
    %v1683 = vunpack.c.h.b16 %v1111
    %v1684 = vunpack.c.l.b16 %v1112
    %v1685 = vunpack.c.h.b16 %v1112
    %v1686 = vunpack.c.l.b16 %v1113
    %v1687 = vunpack.c.h.b16 %v1113
    %v1688 = vunpack.c.l.b16 %v1114
    %v1689 = vunpack.c.h.b16 %v1114
    %v1690 = vunpack.c.l.b16 %v1115
    %v1691 = vunpack.c.h.b16 %v1115
    %v1692 = vunpack.c.l.b16 %v1116
    %v1693 = vunpack.c.h.b16 %v1116
    %v1694 = vunpack.c.l.b16 %v1117
    %v1695 = vunpack.c.h.b16 %v1117
    %v1696 = vunpack.c.l.b16 %v1118
    %v1697 = vunpack.c.h.b16 %v1118
    %v1698 = vunpack.c.l.b16 %v1119
    %v1699 = vunpack.c.h.b16 %v1119
    %v1700 = vunpack.c.l.b16 %v1120
    %v1701 = vunpack.c.h.b16 %v1120
    %v1702 = vunpack.c.l.b16 %v1121
    %v1703 = vunpack.c.h.b16 %v1121
    %v1704 = vunpack.c.l.b16 %v1122
    %v1705 = vunpack.c.h.b16 %v1122
    %v1706 = vunpack.c.l.b16 %v1123
    %v1707 = vunpack.c.h.b16 %v1123
    %v1708 = vunpack.c.l.b16 %v1124
    %v1709 = vunpack.c.h.b16 %v1124
    %v1710 = vunpack.c.l.b16 %v1125
    %v1711 = vunpack.c.h.b16 %v1125
    %v1712 = vunpack.c.l.b16 %v1126
    %v1713 = vunpack.c.h.b16 %v1126
    %v1714 = vunpack.c.l.b16 %v1127
    %v1715 = vunpack.c.h.b16 %v1127
    %v1716 = vunpack.c.l.b16 %v1128
    %v1717 = vunpack.c.h.b16 %v1128
    %v1718 = vunpack.c.l.b16 %v1129
    %v1719 = vunpack.c.h.b16 %v1129
    %v1720 = vunpack.c.l.b16 %v1130
    %v1721 = vunpack.c.h.b16 %v1130
    %v1722 = vunpack.c.l.b16 %v1131
    %v1723 = vunpack.c.h.b16 %v1131
    %v1724 = vunpack.c.l.b16 %v1132
    %v1725 = vunpack.c.h.b16 %v1132
    %v1726 = vunpack.c.l.b16 %v1133
    %v1727 = vunpack.c.h.b16 %v1133
    %v1728 = vunpack.c.l.b16 %v1134
    %v1729 = vunpack.c.h.b16 %v1134
    %v1730 = vunpack.c.l.b16 %v1135
    %v1731 = vunpack.c.h.b16 %v1135
    %v1732 = vunpack.c.l.b16 %v1136
    %v1733 = vunpack.c.h.b16 %v1136
    %v1734 = vunpack.c.l.b16 %v1137
    %v1735 = vunpack.c.h.b16 %v1137
    %v1736 = vunpack.c.l.b16 %v1138
    %v1737 = vunpack.c.h.b16 %v1138
    %v1738 = vunpack.c.l.b16 %v1139
    %v1739 = vunpack.c.h.b16 %v1139
    %v1740 = vunpack.c.l.b16 %v1140
    %v1741 = vunpack.c.h.b16 %v1140
    %v1742 = vunpack.c.l.b16 %v1141
    %v1743 = vunpack.c.h.b16 %v1141
    %v1744 = vunpack.c.l.b16 %v1142
    %v1745 = vunpack.c.h.b16 %v1142
    %v1746 = vunpack.c.l.b16 %v1143
    %v1747 = vunpack.c.h.b16 %v1143
    %v1748 = vunpack.c.l.b16 %v1144
    %v1749 = vunpack.c.h.b16 %v1144
    %v1750 = vunpack.c.l.b16 %v1145
    %v1751 = vunpack.c.h.b16 %v1145
    %v1752 = vunpack.c.l.b16 %v1146
    %v1753 = vunpack.c.h.b16 %v1146
    %v1754 = vunpack.c.l.b16 %v1147
    %v1755 = vunpack.c.h.b16 %v1147
    %v1756 = vunpack.c.l.b16 %v1148
    %v1757 = vunpack.c.h.b16 %v1148
    %v1758 = vunpack.c.l.b16 %v1149
    %v1759 = vunpack.c.h.b16 %v1149
    %v1760 = vunpack.c.l.b16 %v1150
    %v1761 = vunpack.c.h.b16 %v1150
    %v1762 = vunpack.c.l.b16 %v1151
    %v1763 = vunpack.c.h.b16 %v1151
    %v1764 = vunpack.c.l.b16 %v1152
    %v1765 = vunpack.c.h.b16 %v1152
    %v1766 = vunpack.c.l.b16 %v1153
    %v1767 = vunpack.c.h.b16 %v1153
    %v1768 = vunpack.c.l.b16 %v1154
    %v1769 = vunpack.c.h.b16 %v1154
    %v1770 = vunpack.c.l.b16 %v1155
    %v1771 = vunpack.c.h.b16 %v1155
    %v1772 = vunpack.c.l.b16 %v1156
    %v1773 = vunpack.c.h.b16 %v1156
    %v1774 = vunpack.c.l.b16 %v1157
    %v1775 = vunpack.c.h.b16 %v1157
    %v1776 = vunpack.c.l.b16 %v1158
    %v1777 = vunpack.c.h.b16 %v1158
    %v1778 = vunpack.c.l.b16 %v1159
    %v1779 = vunpack.c.h.b16 %v1159
    %v1780 = vunpack.c.l.b16 %v1160
    %v1781 = vunpack.c.h.b16 %v1160
    %v1782 = vunpack.c.l.b16 %v1161
    %v1783 = vunpack.c.h.b16 %v1161
    %v1784 = vunpack.c.l.b16 %v1162
    %v1785 = vunpack.c.h.b16 %v1162
    %v1786 = vunpack.c.l.b16 %v1163
    %v1787 = vunpack.c.h.b16 %v1163
    %v1788 = vunpack.c.l.b16 %v1164
    %v1789 = vunpack.c.h.b16 %v1164
    %v1790 = vunpack.c.l.b16 %v1165
    %v1791 = vunpack.c.h.b16 %v1165
    %v1792 = vunpack.c.l.b16 %v1166
    %v1793 = vunpack.c.h.b16 %v1166
    %v1794 = vunpack.c.l.b16 %v1167
    %v1795 = vunpack.c.h.b16 %v1167
    %v1796 = vunpack.c.l.b16 %v1168
    %v1797 = vunpack.c.h.b16 %v1168
    %v1798 = vunpack.c.l.b16 %v1169
    %v1799 = vunpack.c.h.b16 %v1169
    %v1800 = vunpack.c.l.b16 %v1170
    %v1801 = vunpack.c.h.b16 %v1170
    %v1802 = vunpack.c.l.b16 %v1171
    %v1803 = vunpack.c.h.b16 %v1171
    %v1804 = vunpack.c.l.b16 %v1172
    %v1805 = vunpack.c.h.b16 %v1172
    %v1806 = vunpack.c.l.b16 %v1173
    %v1807 = vunpack.c.h.b16 %v1173
    %v1808 = vunpack.c.l.b16 %v1174
    %v1809 = vunpack.c.h.b16 %v1174
    %v1810 = vunpack.c.l.b16 %v1175
    %v1811 = vunpack.c.h.b16 %v1175
    %v1812 = vunpack.c.l.b16 %v1176
    %v1813 = vunpack.c.h.b16 %v1176
    %v1814 = vunpack.c.l.b16 %v1177
    %v1815 = vunpack.c.h.b16 %v1177
    %v1816 = vunpack.c.l.b16 %v1178
    %v1817 = vunpack.c.h.b16 %v1178
    %v1818 = vunpack.c.l.b16 %v1179
    %v1819 = vunpack.c.h.b16 %v1179
    %v1820 = vunpack.c.l.b16 %v1180
    %v1821 = vunpack.c.h.b16 %v1180
    %v1822 = vunpack.c.l.b16 %v1181
    %v1823 = vunpack.c.h.b16 %v1181
    %v1824 = vunpack.c.l.b16 %v1182
    %v1825 = vunpack.c.h.b16 %v1182
    %v1826 = vunpack.c.l.b16 %v1183
    %v1827 = vunpack.c.h.b16 %v1183
    %v1828 = vunpack.c.l.b16 %v1184
    %v1829 = vunpack.c.h.b16 %v1184
    %v1830 = vunpack.c.l.b16 %v1185
    %v1831 = vunpack.c.h.b16 %v1185
    %v1832 = vunpack.c.l.b16 %v1186
    %v1833 = vunpack.c.h.b16 %v1186
    %v1834 = vunpack.c.l.b16 %v1187
    %v1835 = vunpack.c.h.b16 %v1187
    %v1836 = vunpack.c.l.b16 %v1188
    %v1837 = vunpack.c.h.b16 %v1188
    %v1838 = vunpack.c.l.b16 %v1189
    %v1839 = vunpack.c.h.b16 %v1189
    %v1840 = vunpack.c.l.b16 %v1190
    %v1841 = vunpack.c.h.b16 %v1190
    %v1842 = vunpack.c.l.b16 %v1191
    %v1843 = vunpack.c.h.b16 %v1191
    %v1844 = vunpack.c.l.b16 %v1192
    %v1845 = vunpack.c.h.b16 %v1192
    %v1846 = vunpack.c.l.b16 %v1193
    %v1847 = vunpack.c.h.b16 %v1193
    %v1848 = vunpack.c.l.b16 %v1194
    %v1849 = vunpack.c.h.b16 %v1194
    %v1850 = vunpack.c.l.b16 %v1195
    %v1851 = vunpack.c.h.b16 %v1195
    %v1852 = vunpack.c.l.b16 %v1196
    %v1853 = vunpack.c.h.b16 %v1196
    %v1854 = vunpack.c.l.b16 %v1197
    %v1855 = vunpack.c.h.b16 %v1197
    %v1856 = vunpack.c.l.b16 %v1198
    %v1857 = vunpack.c.h.b16 %v1198
    %v1858 = vunpack.c.l.b16 %v1199
    %v1859 = vunpack.c.h.b16 %v1199
    %v1860 = vunpack.c.l.b16 %v1200
    %v1861 = vunpack.c.h.b16 %v1200
    %v1862 = vunpack.c.l.b16 %v1201
    %v1863 = vunpack.c.h.b16 %v1201
    %v1864 = vunpack.c.l.b16 %v1202
    %v1865 = vunpack.c.h.b16 %v1202
    %v1866 = vunpack.c.l.b16 %v1203
    %v1867 = vunpack.c.h.b16 %v1203
    %v1868 = vunpack.c.l.b16 %v1204
    %v1869 = vunpack.c.h.b16 %v1204
    %v1870 = vunpack.c.l.b16 %v1205
    %v1871 = vunpack.c.h.b16 %v1205
    %v1872 = vunpack.c.l.b16 %v1206
    %v1873 = vunpack.c.h.b16 %v1206
    %v1874 = vunpack.c.l.b16 %v1207
    %v1875 = vunpack.c.h.b16 %v1207
    %v1876 = vunpack.c.l.b16 %v1208
    %v1877 = vunpack.c.h.b16 %v1208
    %v1878 = vunpack.c.l.b16 %v1209
    %v1879 = vunpack.c.h.b16 %v1209
    %v1880 = vunpack.c.l.b16 %v1210
    %v1881 = vunpack.c.h.b16 %v1210
    %v1882 = vunpack.c.l.b16 %v1211
    %v1883 = vunpack.c.h.b16 %v1211
    %v1884 = vunpack.c.l.b16 %v1212
    %v1885 = vunpack.c.h.b16 %v1212
    %v1886 = vunpack.c.l.b16 %v1213
    %v1887 = vunpack.c.h.b16 %v1213
    %v1888 = vunpack.c.l.b16 %v1214
    %v1889 = vunpack.c.h.b16 %v1214
    %v1890 = vunpack.c.l.b16 %v1215
    %v1891 = vunpack.c.h.b16 %v1215
    %v1892 = vunpack.c.l.b16 %v1216
    %v1893 = vunpack.c.h.b16 %v1216
    %v1894 = vunpack.c.l.b16 %v1217
    %v1895 = vunpack.c.h.b16 %v1217
    %v1896 = vunpack.c.l.b16 %v1218
    %v1897 = vunpack.c.h.b16 %v1218
    %v1898 = vunpack.c.l.b16 %v1219
    %v1899 = vunpack.c.h.b16 %v1219
    %v1900 = vunpack.c.l.b16 %v1220
    %v1901 = vunpack.c.h.b16 %v1220
    %v1902 = vunpack.c.l.b16 %v1221
    %v1903 = vunpack.c.h.b16 %v1221
    %v1904 = vunpack.c.l.b16 %v1222
    %v1905 = vunpack.c.h.b16 %v1222
    %v1906 = vunpack.c.l.b16 %v1223
    %v1907 = vunpack.c.h.b16 %v1223
    %v1908 = vunpack.c.l.b16 %v1224
    %v1909 = vunpack.c.h.b16 %v1224
    %v1910 = vunpack.c.l.b16 %v1225
    %v1911 = vunpack.c.h.b16 %v1225
    %v1912 = vunpack.c.l.b16 %v1226
    %v1913 = vunpack.c.h.b16 %v1226
    %v1914 = vunpack.c.l.b16 %v1227
    %v1915 = vunpack.c.h.b16 %v1227
    %v1916 = vunpack.c.l.b16 %v1228
    %v1917 = vunpack.c.h.b16 %v1228
    %v1918 = vunpack.c.l.b16 %v1229
    %v1919 = vunpack.c.h.b16 %v1229
    %v1920 = vunpack.c.l.b16 %v1230
    %v1921 = vunpack.c.h.b16 %v1230
    %v1922 = vunpack.c.l.b16 %v1231
    %v1923 = vunpack.c.h.b16 %v1231
    %v1924 = vunpack.c.l.b16 %v1232
    %v1925 = vunpack.c.h.b16 %v1232
    %v1926 = vunpack.c.l.b16 %v1233
    %v1927 = vunpack.c.h.b16 %v1233
    %v1928 = vunpack.c.l.b16 %v1234
    %v1929 = vunpack.c.h.b16 %v1234
    %v1930 = vunpack.c.l.b16 %v1235
    %v1931 = vunpack.c.h.b16 %v1235
    %v1932 = vunpack.c.l.b16 %v1236
    %v1933 = vunpack.c.h.b16 %v1236
    %v1934 = vunpack.c.l.b16 %v1237
    %v1935 = vunpack.c.h.b16 %v1237
    %v1936 = vunpack.c.l.b16 %v1238
    %v1937 = vunpack.c.h.b16 %v1238
    %v1938 = vunpack.c.l.b16 %v1239
    %v1939 = vunpack.c.h.b16 %v1239
    %v1940 = vunpack.c.l.b16 %v1240
    %v1941 = vunpack.c.h.b16 %v1240
    %v1942 = vunpack.c.l.b16 %v1241
    %v1943 = vunpack.c.h.b16 %v1241
    %v1944 = vunpack.c.l.b16 %v1242
    %v1945 = vunpack.c.h.b16 %v1242
    %v1946 = vunpack.c.l.b16 %v1243
    %v1947 = vunpack.c.h.b16 %v1243
    %v1948 = vunpack.c.l.b16 %v1244
    %v1949 = vunpack.c.h.b16 %v1244
    %v1950 = vunpack.c.l.b16 %v1245
    %v1951 = vunpack.c.h.b16 %v1245
    %v1952 = vunpack.c.l.b16 %v1246
    %v1953 = vunpack.c.h.b16 %v1246
    %v1954 = vunpack.c.l.b16 %v1247
    %v1955 = vunpack.c.h.b16 %v1247
    %v1956 = vunpack.c.l.b16 %v1248
    %v1957 = vunpack.c.h.b16 %v1248
    %v1958 = vunpack.c.l.b16 %v1249
    %v1959 = vunpack.c.h.b16 %v1249
    %v1960 = vunpack.c.l.b16 %v1250
    %v1961 = vunpack.c.h.b16 %v1250
    %v1962 = vunpack.c.l.b16 %v1251
    %v1963 = vunpack.c.h.b16 %v1251
    %v1964 = vunpack.c.l.b16 %v1252
    %v1965 = vunpack.c.h.b16 %v1252
    %v1966 = vunpack.c.l.b16 %v1253
    %v1967 = vunpack.c.h.b16 %v1253
    %v1968 = vunpack.c.l.b16 %v1254
    %v1969 = vunpack.c.h.b16 %v1254
    %v1970 = vunpack.c.l.b16 %v1255
    %v1971 = vunpack.c.h.b16 %v1255
    %v1972 = vunpack.c.l.b16 %v1256
    %v1973 = vunpack.c.h.b16 %v1256
    %v1974 = vunpack.c.l.b16 %v1257
    %v1975 = vunpack.c.h.b16 %v1257
    %v1976 = vunpack.c.l.b16 %v1258
    %v1977 = vunpack.c.h.b16 %v1258
    %v1978 = vunpack.c.l.b16 %v1259
    %v1979 = vunpack.c.h.b16 %v1259
    %v1980 = vunpack.c.l.b16 %v1260
    %v1981 = vunpack.c.h.b16 %v1260
    %v1982 = vunpack.c.l.b16 %v1261
    %v1983 = vunpack.c.h.b16 %v1261
    %v1984 = vunpack.c.l.b16 %v1262
    %v1985 = vunpack.c.h.b16 %v1262
    %v1986 = vunpack.c.l.b16 %v1263
    %v1987 = vunpack.c.h.b16 %v1263
    %v1988 = vunpack.c.l.b16 %v1264
    %v1989 = vunpack.c.h.b16 %v1264
    %v1990 = vunpack.c.l.b16 %v1265
    %v1991 = vunpack.c.h.b16 %v1265
    %v1992 = vunpack.c.l.b16 %v1266
    %v1993 = vunpack.c.h.b16 %v1266
    %v1994 = vunpack.c.l.b16 %v1267
    %v1995 = vunpack.c.h.b16 %v1267
    %v1996 = vunpack.c.l.b16 %v1268
    %v1997 = vunpack.c.h.b16 %v1268
    %v1998 = vunpack.c.l.b16 %v1269
    %v1999 = vunpack.c.h.b16 %v1269
    %v2000 = vunpack.c.l.b16 %v1270
    %v2001 = vunpack.c.h.b16 %v1270
    %v2002 = vunpack.c.l.b16 %v1271
    %v2003 = vunpack.c.h.b16 %v1271
    %v2004 = vunpack.c.l.b16 %v1272
    %v2005 = vunpack.c.h.b16 %v1272
    %v2006 = vunpack.c.l.b16 %v1273
    %v2007 = vunpack.c.h.b16 %v1273
    %v2008 = vunpack.c.l.b16 %v1274
    %v2009 = vunpack.c.h.b16 %v1274
    %v2010 = vunpack.c.l.b16 %v1275
    %v2011 = vunpack.c.h.b16 %v1275
    %v2012 = vunpack.c.l.b16 %v1276
    %v2013 = vunpack.c.h.b16 %v1276
    %v2014 = vunpack.c.l.b16 %v1277
    %v2015 = vunpack.c.h.b16 %v1277
    %v2016 = vunpack.c.l.b16 %v1278
    %v2017 = vunpack.c.h.b16 %v1278
    %v2018 = vunpack.c.l.b16 %v1279
    %v2019 = vunpack.c.h.b16 %v1279
    %v2020 = vunpack.c.l.b16 %v1280
    %v2021 = vunpack.c.h.b16 %v1280
    %v2022 = vunpack.c.l.b16 %v1281
    %v2023 = vunpack.c.h.b16 %v1281
    %v2024 = vunpack.c.l.b16 %v1282
    %v2025 = vunpack.c.h.b16 %v1282
    %v2026 = vunpack.c.l.b16 %v1283
    %v2027 = vunpack.c.h.b16 %v1283
    %v2028 = vunpack.c.l.b16 %v1284
    %v2029 = vunpack.c.h.b16 %v1284
    %v2030 = vunpack.c.l.b16 %v1285
    %v2031 = vunpack.c.h.b16 %v1285
    %v2032 = vunpack.c.l.b16 %v1286
    %v2033 = vunpack.c.h.b16 %v1286
    %v2034 = vunpack.c.l.b16 %v1287
    %v2035 = vunpack.c.h.b16 %v1287
    %v2036 = vunpack.c.l.b16 %v1288
    %v2037 = vunpack.c.h.b16 %v1288
    %v2038 = vunpack.c.l.b16 %v1289
    %v2039 = vunpack.c.h.b16 %v1289
    %v2040 = vunpack.c.l.b16 %v1290
    %v2041 = vunpack.c.h.b16 %v1290
    %v2042 = vunpack.c.l.b16 %v1291
    %v2043 = vunpack.c.h.b16 %v1291
    %v2044 = vunpack.c.l.b16 %v1292
    %v2045 = vunpack.c.h.b16 %v1292
    %v2046 = vunpack.c.l.b16 %v1293
    %v2047 = vunpack.c.h.b16 %v1293
    %v2048 = vunpack.c.l.b16 %v1294
    %v2049 = vunpack.c.h.b16 %v1294
    %v2050 = vunpack.c.l.b16 %v1295
    %v2051 = vunpack.c.h.b16 %v1295
    %v2052 = vunpack.c.l.b16 %v1296
    %v2053 = vunpack.c.h.b16 %v1296
    %v2054 = vunpack.c.l.b16 %v1297
    %v2055 = vunpack.c.h.b16 %v1297
    %v2056 = vunpack.c.l.b16 %v1298
    %v2057 = vunpack.c.h.b16 %v1298
    %v2058 = vunpack.c.l.b16 %v1299
    %v2059 = vunpack.c.h.b16 %v1299
    %v2060 = vunpack.c.l.b16 %v1300
    %v2061 = vunpack.c.h.b16 %v1300
    %v2062 = vunpack.c.l.b16 %v1301
    %v2063 = vunpack.c.h.b16 %v1301
    %v2064 = vunpack.c.l.b16 %v1302
    %v2065 = vunpack.c.h.b16 %v1302
    %v2066 = vunpack.c.l.b16 %v1303
    %v2067 = vunpack.c.h.b16 %v1303
    %v2068 = vunpack.c.l.b16 %v1304
    %v2069 = vunpack.c.h.b16 %v1304
    %v2070 = vunpack.c.l.b16 %v1305
    %v2071 = vunpack.c.h.b16 %v1305
    %v2072 = vunpack.c.l.b16 %v1306
    %v2073 = vunpack.c.h.b16 %v1306
    %v2074 = vunpack.c.l.b16 %v1307
    %v2075 = vunpack.c.h.b16 %v1307
    %v2076 = vunpack.c.l.b16 %v1308
    %v2077 = vunpack.c.h.b16 %v1308
    %v2078 = vunpack.c.l.b16 %v1309
    %v2079 = vunpack.c.h.b16 %v1309
    %v2080 = vunpack.c.l.b16 %v1310
    %v2081 = vunpack.c.h.b16 %v1310
    %v2082 = vunpack.c.l.b16 %v1311
    %v2083 = vunpack.c.h.b16 %v1311
    %v2084 = vunpack.c.l.b16 %v1312
    %v2085 = vunpack.c.h.b16 %v1312
    %v2086 = vunpack.c.l.b16 %v1313
    %v2087 = vunpack.c.h.b16 %v1313
    %v2088 = vunpack.c.l.b16 %v1314
    %v2089 = vunpack.c.h.b16 %v1314
    %v2090 = vunpack.c.l.b16 %v1315
    %v2091 = vunpack.c.h.b16 %v1315
    %v2092 = vunpack.c.l.b16 %v1316
    %v2093 = vunpack.c.h.b16 %v1316
    %v2094 = vunpack.c.l.b16 %v1317
    %v2095 = vunpack.c.h.b16 %v1317
    %v2096 = vpack.c.b16 %v1588, %v1584
    %v2097 = vpack.c.b16 %v1589, %v1585
    %v2098 = vpack.c.b16 %v1590, %v1586
    %v2099 = vpack.c.b16 %v1591, %v1587
    %v2100 = vpack.c.b16 %v1596, %v1592
    %v2101 = vpack.c.b16 %v1597, %v1593
    %v2102 = vpack.c.b16 %v1598, %v1594
    %v2103 = vpack.c.b16 %v1599, %v1595
    %v2104 = vpack.c.b16 %v1604, %v1600
    %v2105 = vpack.c.b16 %v1605, %v1601
    %v2106 = vpack.c.b16 %v1606, %v1602
    %v2107 = vpack.c.b16 %v1607, %v1603
    %v2108 = vpack.c.b16 %v1612, %v1608
    %v2109 = vpack.c.b16 %v1613, %v1609
    %v2110 = vpack.c.b16 %v1614, %v1610
    %v2111 = vpack.c.b16 %v1615, %v1611
    %v2112 = vpack.c.b16 %v1620, %v1616
    %v2113 = vpack.c.b16 %v1621, %v1617
    %v2114 = vpack.c.b16 %v1622, %v1618
    %v2115 = vpack.c.b16 %v1623, %v1619
    %v2116 = vpack.c.b16 %v1628, %v1624
    %v2117 = vpack.c.b16 %v1629, %v1625
    %v2118 = vpack.c.b16 %v1630, %v1626
    %v2119 = vpack.c.b16 %v1631, %v1627
    %v2120 = vpack.c.b16 %v1636, %v1632
    %v2121 = vpack.c.b16 %v1637, %v1633
    %v2122 = vpack.c.b16 %v1638, %v1634
    %v2123 = vpack.c.b16 %v1639, %v1635
    %v2124 = vpack.c.b16 %v1644, %v1640
    %v2125 = vpack.c.b16 %v1645, %v1641
    %v2126 = vpack.c.b16 %v1646, %v1642
    %v2127 = vpack.c.b16 %v1647, %v1643
    %v2128 = vpack.c.b16 %v1652, %v1648
    %v2129 = vpack.c.b16 %v1653, %v1649
    %v2130 = vpack.c.b16 %v1654, %v1650
    %v2131 = vpack.c.b16 %v1655, %v1651
    %v2132 = vpack.c.b16 %v1660, %v1656
    %v2133 = vpack.c.b16 %v1661, %v1657
    %v2134 = vpack.c.b16 %v1662, %v1658
    %v2135 = vpack.c.b16 %v1663, %v1659
    %v2136 = vpack.c.b16 %v1668, %v1664
    %v2137 = vpack.c.b16 %v1669, %v1665
    %v2138 = vpack.c.b16 %v1670, %v1666
    %v2139 = vpack.c.b16 %v1671, %v1667
    %v2140 = vpack.c.b16 %v1676, %v1672
    %v2141 = vpack.c.b16 %v1677, %v1673
    %v2142 = vpack.c.b16 %v1678, %v1674
    %v2143 = vpack.c.b16 %v1679, %v1675
    %v2144 = vpack.c.b16 %v1684, %v1680
    %v2145 = vpack.c.b16 %v1685, %v1681
    %v2146 = vpack.c.b16 %v1686, %v1682
    %v2147 = vpack.c.b16 %v1687, %v1683
    %v2148 = vpack.c.b16 %v1692, %v1688
    %v2149 = vpack.c.b16 %v1693, %v1689
    %v2150 = vpack.c.b16 %v1694, %v1690
    %v2151 = vpack.c.b16 %v1695, %v1691
    %v2152 = vpack.c.b16 %v1700, %v1696
    %v2153 = vpack.c.b16 %v1701, %v1697
    %v2154 = vpack.c.b16 %v1702, %v1698
    %v2155 = vpack.c.b16 %v1703, %v1699
    %v2156 = vpack.c.b16 %v1708, %v1704
    %v2157 = vpack.c.b16 %v1709, %v1705
    %v2158 = vpack.c.b16 %v1710, %v1706
    %v2159 = vpack.c.b16 %v1711, %v1707
    %v2160 = vpack.c.b16 %v1716, %v1712
    %v2161 = vpack.c.b16 %v1717, %v1713
    %v2162 = vpack.c.b16 %v1718, %v1714
    %v2163 = vpack.c.b16 %v1719, %v1715
    %v2164 = vpack.c.b16 %v1724, %v1720
    %v2165 = vpack.c.b16 %v1725, %v1721
    %v2166 = vpack.c.b16 %v1726, %v1722
    %v2167 = vpack.c.b16 %v1727, %v1723
    %v2168 = vpack.c.b16 %v1732, %v1728
    %v2169 = vpack.c.b16 %v1733, %v1729
    %v2170 = vpack.c.b16 %v1734, %v1730
    %v2171 = vpack.c.b16 %v1735, %v1731
    %v2172 = vpack.c.b16 %v1740, %v1736
    %v2173 = vpack.c.b16 %v1741, %v1737
    %v2174 = vpack.c.b16 %v1742, %v1738
    %v2175 = vpack.c.b16 %v1743, %v1739
    %v2176 = vpack.c.b16 %v1748, %v1744
    %v2177 = vpack.c.b16 %v1749, %v1745
    %v2178 = vpack.c.b16 %v1750, %v1746
    %v2179 = vpack.c.b16 %v1751, %v1747
    %v2180 = vpack.c.b16 %v1756, %v1752
    %v2181 = vpack.c.b16 %v1757, %v1753
    %v2182 = vpack.c.b16 %v1758, %v1754
    %v2183 = vpack.c.b16 %v1759, %v1755
    %v2184 = vpack.c.b16 %v1764, %v1760
    %v2185 = vpack.c.b16 %v1765, %v1761
    %v2186 = vpack.c.b16 %v1766, %v1762
    %v2187 = vpack.c.b16 %v1767, %v1763
    %v2188 = vpack.c.b16 %v1772, %v1768
    %v2189 = vpack.c.b16 %v1773, %v1769
    %v2190 = vpack.c.b16 %v1774, %v1770
    %v2191 = vpack.c.b16 %v1775, %v1771
    %v2192 = vpack.c.b16 %v1780, %v1776
    %v2193 = vpack.c.b16 %v1781, %v1777
    %v2194 = vpack.c.b16 %v1782, %v1778
    %v2195 = vpack.c.b16 %v1783, %v1779
    %v2196 = vpack.c.b16 %v1788, %v1784
    %v2197 = vpack.c.b16 %v1789, %v1785
    %v2198 = vpack.c.b16 %v1790, %v1786
    %v2199 = vpack.c.b16 %v1791, %v1787
    %v2200 = vpack.c.b16 %v1796, %v1792
    %v2201 = vpack.c.b16 %v1797, %v1793
    %v2202 = vpack.c.b16 %v1798, %v1794
    %v2203 = vpack.c.b16 %v1799, %v1795
    %v2204 = vpack.c.b16 %v1804, %v1800
    %v2205 = vpack.c.b16 %v1805, %v1801
    %v2206 = vpack.c.b16 %v1806, %v1802
    %v2207 = vpack.c.b16 %v1807, %v1803
    %v2208 = vpack.c.b16 %v1812, %v1808
    %v2209 = vpack.c.b16 %v1813, %v1809
    %v2210 = vpack.c.b16 %v1814, %v1810
    %v2211 = vpack.c.b16 %v1815, %v1811
    %v2212 = vpack.c.b16 %v1820, %v1816
    %v2213 = vpack.c.b16 %v1821, %v1817
    %v2214 = vpack.c.b16 %v1822, %v1818
    %v2215 = vpack.c.b16 %v1823, %v1819
    %v2216 = vpack.c.b16 %v1828, %v1824
    %v2217 = vpack.c.b16 %v1829, %v1825
    %v2218 = vpack.c.b16 %v1830, %v1826
    %v2219 = vpack.c.b16 %v1831, %v1827
    %v2220 = vpack.c.b16 %v1836, %v1832
    %v2221 = vpack.c.b16 %v1837, %v1833
    %v2222 = vpack.c.b16 %v1838, %v1834
    %v2223 = vpack.c.b16 %v1839, %v1835
    %v2224 = vpack.c.b16 %v1844, %v1840
    %v2225 = vpack.c.b16 %v1845, %v1841
    %v2226 = vpack.c.b16 %v1846, %v1842
    %v2227 = vpack.c.b16 %v1847, %v1843
    %v2228 = vpack.c.b16 %v1852, %v1848
    %v2229 = vpack.c.b16 %v1853, %v1849
    %v2230 = vpack.c.b16 %v1854, %v1850
    %v2231 = vpack.c.b16 %v1855, %v1851
    %v2232 = vpack.c.b16 %v1860, %v1856
    %v2233 = vpack.c.b16 %v1861, %v1857
    %v2234 = vpack.c.b16 %v1862, %v1858
    %v2235 = vpack.c.b16 %v1863, %v1859
    %v2236 = vpack.c.b16 %v1868, %v1864
    %v2237 = vpack.c.b16 %v1869, %v1865
    %v2238 = vpack.c.b16 %v1870, %v1866
    %v2239 = vpack.c.b16 %v1871, %v1867
    %v2240 = vpack.c.b16 %v1876, %v1872
    %v2241 = vpack.c.b16 %v1877, %v1873
    %v2242 = vpack.c.b16 %v1878, %v1874
    %v2243 = vpack.c.b16 %v1879, %v1875
    %v2244 = vpack.c.b16 %v1884, %v1880
    %v2245 = vpack.c.b16 %v1885, %v1881
    %v2246 = vpack.c.b16 %v1886, %v1882
    %v2247 = vpack.c.b16 %v1887, %v1883
    %v2248 = vpack.c.b16 %v1892, %v1888
    %v2249 = vpack.c.b16 %v1893, %v1889
    %v2250 = vpack.c.b16 %v1894, %v1890
    %v2251 = vpack.c.b16 %v1895, %v1891
    %v2252 = vpack.c.b16 %v1900, %v1896
    %v2253 = vpack.c.b16 %v1901, %v1897
    %v2254 = vpack.c.b16 %v1902, %v1898
    %v2255 = vpack.c.b16 %v1903, %v1899
    %v2256 = vpack.c.b16 %v1908, %v1904
    %v2257 = vpack.c.b16 %v1909, %v1905
    %v2258 = vpack.c.b16 %v1910, %v1906
    %v2259 = vpack.c.b16 %v1911, %v1907
    %v2260 = vpack.c.b16 %v1916, %v1912
    %v2261 = vpack.c.b16 %v1917, %v1913
    %v2262 = vpack.c.b16 %v1918, %v1914
    %v2263 = vpack.c.b16 %v1919, %v1915
    %v2264 = vpack.c.b16 %v1924, %v1920
    %v2265 = vpack.c.b16 %v1925, %v1921
    %v2266 = vpack.c.b16 %v1926, %v1922
    %v2267 = vpack.c.b16 %v1927, %v1923
    %v2268 = vpack.c.b16 %v1932, %v1928
    %v2269 = vpack.c.b16 %v1933, %v1929
    %v2270 = vpack.c.b16 %v1934, %v1930
    %v2271 = vpack.c.b16 %v1935, %v1931
    %v2272 = vpack.c.b16 %v1940, %v1936
    %v2273 = vpack.c.b16 %v1941, %v1937
    %v2274 = vpack.c.b16 %v1942, %v1938
    %v2275 = vpack.c.b16 %v1943, %v1939
    %v2276 = vpack.c.b16 %v1948, %v1944
    %v2277 = vpack.c.b16 %v1949, %v1945
    %v2278 = vpack.c.b16 %v1950, %v1946
    %v2279 = vpack.c.b16 %v1951, %v1947
    %v2280 = vpack.c.b16 %v1956, %v1952
    %v2281 = vpack.c.b16 %v1957, %v1953
    %v2282 = vpack.c.b16 %v1958, %v1954
    %v2283 = vpack.c.b16 %v1959, %v1955
    %v2284 = vpack.c.b16 %v1964, %v1960
    %v2285 = vpack.c.b16 %v1965, %v1961
    %v2286 = vpack.c.b16 %v1966, %v1962
    %v2287 = vpack.c.b16 %v1967, %v1963
    %v2288 = vpack.c.b16 %v1972, %v1968
    %v2289 = vpack.c.b16 %v1973, %v1969
    %v2290 = vpack.c.b16 %v1974, %v1970
    %v2291 = vpack.c.b16 %v1975, %v1971
    %v2292 = vpack.c.b16 %v1980, %v1976
    %v2293 = vpack.c.b16 %v1981, %v1977
    %v2294 = vpack.c.b16 %v1982, %v1978
    %v2295 = vpack.c.b16 %v1983, %v1979
    %v2296 = vpack.c.b16 %v1988, %v1984
    %v2297 = vpack.c.b16 %v1989, %v1985
    %v2298 = vpack.c.b16 %v1990, %v1986
    %v2299 = vpack.c.b16 %v1991, %v1987
    %v2300 = vpack.c.b16 %v1996, %v1992
    %v2301 = vpack.c.b16 %v1997, %v1993
    %v2302 = vpack.c.b16 %v1998, %v1994
    %v2303 = vpack.c.b16 %v1999, %v1995
    %v2304 = vpack.c.b16 %v2004, %v2000
    %v2305 = vpack.c.b16 %v2005, %v2001
    %v2306 = vpack.c.b16 %v2006, %v2002
    %v2307 = vpack.c.b16 %v2007, %v2003
    %v2308 = vpack.c.b16 %v2012, %v2008
    %v2309 = vpack.c.b16 %v2013, %v2009
    %v2310 = vpack.c.b16 %v2014, %v2010
    %v2311 = vpack.c.b16 %v2015, %v2011
    %v2312 = vpack.c.b16 %v2020, %v2016
    %v2313 = vpack.c.b16 %v2021, %v2017
    %v2314 = vpack.c.b16 %v2022, %v2018
    %v2315 = vpack.c.b16 %v2023, %v2019
    %v2316 = vpack.c.b16 %v2028, %v2024
    %v2317 = vpack.c.b16 %v2029, %v2025
    %v2318 = vpack.c.b16 %v2030, %v2026
    %v2319 = vpack.c.b16 %v2031, %v2027
    %v2320 = vpack.c.b16 %v2036, %v2032
    %v2321 = vpack.c.b16 %v2037, %v2033
    %v2322 = vpack.c.b16 %v2038, %v2034
    %v2323 = vpack.c.b16 %v2039, %v2035
    %v2324 = vpack.c.b16 %v2044, %v2040
    %v2325 = vpack.c.b16 %v2045, %v2041
    %v2326 = vpack.c.b16 %v2046, %v2042
    %v2327 = vpack.c.b16 %v2047, %v2043
    %v2328 = vpack.c.b16 %v2052, %v2048
    %v2329 = vpack.c.b16 %v2053, %v2049
    %v2330 = vpack.c.b16 %v2054, %v2050
    %v2331 = vpack.c.b16 %v2055, %v2051
    %v2332 = vpack.c.b16 %v2060, %v2056
    %v2333 = vpack.c.b16 %v2061, %v2057
    %v2334 = vpack.c.b16 %v2062, %v2058
    %v2335 = vpack.c.b16 %v2063, %v2059
    %v2336 = vpack.c.b16 %v2068, %v2064
    %v2337 = vpack.c.b16 %v2069, %v2065
    %v2338 = vpack.c.b16 %v2070, %v2066
    %v2339 = vpack.c.b16 %v2071, %v2067
    %v2340 = vpack.c.b16 %v2076, %v2072
    %v2341 = vpack.c.b16 %v2077, %v2073
    %v2342 = vpack.c.b16 %v2078, %v2074
    %v2343 = vpack.c.b16 %v2079, %v2075
    %v2344 = vpack.c.b16 %v2084, %v2080
    %v2345 = vpack.c.b16 %v2085, %v2081
    %v2346 = vpack.c.b16 %v2086, %v2082
    %v2347 = vpack.c.b16 %v2087, %v2083
    %v2348 = vpack.c.b16 %v2092, %v2088
    %v2349 = vpack.c.b16 %v2093, %v2089
    %v2350 = vpack.c.b16 %v2094, %v2090
    %v2351 = vpack.c.b16 %v2095, %v2091
    %2608 = vmatpush.bf16.msra.mxu0 %v2124
    %2609 = vmatpush.bf16.msra.mxu0 %v2120
    %2610 = vmatpush.bf16.msra.mxu0 %v2116
    %2611 = vmatpush.bf16.msra.mxu0 %v2112
    %2612 = vmatpush.bf16.msra.mxu0 %v2108
    %2613 = vmatpush.bf16.msra.mxu0 %v2104
    %2614 = vmatpush.bf16.msra.mxu0 %v2100
    %2615 = vmatpush.bf16.msra.mxu0 %v2096
    %2616 = vmatmul.bf16.gmra.mxu0 %v1054
    %v2617 = vpop.f32.mrf.mxu0
    %v2618 = vadd.f32 %v1320, %v2617
    %v2619 = vpop.f32.mrf.mxu0
    %2620 = vdwg.mxu0
    %2621 = vmatpush.bf16.msra.mxu0 %v2156
    %2622 = vmatpush.bf16.msra.mxu0 %v2152
    %2623 = vmatpush.bf16.msra.mxu0 %v2148
    %2624 = vmatpush.bf16.msra.mxu0 %v2144
    %2625 = vmatpush.bf16.msra.mxu0 %v2140
    %2626 = vmatpush.bf16.msra.mxu0 %v2136
    %2627 = vmatpush.bf16.msra.mxu0 %v2132
    %2628 = vmatpush.bf16.msra.mxu0 %v2128
    %2629 = vmatmul.bf16.gmra.mxu0 %v1055
    %v2630 = vpop.f32.mrf.mxu0
    %v2631 = vadd.f32 %v2618, %v2630
    %v2632 = vpop.f32.mrf.mxu0
    %2633 = vdwg.mxu0
    %2634 = vmatpush.bf16.msra.mxu0 %v2188
    %2635 = vmatpush.bf16.msra.mxu0 %v2184
    %2636 = vmatpush.bf16.msra.mxu0 %v2180
    %2637 = vmatpush.bf16.msra.mxu0 %v2176
    %2638 = vmatpush.bf16.msra.mxu0 %v2172
    %2639 = vmatpush.bf16.msra.mxu0 %v2168
    %2640 = vmatpush.bf16.msra.mxu0 %v2164
    %2641 = vmatpush.bf16.msra.mxu0 %v2160
    %2642 = vmatmul.bf16.gmra.mxu0 %v1056
    %v2643 = vpop.f32.mrf.mxu0
    %v2644 = vadd.f32 %v2631, %v2643
    %v2645 = vpop.f32.mrf.mxu0
    %2646 = vdwg.mxu0
    %2647 = vmatpush.bf16.msra.mxu0 %v2220
    %2648 = vmatpush.bf16.msra.mxu0 %v2216
    %2649 = vmatpush.bf16.msra.mxu0 %v2212
    %2650 = vmatpush.bf16.msra.mxu0 %v2208
    %2651 = vmatpush.bf16.msra.mxu0 %v2204
    %2652 = vmatpush.bf16.msra.mxu0 %v2200
    %2653 = vmatpush.bf16.msra.mxu0 %v2196
    %2654 = vmatpush.bf16.msra.mxu0 %v2192
    %2655 = vmatmul.bf16.gmra.mxu0 %v1057
    %v2656 = vpop.f32.mrf.mxu0
    %v2657 = vadd.f32 %v2644, %v2656
    %v2658 = vpop.f32.mrf.mxu0
    %2659 = vdwg.mxu0
    %2660 = vmatpush.bf16.msra.mxu0 %v2252
    %2661 = vmatpush.bf16.msra.mxu0 %v2248
    %2662 = vmatpush.bf16.msra.mxu0 %v2244
    %2663 = vmatpush.bf16.msra.mxu0 %v2240
    %2664 = vmatpush.bf16.msra.mxu0 %v2236
    %2665 = vmatpush.bf16.msra.mxu0 %v2232
    %2666 = vmatpush.bf16.msra.mxu0 %v2228
    %2667 = vmatpush.bf16.msra.mxu0 %v2224
    %2668 = vmatmul.bf16.gmra.mxu0 %v1058
    %v2669 = vpop.f32.mrf.mxu0
    %v2670 = vadd.f32 %v2657, %v2669
    %v2671 = vpop.f32.mrf.mxu0
    %2672 = vdwg.mxu0
    %2673 = vmatpush.bf16.msra.mxu0 %v2284
    %2674 = vmatpush.bf16.msra.mxu0 %v2280
    %2675 = vmatpush.bf16.msra.mxu0 %v2276
    %2676 = vmatpush.bf16.msra.mxu0 %v2272
    %2677 = vmatpush.bf16.msra.mxu0 %v2268
    %2678 = vmatpush.bf16.msra.mxu0 %v2264
    %2679 = vmatpush.bf16.msra.mxu0 %v2260
    %2680 = vmatpush.bf16.msra.mxu0 %v2256
    %2681 = vmatmul.bf16.gmra.mxu0 %v1059
    %v2682 = vpop.f32.mrf.mxu0
    %v2683 = vadd.f32 %v2670, %v2682
    %v2684 = vpop.f32.mrf.mxu0
    %2685 = vdwg.mxu0
    %2686 = vmatpush.bf16.msra.mxu0 %v2316
    %2687 = vmatpush.bf16.msra.mxu0 %v2312
    %2688 = vmatpush.bf16.msra.mxu0 %v2308
    %2689 = vmatpush.bf16.msra.mxu0 %v2304
    %2690 = vmatpush.bf16.msra.mxu0 %v2300
    %2691 = vmatpush.bf16.msra.mxu0 %v2296
    %2692 = vmatpush.bf16.msra.mxu0 %v2292
    %2693 = vmatpush.bf16.msra.mxu0 %v2288
    %2694 = vmatmul.bf16.gmra.mxu0 %v1060
    %v2695 = vpop.f32.mrf.mxu0
    %v2696 = vadd.f32 %v2683, %v2695
    %v2697 = vpop.f32.mrf.mxu0
    %2698 = vdwg.mxu0
    %2699 = vmatpush.bf16.msra.mxu0 %v2348
    %2700 = vmatpush.bf16.msra.mxu0 %v2344
    %2701 = vmatpush.bf16.msra.mxu0 %v2340
    %2702 = vmatpush.bf16.msra.mxu0 %v2336
    %2703 = vmatpush.bf16.msra.mxu0 %v2332
    %2704 = vmatpush.bf16.msra.mxu0 %v2328
    %2705 = vmatpush.bf16.msra.mxu0 %v2324
    %2706 = vmatpush.bf16.msra.mxu0 %v2320
    %2707 = vmatmul.bf16.gmra.mxu0 %v1061
    %v2708 = vpop.f32.mrf.mxu0
    %v2709 = vadd.f32 %v2696, %v2708
    %v2710 = vpop.f32.mrf.mxu0
    %2711 = vdwg.mxu0
    %2712 = vmatpush.bf16.msra.mxu0 %v2125
    %2713 = vmatpush.bf16.msra.mxu0 %v2121
    %2714 = vmatpush.bf16.msra.mxu0 %v2117
    %2715 = vmatpush.bf16.msra.mxu0 %v2113
    %2716 = vmatpush.bf16.msra.mxu0 %v2109
    %2717 = vmatpush.bf16.msra.mxu0 %v2105
    %2718 = vmatpush.bf16.msra.mxu0 %v2101
    %2719 = vmatpush.bf16.msra.mxu0 %v2097
    %2720 = vmatmul.bf16.gmra.mxu0 %v1054
    %v2721 = vpop.f32.mrf.mxu0
    %v2722 = vadd.f32 %v1321, %v2721
    %v2723 = vpop.f32.mrf.mxu0
    %2724 = vdwg.mxu0
    %2725 = vmatpush.bf16.msra.mxu0 %v2157
    %2726 = vmatpush.bf16.msra.mxu0 %v2153
    %2727 = vmatpush.bf16.msra.mxu0 %v2149
    %2728 = vmatpush.bf16.msra.mxu0 %v2145
    %2729 = vmatpush.bf16.msra.mxu0 %v2141
    %2730 = vmatpush.bf16.msra.mxu0 %v2137
    %2731 = vmatpush.bf16.msra.mxu0 %v2133
    %2732 = vmatpush.bf16.msra.mxu0 %v2129
    %2733 = vmatmul.bf16.gmra.mxu0 %v1055
    %v2734 = vpop.f32.mrf.mxu0
    %v2735 = vadd.f32 %v2722, %v2734
    %v2736 = vpop.f32.mrf.mxu0
    %2737 = vdwg.mxu0
    %2738 = vmatpush.bf16.msra.mxu0 %v2189
    %2739 = vmatpush.bf16.msra.mxu0 %v2185
    %2740 = vmatpush.bf16.msra.mxu0 %v2181
    %2741 = vmatpush.bf16.msra.mxu0 %v2177
    %2742 = vmatpush.bf16.msra.mxu0 %v2173
    %2743 = vmatpush.bf16.msra.mxu0 %v2169
    %2744 = vmatpush.bf16.msra.mxu0 %v2165
    %2745 = vmatpush.bf16.msra.mxu0 %v2161
    %2746 = vmatmul.bf16.gmra.mxu0 %v1056
    %v2747 = vpop.f32.mrf.mxu0
    %v2748 = vadd.f32 %v2735, %v2747
    %v2749 = vpop.f32.mrf.mxu0
    %2750 = vdwg.mxu0
    %2751 = vmatpush.bf16.msra.mxu0 %v2221
    %2752 = vmatpush.bf16.msra.mxu0 %v2217
    %2753 = vmatpush.bf16.msra.mxu0 %v2213
    %2754 = vmatpush.bf16.msra.mxu0 %v2209
    %2755 = vmatpush.bf16.msra.mxu0 %v2205
    %2756 = vmatpush.bf16.msra.mxu0 %v2201
    %2757 = vmatpush.bf16.msra.mxu0 %v2197
    %2758 = vmatpush.bf16.msra.mxu0 %v2193
    %2759 = vmatmul.bf16.gmra.mxu0 %v1057
    %v2760 = vpop.f32.mrf.mxu0
    %v2761 = vadd.f32 %v2748, %v2760
    %v2762 = vpop.f32.mrf.mxu0
    %2763 = vdwg.mxu0
    %2764 = vmatpush.bf16.msra.mxu0 %v2253
    %2765 = vmatpush.bf16.msra.mxu0 %v2249
    %2766 = vmatpush.bf16.msra.mxu0 %v2245
    %2767 = vmatpush.bf16.msra.mxu0 %v2241
    %2768 = vmatpush.bf16.msra.mxu0 %v2237
    %2769 = vmatpush.bf16.msra.mxu0 %v2233
    %2770 = vmatpush.bf16.msra.mxu0 %v2229
    %2771 = vmatpush.bf16.msra.mxu0 %v2225
    %2772 = vmatmul.bf16.gmra.mxu0 %v1058
    %v2773 = vpop.f32.mrf.mxu0
    %v2774 = vadd.f32 %v2761, %v2773
    %v2775 = vpop.f32.mrf.mxu0
    %2776 = vdwg.mxu0
    %2777 = vmatpush.bf16.msra.mxu0 %v2285
    %2778 = vmatpush.bf16.msra.mxu0 %v2281
    %2779 = vmatpush.bf16.msra.mxu0 %v2277
    %2780 = vmatpush.bf16.msra.mxu0 %v2273
    %2781 = vmatpush.bf16.msra.mxu0 %v2269
    %2782 = vmatpush.bf16.msra.mxu0 %v2265
    %2783 = vmatpush.bf16.msra.mxu0 %v2261
    %2784 = vmatpush.bf16.msra.mxu0 %v2257
    %2785 = vmatmul.bf16.gmra.mxu0 %v1059
    %v2786 = vpop.f32.mrf.mxu0
    %v2787 = vadd.f32 %v2774, %v2786
    %v2788 = vpop.f32.mrf.mxu0
    %2789 = vdwg.mxu0
    %2790 = vmatpush.bf16.msra.mxu0 %v2317
    %2791 = vmatpush.bf16.msra.mxu0 %v2313
    %2792 = vmatpush.bf16.msra.mxu0 %v2309
    %2793 = vmatpush.bf16.msra.mxu0 %v2305
    %2794 = vmatpush.bf16.msra.mxu0 %v2301
    %2795 = vmatpush.bf16.msra.mxu0 %v2297
    %2796 = vmatpush.bf16.msra.mxu0 %v2293
    %2797 = vmatpush.bf16.msra.mxu0 %v2289
    %2798 = vmatmul.bf16.gmra.mxu0 %v1060
    %v2799 = vpop.f32.mrf.mxu0
    %v2800 = vadd.f32 %v2787, %v2799
    %v2801 = vpop.f32.mrf.mxu0
    %2802 = vdwg.mxu0
    %2803 = vmatpush.bf16.msra.mxu0 %v2349
    %2804 = vmatpush.bf16.msra.mxu0 %v2345
    %2805 = vmatpush.bf16.msra.mxu0 %v2341
    %2806 = vmatpush.bf16.msra.mxu0 %v2337
    %2807 = vmatpush.bf16.msra.mxu0 %v2333
    %2808 = vmatpush.bf16.msra.mxu0 %v2329
    %2809 = vmatpush.bf16.msra.mxu0 %v2325
    %2810 = vmatpush.bf16.msra.mxu0 %v2321
    %2811 = vmatmul.bf16.gmra.mxu0 %v1061
    %v2812 = vpop.f32.mrf.mxu0
    %v2813 = vadd.f32 %v2800, %v2812
    %v2814 = vpop.f32.mrf.mxu0
    %2815 = vdwg.mxu0
    %2816 = vmatpush.bf16.msra.mxu0 %v2126
    %2817 = vmatpush.bf16.msra.mxu0 %v2122
    %2818 = vmatpush.bf16.msra.mxu0 %v2118
    %2819 = vmatpush.bf16.msra.mxu0 %v2114
    %2820 = vmatpush.bf16.msra.mxu0 %v2110
    %2821 = vmatpush.bf16.msra.mxu0 %v2106
    %2822 = vmatpush.bf16.msra.mxu0 %v2102
    %2823 = vmatpush.bf16.msra.mxu0 %v2098
    %2824 = vmatmul.bf16.gmra.mxu0 %v1054
    %v2825 = vpop.f32.mrf.mxu0
    %v2826 = vadd.f32 %v1322, %v2825
    %v2827 = vpop.f32.mrf.mxu0
    %2828 = vdwg.mxu0
    %2829 = vmatpush.bf16.msra.mxu0 %v2158
    %2830 = vmatpush.bf16.msra.mxu0 %v2154
    %2831 = vmatpush.bf16.msra.mxu0 %v2150
    %2832 = vmatpush.bf16.msra.mxu0 %v2146
    %2833 = vmatpush.bf16.msra.mxu0 %v2142
    %2834 = vmatpush.bf16.msra.mxu0 %v2138
    %2835 = vmatpush.bf16.msra.mxu0 %v2134
    %2836 = vmatpush.bf16.msra.mxu0 %v2130
    %2837 = vmatmul.bf16.gmra.mxu0 %v1055
    %v2838 = vpop.f32.mrf.mxu0
    %v2839 = vadd.f32 %v2826, %v2838
    %v2840 = vpop.f32.mrf.mxu0
    %2841 = vdwg.mxu0
    %2842 = vmatpush.bf16.msra.mxu0 %v2190
    %2843 = vmatpush.bf16.msra.mxu0 %v2186
    %2844 = vmatpush.bf16.msra.mxu0 %v2182
    %2845 = vmatpush.bf16.msra.mxu0 %v2178
    %2846 = vmatpush.bf16.msra.mxu0 %v2174
    %2847 = vmatpush.bf16.msra.mxu0 %v2170
    %2848 = vmatpush.bf16.msra.mxu0 %v2166
    %2849 = vmatpush.bf16.msra.mxu0 %v2162
    %2850 = vmatmul.bf16.gmra.mxu0 %v1056
    %v2851 = vpop.f32.mrf.mxu0
    %v2852 = vadd.f32 %v2839, %v2851
    %v2853 = vpop.f32.mrf.mxu0
    %2854 = vdwg.mxu0
    %2855 = vmatpush.bf16.msra.mxu0 %v2222
    %2856 = vmatpush.bf16.msra.mxu0 %v2218
    %2857 = vmatpush.bf16.msra.mxu0 %v2214
    %2858 = vmatpush.bf16.msra.mxu0 %v2210
    %2859 = vmatpush.bf16.msra.mxu0 %v2206
    %2860 = vmatpush.bf16.msra.mxu0 %v2202
    %2861 = vmatpush.bf16.msra.mxu0 %v2198
    %2862 = vmatpush.bf16.msra.mxu0 %v2194
    %2863 = vmatmul.bf16.gmra.mxu0 %v1057
    %v2864 = vpop.f32.mrf.mxu0
    %v2865 = vadd.f32 %v2852, %v2864
    %v2866 = vpop.f32.mrf.mxu0
    %2867 = vdwg.mxu0
    %2868 = vmatpush.bf16.msra.mxu0 %v2254
    %2869 = vmatpush.bf16.msra.mxu0 %v2250
    %2870 = vmatpush.bf16.msra.mxu0 %v2246
    %2871 = vmatpush.bf16.msra.mxu0 %v2242
    %2872 = vmatpush.bf16.msra.mxu0 %v2238
    %2873 = vmatpush.bf16.msra.mxu0 %v2234
    %2874 = vmatpush.bf16.msra.mxu0 %v2230
    %2875 = vmatpush.bf16.msra.mxu0 %v2226
    %2876 = vmatmul.bf16.gmra.mxu0 %v1058
    %v2877 = vpop.f32.mrf.mxu0
    %v2878 = vadd.f32 %v2865, %v2877
    %v2879 = vpop.f32.mrf.mxu0
    %2880 = vdwg.mxu0
    %2881 = vmatpush.bf16.msra.mxu0 %v2286
    %2882 = vmatpush.bf16.msra.mxu0 %v2282
    %2883 = vmatpush.bf16.msra.mxu0 %v2278
    %2884 = vmatpush.bf16.msra.mxu0 %v2274
    %2885 = vmatpush.bf16.msra.mxu0 %v2270
    %2886 = vmatpush.bf16.msra.mxu0 %v2266
    %2887 = vmatpush.bf16.msra.mxu0 %v2262
    %2888 = vmatpush.bf16.msra.mxu0 %v2258
    %2889 = vmatmul.bf16.gmra.mxu0 %v1059
    %v2890 = vpop.f32.mrf.mxu0
    %v2891 = vadd.f32 %v2878, %v2890
    %v2892 = vpop.f32.mrf.mxu0
    %2893 = vdwg.mxu0
    %2894 = vmatpush.bf16.msra.mxu0 %v2318
    %2895 = vmatpush.bf16.msra.mxu0 %v2314
    %2896 = vmatpush.bf16.msra.mxu0 %v2310
    %2897 = vmatpush.bf16.msra.mxu0 %v2306
    %2898 = vmatpush.bf16.msra.mxu0 %v2302
    %2899 = vmatpush.bf16.msra.mxu0 %v2298
    %2900 = vmatpush.bf16.msra.mxu0 %v2294
    %2901 = vmatpush.bf16.msra.mxu0 %v2290
    %2902 = vmatmul.bf16.gmra.mxu0 %v1060
    %v2903 = vpop.f32.mrf.mxu0
    %v2904 = vadd.f32 %v2891, %v2903
    %v2905 = vpop.f32.mrf.mxu0
    %2906 = vdwg.mxu0
    %2907 = vmatpush.bf16.msra.mxu0 %v2350
    %2908 = vmatpush.bf16.msra.mxu0 %v2346
    %2909 = vmatpush.bf16.msra.mxu0 %v2342
    %2910 = vmatpush.bf16.msra.mxu0 %v2338
    %2911 = vmatpush.bf16.msra.mxu0 %v2334
    %2912 = vmatpush.bf16.msra.mxu0 %v2330
    %2913 = vmatpush.bf16.msra.mxu0 %v2326
    %2914 = vmatpush.bf16.msra.mxu0 %v2322
    %2915 = vmatmul.bf16.gmra.mxu0 %v1061
    %v2916 = vpop.f32.mrf.mxu0
    %v2917 = vadd.f32 %v2904, %v2916
    %v2918 = vpop.f32.mrf.mxu0
    %2919 = vdwg.mxu0
    %2920 = vmatpush.bf16.msra.mxu0 %v2127
    %2921 = vmatpush.bf16.msra.mxu0 %v2123
    %2922 = vmatpush.bf16.msra.mxu0 %v2119
    %2923 = vmatpush.bf16.msra.mxu0 %v2115
    %2924 = vmatpush.bf16.msra.mxu0 %v2111
    %2925 = vmatpush.bf16.msra.mxu0 %v2107
    %2926 = vmatpush.bf16.msra.mxu0 %v2103
    %2927 = vmatpush.bf16.msra.mxu0 %v2099
    %2928 = vmatmul.bf16.gmra.mxu0 %v1054
    %v2929 = vpop.f32.mrf.mxu0
    %v2930 = vadd.f32 %v1323, %v2929
    %v2931 = vpop.f32.mrf.mxu0
    %2932 = vdwg.mxu0
    %2933 = vmatpush.bf16.msra.mxu0 %v2159
    %2934 = vmatpush.bf16.msra.mxu0 %v2155
    %2935 = vmatpush.bf16.msra.mxu0 %v2151
    %2936 = vmatpush.bf16.msra.mxu0 %v2147
    %2937 = vmatpush.bf16.msra.mxu0 %v2143
    %2938 = vmatpush.bf16.msra.mxu0 %v2139
    %2939 = vmatpush.bf16.msra.mxu0 %v2135
    %2940 = vmatpush.bf16.msra.mxu0 %v2131
    %2941 = vmatmul.bf16.gmra.mxu0 %v1055
    %v2942 = vpop.f32.mrf.mxu0
    %v2943 = vadd.f32 %v2930, %v2942
    %v2944 = vpop.f32.mrf.mxu0
    %2945 = vdwg.mxu0
    %2946 = vmatpush.bf16.msra.mxu0 %v2191
    %2947 = vmatpush.bf16.msra.mxu0 %v2187
    %2948 = vmatpush.bf16.msra.mxu0 %v2183
    %2949 = vmatpush.bf16.msra.mxu0 %v2179
    %2950 = vmatpush.bf16.msra.mxu0 %v2175
    %2951 = vmatpush.bf16.msra.mxu0 %v2171
    %2952 = vmatpush.bf16.msra.mxu0 %v2167
    %2953 = vmatpush.bf16.msra.mxu0 %v2163
    %2954 = vmatmul.bf16.gmra.mxu0 %v1056
    %v2955 = vpop.f32.mrf.mxu0
    %v2956 = vadd.f32 %v2943, %v2955
    %v2957 = vpop.f32.mrf.mxu0
    %2958 = vdwg.mxu0
    %2959 = vmatpush.bf16.msra.mxu0 %v2223
    %2960 = vmatpush.bf16.msra.mxu0 %v2219
    %2961 = vmatpush.bf16.msra.mxu0 %v2215
    %2962 = vmatpush.bf16.msra.mxu0 %v2211
    %2963 = vmatpush.bf16.msra.mxu0 %v2207
    %2964 = vmatpush.bf16.msra.mxu0 %v2203
    %2965 = vmatpush.bf16.msra.mxu0 %v2199
    %2966 = vmatpush.bf16.msra.mxu0 %v2195
    %2967 = vmatmul.bf16.gmra.mxu0 %v1057
    %v2968 = vpop.f32.mrf.mxu0
    %v2969 = vadd.f32 %v2956, %v2968
    %v2970 = vpop.f32.mrf.mxu0
    %2971 = vdwg.mxu0
    %2972 = vmatpush.bf16.msra.mxu0 %v2255
    %2973 = vmatpush.bf16.msra.mxu0 %v2251
    %2974 = vmatpush.bf16.msra.mxu0 %v2247
    %2975 = vmatpush.bf16.msra.mxu0 %v2243
    %2976 = vmatpush.bf16.msra.mxu0 %v2239
    %2977 = vmatpush.bf16.msra.mxu0 %v2235
    %2978 = vmatpush.bf16.msra.mxu0 %v2231
    %2979 = vmatpush.bf16.msra.mxu0 %v2227
    %2980 = vmatmul.bf16.gmra.mxu0 %v1058
    %v2981 = vpop.f32.mrf.mxu0
    %v2982 = vadd.f32 %v2969, %v2981
    %v2983 = vpop.f32.mrf.mxu0
    %2984 = vdwg.mxu0
    %2985 = vmatpush.bf16.msra.mxu0 %v2287
    %2986 = vmatpush.bf16.msra.mxu0 %v2283
    %2987 = vmatpush.bf16.msra.mxu0 %v2279
    %2988 = vmatpush.bf16.msra.mxu0 %v2275
    %2989 = vmatpush.bf16.msra.mxu0 %v2271
    %2990 = vmatpush.bf16.msra.mxu0 %v2267
    %2991 = vmatpush.bf16.msra.mxu0 %v2263
    %2992 = vmatpush.bf16.msra.mxu0 %v2259
    %2993 = vmatmul.bf16.gmra.mxu0 %v1059
    %v2994 = vpop.f32.mrf.mxu0
    %v2995 = vadd.f32 %v2982, %v2994
    %v2996 = vpop.f32.mrf.mxu0
    %2997 = vdwg.mxu0
    %2998 = vmatpush.bf16.msra.mxu0 %v2319
    %2999 = vmatpush.bf16.msra.mxu0 %v2315
    %3000 = vmatpush.bf16.msra.mxu0 %v2311
    %3001 = vmatpush.bf16.msra.mxu0 %v2307
    %3002 = vmatpush.bf16.msra.mxu0 %v2303
    %3003 = vmatpush.bf16.msra.mxu0 %v2299
    %3004 = vmatpush.bf16.msra.mxu0 %v2295
    %3005 = vmatpush.bf16.msra.mxu0 %v2291
    %3006 = vmatmul.bf16.gmra.mxu0 %v1060
    %v3007 = vpop.f32.mrf.mxu0
    %v3008 = vadd.f32 %v2995, %v3007
    %v3009 = vpop.f32.mrf.mxu0
    %3010 = vdwg.mxu0
    %3011 = vmatpush.bf16.msra.mxu0 %v2351
    %3012 = vmatpush.bf16.msra.mxu0 %v2347
    %3013 = vmatpush.bf16.msra.mxu0 %v2343
    %3014 = vmatpush.bf16.msra.mxu0 %v2339
    %3015 = vmatpush.bf16.msra.mxu0 %v2335
    %3016 = vmatpush.bf16.msra.mxu0 %v2331
    %3017 = vmatpush.bf16.msra.mxu0 %v2327
    %3018 = vmatpush.bf16.msra.mxu0 %v2323
    %3019 = vmatmul.bf16.gmra.mxu0 %v1061
    %v3020 = vpop.f32.mrf.mxu0
    %v3021 = vadd.f32 %v3008, %v3020
    %v3022 = vpop.f32.mrf.mxu0
    %3023 = vdwg.mxu0
    %v3024 = vtanh.pop %v2709
    %v3025 = vtanh.pop %v2813
    %v3026 = vtanh.pop %v2917
    %v3027 = vtanh.pop %v3021
    %v3028 = vpack.c.bf16 %v3024, %v3024
    %v3029 = vpack.c.bf16 %v3025, %v3025
    %v3030 = vpack.c.bf16 %v3026, %v3026
    %v3031 = vpack.c.bf16 %v3027, %v3027
    %v3032 = vld [vmem:[%s5] sm:$0xf]
    %v3033 = vld [vmem:[%s5 + $0x4] sm:$0xf]
    %v3034 = vld [vmem:[%s5 + $0x8] sm:$0xf]
    %v3035 = vld [vmem:[%s5 + $0xc] sm:$0xf]
    %v3036 = vld [vmem:[%s5 + $0x10] sm:$0xf]
    %v3037 = vld [vmem:[%s5 + $0x14] sm:$0xf]
    %v3038 = vld [vmem:[%s5 + $0x18] sm:$0xf]
    %v3039 = vld [vmem:[%s5 + $0x1c] sm:$0xf]
    %v3040 = vld [vmem:[%s5 + $0x20] sm:$0xf]
    %v3041 = vld [vmem:[%s5 + $0x24] sm:$0xf]
    %v3042 = vld [vmem:[%s5 + $0x28] sm:$0xf]
    %v3043 = vld [vmem:[%s5 + $0x2c] sm:$0xf]
    %v3044 = vld [vmem:[%s5 + $0x30] sm:$0xf]
    %v3045 = vld [vmem:[%s5 + $0x34] sm:$0xf]
    %v3046 = vld [vmem:[%s5 + $0x38] sm:$0xf]
    %v3047 = vld [vmem:[%s5 + $0x3c] sm:$0xf]
    %v3048 = vld [vmem:[%s5 + $0x40] sm:$0xf]
    %v3049 = vld [vmem:[%s5 + $0x44] sm:$0xf]
    %v3050 = vld [vmem:[%s5 + $0x48] sm:$0xf]
    %v3051 = vld [vmem:[%s5 + $0x4c] sm:$0xf]
    %v3052 = vld [vmem:[%s5 + $0x50] sm:$0xf]
    %v3053 = vld [vmem:[%s5 + $0x54] sm:$0xf]
    %v3054 = vld [vmem:[%s5 + $0x58] sm:$0xf]
    %v3055 = vld [vmem:[%s5 + $0x5c] sm:$0xf]
    %v3056 = vld [vmem:[%s5 + $0x60] sm:$0xf]
    %v3057 = vld [vmem:[%s5 + $0x64] sm:$0xf]
    %v3058 = vld [vmem:[%s5 + $0x68] sm:$0xf]
    %v3059 = vld [vmem:[%s5 + $0x6c] sm:$0xf]
    %v3060 = vld [vmem:[%s5 + $0x70] sm:$0xf]
    %v3061 = vld [vmem:[%s5 + $0x74] sm:$0xf]
    %v3062 = vld [vmem:[%s5 + $0x78] sm:$0xf]
    %v3063 = vld [vmem:[%s5 + $0x7c] sm:$0xf]
    %v3064 = vld [vmem:[%s5 + $0x80] sm:$0xf]
    %v3065 = vld [vmem:[%s5 + $0x84] sm:$0xf]
    %v3066 = vld [vmem:[%s5 + $0x88] sm:$0xf]
    %v3067 = vld [vmem:[%s5 + $0x8c] sm:$0xf]
    %v3068 = vld [vmem:[%s5 + $0x90] sm:$0xf]
    %v3069 = vld [vmem:[%s5 + $0x94] sm:$0xf]
    %v3070 = vld [vmem:[%s5 + $0x98] sm:$0xf]
    %v3071 = vld [vmem:[%s5 + $0x9c] sm:$0xf]
    %v3072 = vld [vmem:[%s5 + $0xa0] sm:$0xf]
    %v3073 = vld [vmem:[%s5 + $0xa4] sm:$0xf]
    %v3074 = vld [vmem:[%s5 + $0xa8] sm:$0xf]
    %v3075 = vld [vmem:[%s5 + $0xac] sm:$0xf]
    %v3076 = vld [vmem:[%s5 + $0xb0] sm:$0xf]
    %v3077 = vld [vmem:[%s5 + $0xb4] sm:$0xf]
    %v3078 = vld [vmem:[%s5 + $0xb8] sm:$0xf]
    %v3079 = vld [vmem:[%s5 + $0xbc] sm:$0xf]
    %v3080 = vld [vmem:[%s5 + $0xc0] sm:$0xf]
    %v3081 = vld [vmem:[%s5 + $0xc4] sm:$0xf]
    %v3082 = vld [vmem:[%s5 + $0xc8] sm:$0xf]
    %v3083 = vld [vmem:[%s5 + $0xcc] sm:$0xf]
    %v3084 = vld [vmem:[%s5 + $0xd0] sm:$0xf]
    %v3085 = vld [vmem:[%s5 + $0xd4] sm:$0xf]
    %v3086 = vld [vmem:[%s5 + $0xd8] sm:$0xf]
    %v3087 = vld [vmem:[%s5 + $0xdc] sm:$0xf]
    %v3088 = vld [vmem:[%s5 + $0xe0] sm:$0xf]
    %v3089 = vld [vmem:[%s5 + $0xe4] sm:$0xf]
    %v3090 = vld [vmem:[%s5 + $0xe8] sm:$0xf]
    %v3091 = vld [vmem:[%s5 + $0xec] sm:$0xf]
    %v3092 = vld [vmem:[%s5 + $0xf0] sm:$0xf]
    %v3093 = vld [vmem:[%s5 + $0xf4] sm:$0xf]
    %v3094 = vld [vmem:[%s5 + $0xf8] sm:$0xf]
    %v3095 = vld [vmem:[%s5 + $0xfc] sm:$0xf]
    %v3096 = vld [vmem:[%s6] sm:$0x1]
    %v3098 = vperm.slane %v3096, 0
    %v3164 = vunpack.c.l.b16 %v3032
    %v3165 = vunpack.c.l.b16 %v3033
    %v3166 = vunpack.c.l.b16 %v3034
    %v3167 = vunpack.c.l.b16 %v3035
    %v3168 = vunpack.c.l.b16 %v3036
    %v3169 = vunpack.c.l.b16 %v3037
    %v3170 = vunpack.c.l.b16 %v3038
    %v3171 = vunpack.c.l.b16 %v3039
    %v3172 = vunpack.c.l.b16 %v3040
    %v3173 = vunpack.c.l.b16 %v3041
    %v3174 = vunpack.c.l.b16 %v3042
    %v3175 = vunpack.c.l.b16 %v3043
    %v3176 = vunpack.c.l.b16 %v3044
    %v3177 = vunpack.c.l.b16 %v3045
    %v3178 = vunpack.c.l.b16 %v3046
    %v3179 = vunpack.c.l.b16 %v3047
    %v3180 = vunpack.c.l.b16 %v3048
    %v3181 = vunpack.c.l.b16 %v3049
    %v3182 = vunpack.c.l.b16 %v3050
    %v3183 = vunpack.c.l.b16 %v3051
    %v3184 = vunpack.c.l.b16 %v3052
    %v3185 = vunpack.c.l.b16 %v3053
    %v3186 = vunpack.c.l.b16 %v3054
    %v3187 = vunpack.c.l.b16 %v3055
    %v3188 = vunpack.c.l.b16 %v3056
    %v3189 = vunpack.c.l.b16 %v3057
    %v3190 = vunpack.c.l.b16 %v3058
    %v3191 = vunpack.c.l.b16 %v3059
    %v3192 = vunpack.c.l.b16 %v3060
    %v3193 = vunpack.c.l.b16 %v3061
    %v3194 = vunpack.c.l.b16 %v3062
    %v3195 = vunpack.c.l.b16 %v3063
    %v3196 = vunpack.c.l.b16 %v3064
    %v3197 = vunpack.c.l.b16 %v3065
    %v3198 = vunpack.c.l.b16 %v3066
    %v3199 = vunpack.c.l.b16 %v3067
    %v3200 = vunpack.c.l.b16 %v3068
    %v3201 = vunpack.c.l.b16 %v3069
    %v3202 = vunpack.c.l.b16 %v3070
    %v3203 = vunpack.c.l.b16 %v3071
    %v3204 = vunpack.c.l.b16 %v3072
    %v3205 = vunpack.c.l.b16 %v3073
    %v3206 = vunpack.c.l.b16 %v3074
    %v3207 = vunpack.c.l.b16 %v3075
    %v3208 = vunpack.c.l.b16 %v3076
    %v3209 = vunpack.c.l.b16 %v3077
    %v3210 = vunpack.c.l.b16 %v3078
    %v3211 = vunpack.c.l.b16 %v3079
    %v3212 = vunpack.c.l.b16 %v3080
    %v3213 = vunpack.c.l.b16 %v3081
    %v3214 = vunpack.c.l.b16 %v3082
    %v3215 = vunpack.c.l.b16 %v3083
    %v3216 = vunpack.c.l.b16 %v3084
    %v3217 = vunpack.c.l.b16 %v3085
    %v3218 = vunpack.c.l.b16 %v3086
    %v3219 = vunpack.c.l.b16 %v3087
    %v3220 = vunpack.c.l.b16 %v3088
    %v3221 = vunpack.c.l.b16 %v3089
    %v3222 = vunpack.c.l.b16 %v3090
    %v3223 = vunpack.c.l.b16 %v3091
    %v3224 = vunpack.c.l.b16 %v3092
    %v3225 = vunpack.c.l.b16 %v3093
    %v3226 = vunpack.c.l.b16 %v3094
    %v3227 = vunpack.c.l.b16 %v3095
    %v3228 = vpack.c.b16 %v3165, %v3164
    %v3229 = vpack.c.b16 %v3167, %v3166
    %v3230 = vpack.c.b16 %v3169, %v3168
    %v3231 = vpack.c.b16 %v3171, %v3170
    %v3232 = vpack.c.b16 %v3173, %v3172
    %v3233 = vpack.c.b16 %v3175, %v3174
    %v3234 = vpack.c.b16 %v3177, %v3176
    %v3235 = vpack.c.b16 %v3179, %v3178
    %v3236 = vpack.c.b16 %v3181, %v3180
    %v3237 = vpack.c.b16 %v3183, %v3182
    %v3238 = vpack.c.b16 %v3185, %v3184
    %v3239 = vpack.c.b16 %v3187, %v3186
    %v3240 = vpack.c.b16 %v3189, %v3188
    %v3241 = vpack.c.b16 %v3191, %v3190
    %v3242 = vpack.c.b16 %v3193, %v3192
    %v3243 = vpack.c.b16 %v3195, %v3194
    %v3244 = vpack.c.b16 %v3197, %v3196
    %v3245 = vpack.c.b16 %v3199, %v3198
    %v3246 = vpack.c.b16 %v3201, %v3200
    %v3247 = vpack.c.b16 %v3203, %v3202
    %v3248 = vpack.c.b16 %v3205, %v3204
    %v3249 = vpack.c.b16 %v3207, %v3206
    %v3250 = vpack.c.b16 %v3209, %v3208
    %v3251 = vpack.c.b16 %v3211, %v3210
    %v3252 = vpack.c.b16 %v3213, %v3212
    %v3253 = vpack.c.b16 %v3215, %v3214
    %v3254 = vpack.c.b16 %v3217, %v3216
    %v3255 = vpack.c.b16 %v3219, %v3218
    %v3256 = vpack.c.b16 %v3221, %v3220
    %v3257 = vpack.c.b16 %v3223, %v3222
    %v3258 = vpack.c.b16 %v3225, %v3224
    %v3259 = vpack.c.b16 %v3227, %v3226
    %3292 = vmatpush.bf16.msra.mxu0 %v3235
    %3293 = vmatpush.bf16.msra.mxu0 %v3234
    %3294 = vmatpush.bf16.msra.mxu0 %v3233
    %3295 = vmatpush.bf16.msra.mxu0 %v3232
    %3296 = vmatpush.bf16.msra.mxu0 %v3231
    %3297 = vmatpush.bf16.msra.mxu0 %v3230
    %3298 = vmatpush.bf16.msra.mxu0 %v3229
    %3299 = vmatpush.bf16.msra.mxu0 %v3228
    %3300 = vmatmul.bf16.gmra.mxu0 %v3028
    %v3301 = vpop.f32.mrf.mxu0
    %v3302 = vadd.f32 %v3098, %v3301
    %v3303 = vpop.f32.mrf.mxu0
    %3304 = vdwg.mxu0
    %3305 = vmatpush.bf16.msra.mxu0 %v3243
    %3306 = vmatpush.bf16.msra.mxu0 %v3242
    %3307 = vmatpush.bf16.msra.mxu0 %v3241
    %3308 = vmatpush.bf16.msra.mxu0 %v3240
    %3309 = vmatpush.bf16.msra.mxu0 %v3239
    %3310 = vmatpush.bf16.msra.mxu0 %v3238
    %3311 = vmatpush.bf16.msra.mxu0 %v3237
    %3312 = vmatpush.bf16.msra.mxu0 %v3236
    %3313 = vmatmul.bf16.gmra.mxu0 %v3029
    %v3314 = vpop.f32.mrf.mxu0
    %v3315 = vadd.f32 %v3302, %v3314
    %v3316 = vpop.f32.mrf.mxu0
    %3317 = vdwg.mxu0
    %3318 = vmatpush.bf16.msra.mxu0 %v3251
    %3319 = vmatpush.bf16.msra.mxu0 %v3250
    %3320 = vmatpush.bf16.msra.mxu0 %v3249
    %3321 = vmatpush.bf16.msra.mxu0 %v3248
    %3322 = vmatpush.bf16.msra.mxu0 %v3247
    %3323 = vmatpush.bf16.msra.mxu0 %v3246
    %3324 = vmatpush.bf16.msra.mxu0 %v3245
    %3325 = vmatpush.bf16.msra.mxu0 %v3244
    %3326 = vmatmul.bf16.gmra.mxu0 %v3030
    %v3327 = vpop.f32.mrf.mxu0
    %v3328 = vadd.f32 %v3315, %v3327
    %v3329 = vpop.f32.mrf.mxu0
    %3330 = vdwg.mxu0
    %3331 = vmatpush.bf16.msra.mxu0 %v3259
    %3332 = vmatpush.bf16.msra.mxu0 %v3258
    %3333 = vmatpush.bf16.msra.mxu0 %v3257
    %3334 = vmatpush.bf16.msra.mxu0 %v3256
    %3335 = vmatpush.bf16.msra.mxu0 %v3255
    %3336 = vmatpush.bf16.msra.mxu0 %v3254
    %3337 = vmatpush.bf16.msra.mxu0 %v3253
    %3338 = vmatpush.bf16.msra.mxu0 %v3252
    %3339 = vmatmul.bf16.gmra.mxu0 %v3031
    %v3340 = vpop.f32.mrf.mxu0
    %v3341 = vadd.f32 %v3328, %v3340
    %v3342 = vpop.f32.mrf.mxu0
    %3343 = vdwg.mxu0
    %v3344 = vtanh.pop %v3341
    %v3345 = vpack.c.bf16 %v3344, %v3344
    %3346 = vst [vmem:[#allocation4] sm:$0xf] %v3345
    %v3347 = vld [vmem:[%s7] sm:$0xff]
    %v3348 = vld [vmem:[%s7 + $0x8] sm:$0xff]
    %v3349 = vld [vmem:[%s7 + $0x10] sm:$0xff]
    %v3350 = vld [vmem:[%s7 + $0x18] sm:$0xff]
    %v3351 = vld [vmem:[%s7 + $0x20] sm:$0xff]
    %v3352 = vld [vmem:[%s7 + $0x28] sm:$0xff]
    %v3353 = vld [vmem:[%s7 + $0x30] sm:$0xff]
    %v3354 = vld [vmem:[%s7 + $0x38] sm:$0xff]
    %v3355 = vld [vmem:[%s7 + $0x40] sm:$0xff]
    %v3356 = vld [vmem:[%s7 + $0x48] sm:$0xff]
    %v3357 = vld [vmem:[%s7 + $0x50] sm:$0xff]
    %v3358 = vld [vmem:[%s7 + $0x58] sm:$0xff]
    %v3359 = vld [vmem:[%s7 + $0x60] sm:$0xff]
    %v3360 = vld [vmem:[%s7 + $0x68] sm:$0xff]
    %v3361 = vld [vmem:[%s7 + $0x70] sm:$0xff]
    %v3362 = vld [vmem:[%s7 + $0x78] sm:$0xff]
    %v3363 = vld [vmem:[%s7 + $0x80] sm:$0xff]
    %v3364 = vld [vmem:[%s7 + $0x88] sm:$0xff]
    %v3365 = vld [vmem:[%s7 + $0x90] sm:$0xff]
    %v3366 = vld [vmem:[%s7 + $0x98] sm:$0xff]
    %v3367 = vld [vmem:[%s7 + $0xa0] sm:$0xff]
    %v3368 = vld [vmem:[%s7 + $0xa8] sm:$0xff]
    %v3369 = vld [vmem:[%s7 + $0xb0] sm:$0xff]
    %v3370 = vld [vmem:[%s7 + $0xb8] sm:$0xff]
    %v3371 = vld [vmem:[%s7 + $0xc0] sm:$0xff]
    %v3372 = vld [vmem:[%s7 + $0xc8] sm:$0xff]
    %v3373 = vld [vmem:[%s7 + $0xd0] sm:$0xff]
    %v3374 = vld [vmem:[%s7 + $0xd8] sm:$0xff]
    %v3375 = vld [vmem:[%s7 + $0xe0] sm:$0xff]
    %v3376 = vld [vmem:[%s7 + $0xe8] sm:$0xff]
    %v3377 = vld [vmem:[%s7 + $0xf0] sm:$0xff]
    %v3378 = vld [vmem:[%s7 + $0xf8] sm:$0xff]
    %v3379 = vld [vmem:[%s8] sm:$0xf]
    %v3381 = vperm.slane %v3379, 0
    %v3382 = vperm.slane %v3379, 1
    %v3383 = vperm.slane %v3379, 2
    %v3384 = vperm.slane %v3379, 3
    %v3421 = vunpack.c.l.b16 %v3347
    %v3422 = vunpack.c.h.b16 %v3347
    %v3423 = vunpack.c.l.b16 %v3348
    %v3424 = vunpack.c.h.b16 %v3348
    %v3425 = vunpack.c.l.b16 %v3349
    %v3426 = vunpack.c.h.b16 %v3349
    %v3427 = vunpack.c.l.b16 %v3350
    %v3428 = vunpack.c.h.b16 %v3350
    %v3429 = vunpack.c.l.b16 %v3351
    %v3430 = vunpack.c.h.b16 %v3351
    %v3431 = vunpack.c.l.b16 %v3352
    %v3432 = vunpack.c.h.b16 %v3352
    %v3433 = vunpack.c.l.b16 %v3353
    %v3434 = vunpack.c.h.b16 %v3353
    %v3435 = vunpack.c.l.b16 %v3354
    %v3436 = vunpack.c.h.b16 %v3354
    %v3437 = vunpack.c.l.b16 %v3355
    %v3438 = vunpack.c.h.b16 %v3355
    %v3439 = vunpack.c.l.b16 %v3356
    %v3440 = vunpack.c.h.b16 %v3356
    %v3441 = vunpack.c.l.b16 %v3357
    %v3442 = vunpack.c.h.b16 %v3357
    %v3443 = vunpack.c.l.b16 %v3358
    %v3444 = vunpack.c.h.b16 %v3358
    %v3445 = vunpack.c.l.b16 %v3359
    %v3446 = vunpack.c.h.b16 %v3359
    %v3447 = vunpack.c.l.b16 %v3360
    %v3448 = vunpack.c.h.b16 %v3360
    %v3449 = vunpack.c.l.b16 %v3361
    %v3450 = vunpack.c.h.b16 %v3361
    %v3451 = vunpack.c.l.b16 %v3362
    %v3452 = vunpack.c.h.b16 %v3362
    %v3453 = vunpack.c.l.b16 %v3363
    %v3454 = vunpack.c.h.b16 %v3363
    %v3455 = vunpack.c.l.b16 %v3364
    %v3456 = vunpack.c.h.b16 %v3364
    %v3457 = vunpack.c.l.b16 %v3365
    %v3458 = vunpack.c.h.b16 %v3365
    %v3459 = vunpack.c.l.b16 %v3366
    %v3460 = vunpack.c.h.b16 %v3366
    %v3461 = vunpack.c.l.b16 %v3367
    %v3462 = vunpack.c.h.b16 %v3367
    %v3463 = vunpack.c.l.b16 %v3368
    %v3464 = vunpack.c.h.b16 %v3368
    %v3465 = vunpack.c.l.b16 %v3369
    %v3466 = vunpack.c.h.b16 %v3369
    %v3467 = vunpack.c.l.b16 %v3370
    %v3468 = vunpack.c.h.b16 %v3370
    %v3469 = vunpack.c.l.b16 %v3371
    %v3470 = vunpack.c.h.b16 %v3371
    %v3471 = vunpack.c.l.b16 %v3372
    %v3472 = vunpack.c.h.b16 %v3372
    %v3473 = vunpack.c.l.b16 %v3373
    %v3474 = vunpack.c.h.b16 %v3373
    %v3475 = vunpack.c.l.b16 %v3374
    %v3476 = vunpack.c.h.b16 %v3374
    %v3477 = vunpack.c.l.b16 %v3375
    %v3478 = vunpack.c.h.b16 %v3375
    %v3479 = vunpack.c.l.b16 %v3376
    %v3480 = vunpack.c.h.b16 %v3376
    %v3481 = vunpack.c.l.b16 %v3377
    %v3482 = vunpack.c.h.b16 %v3377
    %v3483 = vunpack.c.l.b16 %v3378
    %v3484 = vunpack.c.h.b16 %v3378
    %v3485 = vpack.c.b16 %v3425, %v3421
    %v3486 = vpack.c.b16 %v3426, %v3422
    %v3487 = vpack.c.b16 %v3427, %v3423
    %v3488 = vpack.c.b16 %v3428, %v3424
    %v3489 = vpack.c.b16 %v3433, %v3429
    %v3490 = vpack.c.b16 %v3434, %v3430
    %v3491 = vpack.c.b16 %v3435, %v3431
    %v3492 = vpack.c.b16 %v3436, %v3432
    %v3493 = vpack.c.b16 %v3441, %v3437
    %v3494 = vpack.c.b16 %v3442, %v3438
    %v3495 = vpack.c.b16 %v3443, %v3439
    %v3496 = vpack.c.b16 %v3444, %v3440
    %v3497 = vpack.c.b16 %v3449, %v3445
    %v3498 = vpack.c.b16 %v3450, %v3446
    %v3499 = vpack.c.b16 %v3451, %v3447
    %v3500 = vpack.c.b16 %v3452, %v3448
    %v3501 = vpack.c.b16 %v3457, %v3453
    %v3502 = vpack.c.b16 %v3458, %v3454
    %v3503 = vpack.c.b16 %v3459, %v3455
    %v3504 = vpack.c.b16 %v3460, %v3456
    %v3505 = vpack.c.b16 %v3465, %v3461
    %v3506 = vpack.c.b16 %v3466, %v3462
    %v3507 = vpack.c.b16 %v3467, %v3463
    %v3508 = vpack.c.b16 %v3468, %v3464
    %v3509 = vpack.c.b16 %v3473, %v3469
    %v3510 = vpack.c.b16 %v3474, %v3470
    %v3511 = vpack.c.b16 %v3475, %v3471
    %v3512 = vpack.c.b16 %v3476, %v3472
    %v3513 = vpack.c.b16 %v3481, %v3477
    %v3514 = vpack.c.b16 %v3482, %v3478
    %v3515 = vpack.c.b16 %v3483, %v3479
    %v3516 = vpack.c.b16 %v3484, %v3480
    %3549 = vmatpush.bf16.msra.mxu0 %v3513
    %3550 = vmatpush.bf16.msra.mxu0 %v3509
    %3551 = vmatpush.bf16.msra.mxu0 %v3505
    %3552 = vmatpush.bf16.msra.mxu0 %v3501
    %3553 = vmatpush.bf16.msra.mxu0 %v3497
    %3554 = vmatpush.bf16.msra.mxu0 %v3493
    %3555 = vmatpush.bf16.msra.mxu0 %v3489
    %3556 = vmatpush.bf16.msra.mxu0 %v3485
    %3557 = vmatmul.bf16.gmra.mxu0 %v3345
    %v3558 = vpop.f32.mrf.mxu0
    %v3559 = vadd.f32 %v3381, %v3558
    %v3560 = vpop.f32.mrf.mxu0
    %3561 = vdwg.mxu0
    %3562 = vmatpush.bf16.msra.mxu0 %v3514
    %3563 = vmatpush.bf16.msra.mxu0 %v3510
    %3564 = vmatpush.bf16.msra.mxu0 %v3506
    %3565 = vmatpush.bf16.msra.mxu0 %v3502
    %3566 = vmatpush.bf16.msra.mxu0 %v3498
    %3567 = vmatpush.bf16.msra.mxu0 %v3494
    %3568 = vmatpush.bf16.msra.mxu0 %v3490
    %3569 = vmatpush.bf16.msra.mxu0 %v3486
    %3570 = vmatmul.bf16.gmra.mxu0 %v3345
    %v3571 = vpop.f32.mrf.mxu0
    %v3572 = vadd.f32 %v3382, %v3571
    %v3573 = vpop.f32.mrf.mxu0
    %3574 = vdwg.mxu0
    %3575 = vmatpush.bf16.msra.mxu0 %v3515
    %3576 = vmatpush.bf16.msra.mxu0 %v3511
    %3577 = vmatpush.bf16.msra.mxu0 %v3507
    %3578 = vmatpush.bf16.msra.mxu0 %v3503
    %3579 = vmatpush.bf16.msra.mxu0 %v3499
    %3580 = vmatpush.bf16.msra.mxu0 %v3495
    %3581 = vmatpush.bf16.msra.mxu0 %v3491
    %3582 = vmatpush.bf16.msra.mxu0 %v3487
    %3583 = vmatmul.bf16.gmra.mxu0 %v3345
    %v3584 = vpop.f32.mrf.mxu0
    %v3585 = vadd.f32 %v3383, %v3584
    %v3586 = vpop.f32.mrf.mxu0
    %3587 = vdwg.mxu0
    %3588 = vmatpush.bf16.msra.mxu0 %v3516
    %3589 = vmatpush.bf16.msra.mxu0 %v3512
    %3590 = vmatpush.bf16.msra.mxu0 %v3508
    %3591 = vmatpush.bf16.msra.mxu0 %v3504
    %3592 = vmatpush.bf16.msra.mxu0 %v3500
    %3593 = vmatpush.bf16.msra.mxu0 %v3496
    %3594 = vmatpush.bf16.msra.mxu0 %v3492
    %3595 = vmatpush.bf16.msra.mxu0 %v3488
    %3596 = vmatmul.bf16.gmra.mxu0 %v3345
    %v3597 = vpop.f32.mrf.mxu0
    %v3598 = vadd.f32 %v3384, %v3597
    %v3599 = vpop.f32.mrf.mxu0
    %3600 = vdwg.mxu0
    %v3601 = vtanh.pop %v3559
    %v3602 = vtanh.pop %v3572
    %v3603 = vtanh.pop %v3585
    %v3604 = vtanh.pop %v3598
    %v3605 = vpack.c.bf16 %v3601, %v3601
    %v3606 = vpack.c.bf16 %v3602, %v3602
    %v3607 = vpack.c.bf16 %v3603, %v3603
    %v3608 = vpack.c.bf16 %v3604, %v3604
    %v3609 = vld [vmem:[%s9] sm:$0xff]
    %v3610 = vld [vmem:[%s9 + $0x8] sm:$0xff]
    %v3611 = vld [vmem:[%s9 + $0x10] sm:$0xff]
    %v3612 = vld [vmem:[%s9 + $0x18] sm:$0xff]
    %v3613 = vld [vmem:[%s9 + $0x20] sm:$0xff]
    %v3614 = vld [vmem:[%s9 + $0x28] sm:$0xff]
    %v3615 = vld [vmem:[%s9 + $0x30] sm:$0xff]
    %v3616 = vld [vmem:[%s9 + $0x38] sm:$0xff]
    %v3617 = vld [vmem:[%s9 + $0x40] sm:$0xff]
    %v3618 = vld [vmem:[%s9 + $0x48] sm:$0xff]
    %v3619 = vld [vmem:[%s9 + $0x50] sm:$0xff]
    %v3620 = vld [vmem:[%s9 + $0x58] sm:$0xff]
    %v3621 = vld [vmem:[%s9 + $0x60] sm:$0xff]
    %v3622 = vld [vmem:[%s9 + $0x68] sm:$0xff]
    %v3623 = vld [vmem:[%s9 + $0x70] sm:$0xff]
    %v3624 = vld [vmem:[%s9 + $0x78] sm:$0xff]
    %v3625 = vld [vmem:[%s9 + $0x80] sm:$0xff]
    %v3626 = vld [vmem:[%s9 + $0x88] sm:$0xff]
    %v3627 = vld [vmem:[%s9 + $0x90] sm:$0xff]
    %v3628 = vld [vmem:[%s9 + $0x98] sm:$0xff]
    %v3629 = vld [vmem:[%s9 + $0xa0] sm:$0xff]
    %v3630 = vld [vmem:[%s9 + $0xa8] sm:$0xff]
    %v3631 = vld [vmem:[%s9 + $0xb0] sm:$0xff]
    %v3632 = vld [vmem:[%s9 + $0xb8] sm:$0xff]
    %v3633 = vld [vmem:[%s9 + $0xc0] sm:$0xff]
    %v3634 = vld [vmem:[%s9 + $0xc8] sm:$0xff]
    %v3635 = vld [vmem:[%s9 + $0xd0] sm:$0xff]
    %v3636 = vld [vmem:[%s9 + $0xd8] sm:$0xff]
    %v3637 = vld [vmem:[%s9 + $0xe0] sm:$0xff]
    %v3638 = vld [vmem:[%s9 + $0xe8] sm:$0xff]
    %v3639 = vld [vmem:[%s9 + $0xf0] sm:$0xff]
    %v3640 = vld [vmem:[%s9 + $0xf8] sm:$0xff]
    %v3641 = vld [vmem:[%s9 + $0x100] sm:$0xff]
    %v3642 = vld [vmem:[%s9 + $0x108] sm:$0xff]
    %v3643 = vld [vmem:[%s9 + $0x110] sm:$0xff]
    %v3644 = vld [vmem:[%s9 + $0x118] sm:$0xff]
    %v3645 = vld [vmem:[%s9 + $0x120] sm:$0xff]
    %v3646 = vld [vmem:[%s9 + $0x128] sm:$0xff]
    %v3647 = vld [vmem:[%s9 + $0x130] sm:$0xff]
    %v3648 = vld [vmem:[%s9 + $0x138] sm:$0xff]
    %v3649 = vld [vmem:[%s9 + $0x140] sm:$0xff]
    %v3650 = vld [vmem:[%s9 + $0x148] sm:$0xff]
    %v3651 = vld [vmem:[%s9 + $0x150] sm:$0xff]
    %v3652 = vld [vmem:[%s9 + $0x158] sm:$0xff]
    %v3653 = vld [vmem:[%s9 + $0x160] sm:$0xff]
    %v3654 = vld [vmem:[%s9 + $0x168] sm:$0xff]
    %v3655 = vld [vmem:[%s9 + $0x170] sm:$0xff]
    %v3656 = vld [vmem:[%s9 + $0x178] sm:$0xff]
    %v3657 = vld [vmem:[%s9 + $0x180] sm:$0xff]
    %v3658 = vld [vmem:[%s9 + $0x188] sm:$0xff]
    %v3659 = vld [vmem:[%s9 + $0x190] sm:$0xff]
    %v3660 = vld [vmem:[%s9 + $0x198] sm:$0xff]
    %v3661 = vld [vmem:[%s9 + $0x1a0] sm:$0xff]
    %v3662 = vld [vmem:[%s9 + $0x1a8] sm:$0xff]
    %v3663 = vld [vmem:[%s9 + $0x1b0] sm:$0xff]
    %v3664 = vld [vmem:[%s9 + $0x1b8] sm:$0xff]
    %v3665 = vld [vmem:[%s9 + $0x1c0] sm:$0xff]
    %v3666 = vld [vmem:[%s9 + $0x1c8] sm:$0xff]
    %v3667 = vld [vmem:[%s9 + $0x1d0] sm:$0xff]
    %v3668 = vld [vmem:[%s9 + $0x1d8] sm:$0xff]
    %v3669 = vld [vmem:[%s9 + $0x1e0] sm:$0xff]
    %v3670 = vld [vmem:[%s9 + $0x1e8] sm:$0xff]
    %v3671 = vld [vmem:[%s9 + $0x1f0] sm:$0xff]
    %v3672 = vld [vmem:[%s9 + $0x1f8] sm:$0xff]
    %v3673 = vld [vmem:[%s9 + $0x200] sm:$0xff]
    %v3674 = vld [vmem:[%s9 + $0x208] sm:$0xff]
    %v3675 = vld [vmem:[%s9 + $0x210] sm:$0xff]
    %v3676 = vld [vmem:[%s9 + $0x218] sm:$0xff]
    %v3677 = vld [vmem:[%s9 + $0x220] sm:$0xff]
    %v3678 = vld [vmem:[%s9 + $0x228] sm:$0xff]
    %v3679 = vld [vmem:[%s9 + $0x230] sm:$0xff]
    %v3680 = vld [vmem:[%s9 + $0x238] sm:$0xff]
    %v3681 = vld [vmem:[%s9 + $0x240] sm:$0xff]
    %v3682 = vld [vmem:[%s9 + $0x248] sm:$0xff]
    %v3683 = vld [vmem:[%s9 + $0x250] sm:$0xff]
    %v3684 = vld [vmem:[%s9 + $0x258] sm:$0xff]
    %v3685 = vld [vmem:[%s9 + $0x260] sm:$0xff]
    %v3686 = vld [vmem:[%s9 + $0x268] sm:$0xff]
    %v3687 = vld [vmem:[%s9 + $0x270] sm:$0xff]
    %v3688 = vld [vmem:[%s9 + $0x278] sm:$0xff]
    %v3689 = vld [vmem:[%s9 + $0x280] sm:$0xff]
    %v3690 = vld [vmem:[%s9 + $0x288] sm:$0xff]
    %v3691 = vld [vmem:[%s9 + $0x290] sm:$0xff]
    %v3692 = vld [vmem:[%s9 + $0x298] sm:$0xff]
    %v3693 = vld [vmem:[%s9 + $0x2a0] sm:$0xff]
    %v3694 = vld [vmem:[%s9 + $0x2a8] sm:$0xff]
    %v3695 = vld [vmem:[%s9 + $0x2b0] sm:$0xff]
    %v3696 = vld [vmem:[%s9 + $0x2b8] sm:$0xff]
    %v3697 = vld [vmem:[%s9 + $0x2c0] sm:$0xff]
    %v3698 = vld [vmem:[%s9 + $0x2c8] sm:$0xff]
    %v3699 = vld [vmem:[%s9 + $0x2d0] sm:$0xff]
    %v3700 = vld [vmem:[%s9 + $0x2d8] sm:$0xff]
    %v3701 = vld [vmem:[%s9 + $0x2e0] sm:$0xff]
    %v3702 = vld [vmem:[%s9 + $0x2e8] sm:$0xff]
    %v3703 = vld [vmem:[%s9 + $0x2f0] sm:$0xff]
    %v3704 = vld [vmem:[%s9 + $0x2f8] sm:$0xff]
    %v3705 = vld [vmem:[%s9 + $0x300] sm:$0xff]
    %v3706 = vld [vmem:[%s9 + $0x308] sm:$0xff]
    %v3707 = vld [vmem:[%s9 + $0x310] sm:$0xff]
    %v3708 = vld [vmem:[%s9 + $0x318] sm:$0xff]
    %v3709 = vld [vmem:[%s9 + $0x320] sm:$0xff]
    %v3710 = vld [vmem:[%s9 + $0x328] sm:$0xff]
    %v3711 = vld [vmem:[%s9 + $0x330] sm:$0xff]
    %v3712 = vld [vmem:[%s9 + $0x338] sm:$0xff]
    %v3713 = vld [vmem:[%s9 + $0x340] sm:$0xff]
    %v3714 = vld [vmem:[%s9 + $0x348] sm:$0xff]
    %v3715 = vld [vmem:[%s9 + $0x350] sm:$0xff]
    %v3716 = vld [vmem:[%s9 + $0x358] sm:$0xff]
    %v3717 = vld [vmem:[%s9 + $0x360] sm:$0xff]
    %v3718 = vld [vmem:[%s9 + $0x368] sm:$0xff]
    %v3719 = vld [vmem:[%s9 + $0x370] sm:$0xff]
    %v3720 = vld [vmem:[%s9 + $0x378] sm:$0xff]
    %v3721 = vld [vmem:[%s9 + $0x380] sm:$0xff]
    %v3722 = vld [vmem:[%s9 + $0x388] sm:$0xff]
    %v3723 = vld [vmem:[%s9 + $0x390] sm:$0xff]
    %v3724 = vld [vmem:[%s9 + $0x398] sm:$0xff]
    %v3725 = vld [vmem:[%s9 + $0x3a0] sm:$0xff]
    %v3726 = vld [vmem:[%s9 + $0x3a8] sm:$0xff]
    %v3727 = vld [vmem:[%s9 + $0x3b0] sm:$0xff]
    %v3728 = vld [vmem:[%s9 + $0x3b8] sm:$0xff]
    %v3729 = vld [vmem:[%s9 + $0x3c0] sm:$0xff]
    %v3730 = vld [vmem:[%s9 + $0x3c8] sm:$0xff]
    %v3731 = vld [vmem:[%s9 + $0x3d0] sm:$0xff]
    %v3732 = vld [vmem:[%s9 + $0x3d8] sm:$0xff]
    %v3733 = vld [vmem:[%s9 + $0x3e0] sm:$0xff]
    %v3734 = vld [vmem:[%s9 + $0x3e8] sm:$0xff]
    %v3735 = vld [vmem:[%s9 + $0x3f0] sm:$0xff]
    %v3736 = vld [vmem:[%s9 + $0x3f8] sm:$0xff]
    %v3737 = vld [vmem:[%s9 + $0x400] sm:$0xff]
    %v3738 = vld [vmem:[%s9 + $0x408] sm:$0xff]
    %v3739 = vld [vmem:[%s9 + $0x410] sm:$0xff]
    %v3740 = vld [vmem:[%s9 + $0x418] sm:$0xff]
    %v3741 = vld [vmem:[%s9 + $0x420] sm:$0xff]
    %v3742 = vld [vmem:[%s9 + $0x428] sm:$0xff]
    %v3743 = vld [vmem:[%s9 + $0x430] sm:$0xff]
    %v3744 = vld [vmem:[%s9 + $0x438] sm:$0xff]
    %v3745 = vld [vmem:[%s9 + $0x440] sm:$0xff]
    %v3746 = vld [vmem:[%s9 + $0x448] sm:$0xff]
    %v3747 = vld [vmem:[%s9 + $0x450] sm:$0xff]
    %v3748 = vld [vmem:[%s9 + $0x458] sm:$0xff]
    %v3749 = vld [vmem:[%s9 + $0x460] sm:$0xff]
    %v3750 = vld [vmem:[%s9 + $0x468] sm:$0xff]
    %v3751 = vld [vmem:[%s9 + $0x470] sm:$0xff]
    %v3752 = vld [vmem:[%s9 + $0x478] sm:$0xff]
    %v3753 = vld [vmem:[%s9 + $0x480] sm:$0xff]
    %v3754 = vld [vmem:[%s9 + $0x488] sm:$0xff]
    %v3755 = vld [vmem:[%s9 + $0x490] sm:$0xff]
    %v3756 = vld [vmem:[%s9 + $0x498] sm:$0xff]
    %v3757 = vld [vmem:[%s9 + $0x4a0] sm:$0xff]
    %v3758 = vld [vmem:[%s9 + $0x4a8] sm:$0xff]
    %v3759 = vld [vmem:[%s9 + $0x4b0] sm:$0xff]
    %v3760 = vld [vmem:[%s9 + $0x4b8] sm:$0xff]
    %v3761 = vld [vmem:[%s9 + $0x4c0] sm:$0xff]
    %v3762 = vld [vmem:[%s9 + $0x4c8] sm:$0xff]
    %v3763 = vld [vmem:[%s9 + $0x4d0] sm:$0xff]
    %v3764 = vld [vmem:[%s9 + $0x4d8] sm:$0xff]
    %v3765 = vld [vmem:[%s9 + $0x4e0] sm:$0xff]
    %v3766 = vld [vmem:[%s9 + $0x4e8] sm:$0xff]
    %v3767 = vld [vmem:[%s9 + $0x4f0] sm:$0xff]
    %v3768 = vld [vmem:[%s9 + $0x4f8] sm:$0xff]
    %v3769 = vld [vmem:[%s9 + $0x500] sm:$0xff]
    %v3770 = vld [vmem:[%s9 + $0x508] sm:$0xff]
    %v3771 = vld [vmem:[%s9 + $0x510] sm:$0xff]
    %v3772 = vld [vmem:[%s9 + $0x518] sm:$0xff]
    %v3773 = vld [vmem:[%s9 + $0x520] sm:$0xff]
    %v3774 = vld [vmem:[%s9 + $0x528] sm:$0xff]
    %v3775 = vld [vmem:[%s9 + $0x530] sm:$0xff]
    %v3776 = vld [vmem:[%s9 + $0x538] sm:$0xff]
    %v3777 = vld [vmem:[%s9 + $0x540] sm:$0xff]
    %v3778 = vld [vmem:[%s9 + $0x548] sm:$0xff]
    %v3779 = vld [vmem:[%s9 + $0x550] sm:$0xff]
    %v3780 = vld [vmem:[%s9 + $0x558] sm:$0xff]
    %v3781 = vld [vmem:[%s9 + $0x560] sm:$0xff]
    %v3782 = vld [vmem:[%s9 + $0x568] sm:$0xff]
    %v3783 = vld [vmem:[%s9 + $0x570] sm:$0xff]
    %v3784 = vld [vmem:[%s9 + $0x578] sm:$0xff]
    %v3785 = vld [vmem:[%s9 + $0x580] sm:$0xff]
    %v3786 = vld [vmem:[%s9 + $0x588] sm:$0xff]
    %v3787 = vld [vmem:[%s9 + $0x590] sm:$0xff]
    %v3788 = vld [vmem:[%s9 + $0x598] sm:$0xff]
    %v3789 = vld [vmem:[%s9 + $0x5a0] sm:$0xff]
    %v3790 = vld [vmem:[%s9 + $0x5a8] sm:$0xff]
    %v3791 = vld [vmem:[%s9 + $0x5b0] sm:$0xff]
    %v3792 = vld [vmem:[%s9 + $0x5b8] sm:$0xff]
    %v3793 = vld [vmem:[%s9 + $0x5c0] sm:$0xff]
    %v3794 = vld [vmem:[%s9 + $0x5c8] sm:$0xff]
    %v3795 = vld [vmem:[%s9 + $0x5d0] sm:$0xff]
    %v3796 = vld [vmem:[%s9 + $0x5d8] sm:$0xff]
    %v3797 = vld [vmem:[%s9 + $0x5e0] sm:$0xff]
    %v3798 = vld [vmem:[%s9 + $0x5e8] sm:$0xff]
    %v3799 = vld [vmem:[%s9 + $0x5f0] sm:$0xff]
    %v3800 = vld [vmem:[%s9 + $0x5f8] sm:$0xff]
    %v3801 = vld [vmem:[%s9 + $0x600] sm:$0xff]
    %v3802 = vld [vmem:[%s9 + $0x608] sm:$0xff]
    %v3803 = vld [vmem:[%s9 + $0x610] sm:$0xff]
    %v3804 = vld [vmem:[%s9 + $0x618] sm:$0xff]
    %v3805 = vld [vmem:[%s9 + $0x620] sm:$0xff]
    %v3806 = vld [vmem:[%s9 + $0x628] sm:$0xff]
    %v3807 = vld [vmem:[%s9 + $0x630] sm:$0xff]
    %v3808 = vld [vmem:[%s9 + $0x638] sm:$0xff]
    %v3809 = vld [vmem:[%s9 + $0x640] sm:$0xff]
    %v3810 = vld [vmem:[%s9 + $0x648] sm:$0xff]
    %v3811 = vld [vmem:[%s9 + $0x650] sm:$0xff]
    %v3812 = vld [vmem:[%s9 + $0x658] sm:$0xff]
    %v3813 = vld [vmem:[%s9 + $0x660] sm:$0xff]
    %v3814 = vld [vmem:[%s9 + $0x668] sm:$0xff]
    %v3815 = vld [vmem:[%s9 + $0x670] sm:$0xff]
    %v3816 = vld [vmem:[%s9 + $0x678] sm:$0xff]
    %v3817 = vld [vmem:[%s9 + $0x680] sm:$0xff]
    %v3818 = vld [vmem:[%s9 + $0x688] sm:$0xff]
    %v3819 = vld [vmem:[%s9 + $0x690] sm:$0xff]
    %v3820 = vld [vmem:[%s9 + $0x698] sm:$0xff]
    %v3821 = vld [vmem:[%s9 + $0x6a0] sm:$0xff]
    %v3822 = vld [vmem:[%s9 + $0x6a8] sm:$0xff]
    %v3823 = vld [vmem:[%s9 + $0x6b0] sm:$0xff]
    %v3824 = vld [vmem:[%s9 + $0x6b8] sm:$0xff]
    %v3825 = vld [vmem:[%s9 + $0x6c0] sm:$0xff]
    %v3826 = vld [vmem:[%s9 + $0x6c8] sm:$0xff]
    %v3827 = vld [vmem:[%s9 + $0x6d0] sm:$0xff]
    %v3828 = vld [vmem:[%s9 + $0x6d8] sm:$0xff]
    %v3829 = vld [vmem:[%s9 + $0x6e0] sm:$0xff]
    %v3830 = vld [vmem:[%s9 + $0x6e8] sm:$0xff]
    %v3831 = vld [vmem:[%s9 + $0x6f0] sm:$0xff]
    %v3832 = vld [vmem:[%s9 + $0x6f8] sm:$0xff]
    %v3833 = vld [vmem:[%s9 + $0x700] sm:$0xff]
    %v3834 = vld [vmem:[%s9 + $0x708] sm:$0xff]
    %v3835 = vld [vmem:[%s9 + $0x710] sm:$0xff]
    %v3836 = vld [vmem:[%s9 + $0x718] sm:$0xff]
    %v3837 = vld [vmem:[%s9 + $0x720] sm:$0xff]
    %v3838 = vld [vmem:[%s9 + $0x728] sm:$0xff]
    %v3839 = vld [vmem:[%s9 + $0x730] sm:$0xff]
    %v3840 = vld [vmem:[%s9 + $0x738] sm:$0xff]
    %v3841 = vld [vmem:[%s9 + $0x740] sm:$0xff]
    %v3842 = vld [vmem:[%s9 + $0x748] sm:$0xff]
    %v3843 = vld [vmem:[%s9 + $0x750] sm:$0xff]
    %v3844 = vld [vmem:[%s9 + $0x758] sm:$0xff]
    %v3845 = vld [vmem:[%s9 + $0x760] sm:$0xff]
    %v3846 = vld [vmem:[%s9 + $0x768] sm:$0xff]
    %v3847 = vld [vmem:[%s9 + $0x770] sm:$0xff]
    %v3848 = vld [vmem:[%s9 + $0x778] sm:$0xff]
    %v3849 = vld [vmem:[%s9 + $0x780] sm:$0xff]
    %v3850 = vld [vmem:[%s9 + $0x788] sm:$0xff]
    %v3851 = vld [vmem:[%s9 + $0x790] sm:$0xff]
    %v3852 = vld [vmem:[%s9 + $0x798] sm:$0xff]
    %v3853 = vld [vmem:[%s9 + $0x7a0] sm:$0xff]
    %v3854 = vld [vmem:[%s9 + $0x7a8] sm:$0xff]
    %v3855 = vld [vmem:[%s9 + $0x7b0] sm:$0xff]
    %v3856 = vld [vmem:[%s9 + $0x7b8] sm:$0xff]
    %v3857 = vld [vmem:[%s9 + $0x7c0] sm:$0xff]
    %v3858 = vld [vmem:[%s9 + $0x7c8] sm:$0xff]
    %v3859 = vld [vmem:[%s9 + $0x7d0] sm:$0xff]
    %v3860 = vld [vmem:[%s9 + $0x7d8] sm:$0xff]
    %v3861 = vld [vmem:[%s9 + $0x7e0] sm:$0xff]
    %v3862 = vld [vmem:[%s9 + $0x7e8] sm:$0xff]
    %v3863 = vld [vmem:[%s9 + $0x7f0] sm:$0xff]
    %v3864 = vld [vmem:[%s9 + $0x7f8] sm:$0xff]
    %v3865 = vld [vmem:[%s10] sm:$0xff]
    %v3867 = vperm.slane %v3865, 0
    %v3868 = vperm.slane %v3865, 1
    %v3869 = vperm.slane %v3865, 2
    %v3870 = vperm.slane %v3865, 3
    %v3871 = vperm.slane %v3865, 4
    %v3872 = vperm.slane %v3865, 5
    %v3873 = vperm.slane %v3865, 6
    %v3874 = vperm.slane %v3865, 7
    %v4139 = vunpack.c.l.b16 %v3609
    %v4140 = vunpack.c.h.b16 %v3609
    %v4141 = vunpack.c.l.b16 %v3610
    %v4142 = vunpack.c.h.b16 %v3610
    %v4143 = vunpack.c.l.b16 %v3611
    %v4144 = vunpack.c.h.b16 %v3611
    %v4145 = vunpack.c.l.b16 %v3612
    %v4146 = vunpack.c.h.b16 %v3612
    %v4147 = vunpack.c.l.b16 %v3613
    %v4148 = vunpack.c.h.b16 %v3613
    %v4149 = vunpack.c.l.b16 %v3614
    %v4150 = vunpack.c.h.b16 %v3614
    %v4151 = vunpack.c.l.b16 %v3615
    %v4152 = vunpack.c.h.b16 %v3615
    %v4153 = vunpack.c.l.b16 %v3616
    %v4154 = vunpack.c.h.b16 %v3616
    %v4155 = vunpack.c.l.b16 %v3617
    %v4156 = vunpack.c.h.b16 %v3617
    %v4157 = vunpack.c.l.b16 %v3618
    %v4158 = vunpack.c.h.b16 %v3618
    %v4159 = vunpack.c.l.b16 %v3619
    %v4160 = vunpack.c.h.b16 %v3619
    %v4161 = vunpack.c.l.b16 %v3620
    %v4162 = vunpack.c.h.b16 %v3620
    %v4163 = vunpack.c.l.b16 %v3621
    %v4164 = vunpack.c.h.b16 %v3621
    %v4165 = vunpack.c.l.b16 %v3622
    %v4166 = vunpack.c.h.b16 %v3622
    %v4167 = vunpack.c.l.b16 %v3623
    %v4168 = vunpack.c.h.b16 %v3623
    %v4169 = vunpack.c.l.b16 %v3624
    %v4170 = vunpack.c.h.b16 %v3624
    %v4171 = vunpack.c.l.b16 %v3625
    %v4172 = vunpack.c.h.b16 %v3625
    %v4173 = vunpack.c.l.b16 %v3626
    %v4174 = vunpack.c.h.b16 %v3626
    %v4175 = vunpack.c.l.b16 %v3627
    %v4176 = vunpack.c.h.b16 %v3627
    %v4177 = vunpack.c.l.b16 %v3628
    %v4178 = vunpack.c.h.b16 %v3628
    %v4179 = vunpack.c.l.b16 %v3629
    %v4180 = vunpack.c.h.b16 %v3629
    %v4181 = vunpack.c.l.b16 %v3630
    %v4182 = vunpack.c.h.b16 %v3630
    %v4183 = vunpack.c.l.b16 %v3631
    %v4184 = vunpack.c.h.b16 %v3631
    %v4185 = vunpack.c.l.b16 %v3632
    %v4186 = vunpack.c.h.b16 %v3632
    %v4187 = vunpack.c.l.b16 %v3633
    %v4188 = vunpack.c.h.b16 %v3633
    %v4189 = vunpack.c.l.b16 %v3634
    %v4190 = vunpack.c.h.b16 %v3634
    %v4191 = vunpack.c.l.b16 %v3635
    %v4192 = vunpack.c.h.b16 %v3635
    %v4193 = vunpack.c.l.b16 %v3636
    %v4194 = vunpack.c.h.b16 %v3636
    %v4195 = vunpack.c.l.b16 %v3637
    %v4196 = vunpack.c.h.b16 %v3637
    %v4197 = vunpack.c.l.b16 %v3638
    %v4198 = vunpack.c.h.b16 %v3638
    %v4199 = vunpack.c.l.b16 %v3639
    %v4200 = vunpack.c.h.b16 %v3639
    %v4201 = vunpack.c.l.b16 %v3640
    %v4202 = vunpack.c.h.b16 %v3640
    %v4203 = vunpack.c.l.b16 %v3641
    %v4204 = vunpack.c.h.b16 %v3641
    %v4205 = vunpack.c.l.b16 %v3642
    %v4206 = vunpack.c.h.b16 %v3642
    %v4207 = vunpack.c.l.b16 %v3643
    %v4208 = vunpack.c.h.b16 %v3643
    %v4209 = vunpack.c.l.b16 %v3644
    %v4210 = vunpack.c.h.b16 %v3644
    %v4211 = vunpack.c.l.b16 %v3645
    %v4212 = vunpack.c.h.b16 %v3645
    %v4213 = vunpack.c.l.b16 %v3646
    %v4214 = vunpack.c.h.b16 %v3646
    %v4215 = vunpack.c.l.b16 %v3647
    %v4216 = vunpack.c.h.b16 %v3647
    %v4217 = vunpack.c.l.b16 %v3648
    %v4218 = vunpack.c.h.b16 %v3648
    %v4219 = vunpack.c.l.b16 %v3649
    %v4220 = vunpack.c.h.b16 %v3649
    %v4221 = vunpack.c.l.b16 %v3650
    %v4222 = vunpack.c.h.b16 %v3650
    %v4223 = vunpack.c.l.b16 %v3651
    %v4224 = vunpack.c.h.b16 %v3651
    %v4225 = vunpack.c.l.b16 %v3652
    %v4226 = vunpack.c.h.b16 %v3652
    %v4227 = vunpack.c.l.b16 %v3653
    %v4228 = vunpack.c.h.b16 %v3653
    %v4229 = vunpack.c.l.b16 %v3654
    %v4230 = vunpack.c.h.b16 %v3654
    %v4231 = vunpack.c.l.b16 %v3655
    %v4232 = vunpack.c.h.b16 %v3655
    %v4233 = vunpack.c.l.b16 %v3656
    %v4234 = vunpack.c.h.b16 %v3656
    %v4235 = vunpack.c.l.b16 %v3657
    %v4236 = vunpack.c.h.b16 %v3657
    %v4237 = vunpack.c.l.b16 %v3658
    %v4238 = vunpack.c.h.b16 %v3658
    %v4239 = vunpack.c.l.b16 %v3659
    %v4240 = vunpack.c.h.b16 %v3659
    %v4241 = vunpack.c.l.b16 %v3660
    %v4242 = vunpack.c.h.b16 %v3660
    %v4243 = vunpack.c.l.b16 %v3661
    %v4244 = vunpack.c.h.b16 %v3661
    %v4245 = vunpack.c.l.b16 %v3662
    %v4246 = vunpack.c.h.b16 %v3662
    %v4247 = vunpack.c.l.b16 %v3663
    %v4248 = vunpack.c.h.b16 %v3663
    %v4249 = vunpack.c.l.b16 %v3664
    %v4250 = vunpack.c.h.b16 %v3664
    %v4251 = vunpack.c.l.b16 %v3665
    %v4252 = vunpack.c.h.b16 %v3665
    %v4253 = vunpack.c.l.b16 %v3666
    %v4254 = vunpack.c.h.b16 %v3666
    %v4255 = vunpack.c.l.b16 %v3667
    %v4256 = vunpack.c.h.b16 %v3667
    %v4257 = vunpack.c.l.b16 %v3668
    %v4258 = vunpack.c.h.b16 %v3668
    %v4259 = vunpack.c.l.b16 %v3669
    %v4260 = vunpack.c.h.b16 %v3669
    %v4261 = vunpack.c.l.b16 %v3670
    %v4262 = vunpack.c.h.b16 %v3670
    %v4263 = vunpack.c.l.b16 %v3671
    %v4264 = vunpack.c.h.b16 %v3671
    %v4265 = vunpack.c.l.b16 %v3672
    %v4266 = vunpack.c.h.b16 %v3672
    %v4267 = vunpack.c.l.b16 %v3673
    %v4268 = vunpack.c.h.b16 %v3673
    %v4269 = vunpack.c.l.b16 %v3674
    %v4270 = vunpack.c.h.b16 %v3674
    %v4271 = vunpack.c.l.b16 %v3675
    %v4272 = vunpack.c.h.b16 %v3675
    %v4273 = vunpack.c.l.b16 %v3676
    %v4274 = vunpack.c.h.b16 %v3676
    %v4275 = vunpack.c.l.b16 %v3677
    %v4276 = vunpack.c.h.b16 %v3677
    %v4277 = vunpack.c.l.b16 %v3678
    %v4278 = vunpack.c.h.b16 %v3678
    %v4279 = vunpack.c.l.b16 %v3679
    %v4280 = vunpack.c.h.b16 %v3679
    %v4281 = vunpack.c.l.b16 %v3680
    %v4282 = vunpack.c.h.b16 %v3680
    %v4283 = vunpack.c.l.b16 %v3681
    %v4284 = vunpack.c.h.b16 %v3681
    %v4285 = vunpack.c.l.b16 %v3682
    %v4286 = vunpack.c.h.b16 %v3682
    %v4287 = vunpack.c.l.b16 %v3683
    %v4288 = vunpack.c.h.b16 %v3683
    %v4289 = vunpack.c.l.b16 %v3684
    %v4290 = vunpack.c.h.b16 %v3684
    %v4291 = vunpack.c.l.b16 %v3685
    %v4292 = vunpack.c.h.b16 %v3685
    %v4293 = vunpack.c.l.b16 %v3686
    %v4294 = vunpack.c.h.b16 %v3686
    %v4295 = vunpack.c.l.b16 %v3687
    %v4296 = vunpack.c.h.b16 %v3687
    %v4297 = vunpack.c.l.b16 %v3688
    %v4298 = vunpack.c.h.b16 %v3688
    %v4299 = vunpack.c.l.b16 %v3689
    %v4300 = vunpack.c.h.b16 %v3689
    %v4301 = vunpack.c.l.b16 %v3690
    %v4302 = vunpack.c.h.b16 %v3690
    %v4303 = vunpack.c.l.b16 %v3691
    %v4304 = vunpack.c.h.b16 %v3691
    %v4305 = vunpack.c.l.b16 %v3692
    %v4306 = vunpack.c.h.b16 %v3692
    %v4307 = vunpack.c.l.b16 %v3693
    %v4308 = vunpack.c.h.b16 %v3693
    %v4309 = vunpack.c.l.b16 %v3694
    %v4310 = vunpack.c.h.b16 %v3694
    %v4311 = vunpack.c.l.b16 %v3695
    %v4312 = vunpack.c.h.b16 %v3695
    %v4313 = vunpack.c.l.b16 %v3696
    %v4314 = vunpack.c.h.b16 %v3696
    %v4315 = vunpack.c.l.b16 %v3697
    %v4316 = vunpack.c.h.b16 %v3697
    %v4317 = vunpack.c.l.b16 %v3698
    %v4318 = vunpack.c.h.b16 %v3698
    %v4319 = vunpack.c.l.b16 %v3699
    %v4320 = vunpack.c.h.b16 %v3699
    %v4321 = vunpack.c.l.b16 %v3700
    %v4322 = vunpack.c.h.b16 %v3700
    %v4323 = vunpack.c.l.b16 %v3701
    %v4324 = vunpack.c.h.b16 %v3701
    %v4325 = vunpack.c.l.b16 %v3702
    %v4326 = vunpack.c.h.b16 %v3702
    %v4327 = vunpack.c.l.b16 %v3703
    %v4328 = vunpack.c.h.b16 %v3703
    %v4329 = vunpack.c.l.b16 %v3704
    %v4330 = vunpack.c.h.b16 %v3704
    %v4331 = vunpack.c.l.b16 %v3705
    %v4332 = vunpack.c.h.b16 %v3705
    %v4333 = vunpack.c.l.b16 %v3706
    %v4334 = vunpack.c.h.b16 %v3706
    %v4335 = vunpack.c.l.b16 %v3707
    %v4336 = vunpack.c.h.b16 %v3707
    %v4337 = vunpack.c.l.b16 %v3708
    %v4338 = vunpack.c.h.b16 %v3708
    %v4339 = vunpack.c.l.b16 %v3709
    %v4340 = vunpack.c.h.b16 %v3709
    %v4341 = vunpack.c.l.b16 %v3710
    %v4342 = vunpack.c.h.b16 %v3710
    %v4343 = vunpack.c.l.b16 %v3711
    %v4344 = vunpack.c.h.b16 %v3711
    %v4345 = vunpack.c.l.b16 %v3712
    %v4346 = vunpack.c.h.b16 %v3712
    %v4347 = vunpack.c.l.b16 %v3713
    %v4348 = vunpack.c.h.b16 %v3713
    %v4349 = vunpack.c.l.b16 %v3714
    %v4350 = vunpack.c.h.b16 %v3714
    %v4351 = vunpack.c.l.b16 %v3715
    %v4352 = vunpack.c.h.b16 %v3715
    %v4353 = vunpack.c.l.b16 %v3716
    %v4354 = vunpack.c.h.b16 %v3716
    %v4355 = vunpack.c.l.b16 %v3717
    %v4356 = vunpack.c.h.b16 %v3717
    %v4357 = vunpack.c.l.b16 %v3718
    %v4358 = vunpack.c.h.b16 %v3718
    %v4359 = vunpack.c.l.b16 %v3719
    %v4360 = vunpack.c.h.b16 %v3719
    %v4361 = vunpack.c.l.b16 %v3720
    %v4362 = vunpack.c.h.b16 %v3720
    %v4363 = vunpack.c.l.b16 %v3721
    %v4364 = vunpack.c.h.b16 %v3721
    %v4365 = vunpack.c.l.b16 %v3722
    %v4366 = vunpack.c.h.b16 %v3722
    %v4367 = vunpack.c.l.b16 %v3723
    %v4368 = vunpack.c.h.b16 %v3723
    %v4369 = vunpack.c.l.b16 %v3724
    %v4370 = vunpack.c.h.b16 %v3724
    %v4371 = vunpack.c.l.b16 %v3725
    %v4372 = vunpack.c.h.b16 %v3725
    %v4373 = vunpack.c.l.b16 %v3726
    %v4374 = vunpack.c.h.b16 %v3726
    %v4375 = vunpack.c.l.b16 %v3727
    %v4376 = vunpack.c.h.b16 %v3727
    %v4377 = vunpack.c.l.b16 %v3728
    %v4378 = vunpack.c.h.b16 %v3728
    %v4379 = vunpack.c.l.b16 %v3729
    %v4380 = vunpack.c.h.b16 %v3729
    %v4381 = vunpack.c.l.b16 %v3730
    %v4382 = vunpack.c.h.b16 %v3730
    %v4383 = vunpack.c.l.b16 %v3731
    %v4384 = vunpack.c.h.b16 %v3731
    %v4385 = vunpack.c.l.b16 %v3732
    %v4386 = vunpack.c.h.b16 %v3732
    %v4387 = vunpack.c.l.b16 %v3733
    %v4388 = vunpack.c.h.b16 %v3733
    %v4389 = vunpack.c.l.b16 %v3734
    %v4390 = vunpack.c.h.b16 %v3734
    %v4391 = vunpack.c.l.b16 %v3735
    %v4392 = vunpack.c.h.b16 %v3735
    %v4393 = vunpack.c.l.b16 %v3736
    %v4394 = vunpack.c.h.b16 %v3736
    %v4395 = vunpack.c.l.b16 %v3737
    %v4396 = vunpack.c.h.b16 %v3737
    %v4397 = vunpack.c.l.b16 %v3738
    %v4398 = vunpack.c.h.b16 %v3738
    %v4399 = vunpack.c.l.b16 %v3739
    %v4400 = vunpack.c.h.b16 %v3739
    %v4401 = vunpack.c.l.b16 %v3740
    %v4402 = vunpack.c.h.b16 %v3740
    %v4403 = vunpack.c.l.b16 %v3741
    %v4404 = vunpack.c.h.b16 %v3741
    %v4405 = vunpack.c.l.b16 %v3742
    %v4406 = vunpack.c.h.b16 %v3742
    %v4407 = vunpack.c.l.b16 %v3743
    %v4408 = vunpack.c.h.b16 %v3743
    %v4409 = vunpack.c.l.b16 %v3744
    %v4410 = vunpack.c.h.b16 %v3744
    %v4411 = vunpack.c.l.b16 %v3745
    %v4412 = vunpack.c.h.b16 %v3745
    %v4413 = vunpack.c.l.b16 %v3746
    %v4414 = vunpack.c.h.b16 %v3746
    %v4415 = vunpack.c.l.b16 %v3747
    %v4416 = vunpack.c.h.b16 %v3747
    %v4417 = vunpack.c.l.b16 %v3748
    %v4418 = vunpack.c.h.b16 %v3748
    %v4419 = vunpack.c.l.b16 %v3749
    %v4420 = vunpack.c.h.b16 %v3749
    %v4421 = vunpack.c.l.b16 %v3750
    %v4422 = vunpack.c.h.b16 %v3750
    %v4423 = vunpack.c.l.b16 %v3751
    %v4424 = vunpack.c.h.b16 %v3751
    %v4425 = vunpack.c.l.b16 %v3752
    %v4426 = vunpack.c.h.b16 %v3752
    %v4427 = vunpack.c.l.b16 %v3753
    %v4428 = vunpack.c.h.b16 %v3753
    %v4429 = vunpack.c.l.b16 %v3754
    %v4430 = vunpack.c.h.b16 %v3754
    %v4431 = vunpack.c.l.b16 %v3755
    %v4432 = vunpack.c.h.b16 %v3755
    %v4433 = vunpack.c.l.b16 %v3756
    %v4434 = vunpack.c.h.b16 %v3756
    %v4435 = vunpack.c.l.b16 %v3757
    %v4436 = vunpack.c.h.b16 %v3757
    %v4437 = vunpack.c.l.b16 %v3758
    %v4438 = vunpack.c.h.b16 %v3758
    %v4439 = vunpack.c.l.b16 %v3759
    %v4440 = vunpack.c.h.b16 %v3759
    %v4441 = vunpack.c.l.b16 %v3760
    %v4442 = vunpack.c.h.b16 %v3760
    %v4443 = vunpack.c.l.b16 %v3761
    %v4444 = vunpack.c.h.b16 %v3761
    %v4445 = vunpack.c.l.b16 %v3762
    %v4446 = vunpack.c.h.b16 %v3762
    %v4447 = vunpack.c.l.b16 %v3763
    %v4448 = vunpack.c.h.b16 %v3763
    %v4449 = vunpack.c.l.b16 %v3764
    %v4450 = vunpack.c.h.b16 %v3764
    %v4451 = vunpack.c.l.b16 %v3765
    %v4452 = vunpack.c.h.b16 %v3765
    %v4453 = vunpack.c.l.b16 %v3766
    %v4454 = vunpack.c.h.b16 %v3766
    %v4455 = vunpack.c.l.b16 %v3767
    %v4456 = vunpack.c.h.b16 %v3767
    %v4457 = vunpack.c.l.b16 %v3768
    %v4458 = vunpack.c.h.b16 %v3768
    %v4459 = vunpack.c.l.b16 %v3769
    %v4460 = vunpack.c.h.b16 %v3769
    %v4461 = vunpack.c.l.b16 %v3770
    %v4462 = vunpack.c.h.b16 %v3770
    %v4463 = vunpack.c.l.b16 %v3771
    %v4464 = vunpack.c.h.b16 %v3771
    %v4465 = vunpack.c.l.b16 %v3772
    %v4466 = vunpack.c.h.b16 %v3772
    %v4467 = vunpack.c.l.b16 %v3773
    %v4468 = vunpack.c.h.b16 %v3773
    %v4469 = vunpack.c.l.b16 %v3774
    %v4470 = vunpack.c.h.b16 %v3774
    %v4471 = vunpack.c.l.b16 %v3775
    %v4472 = vunpack.c.h.b16 %v3775
    %v4473 = vunpack.c.l.b16 %v3776
    %v4474 = vunpack.c.h.b16 %v3776
    %v4475 = vunpack.c.l.b16 %v3777
    %v4476 = vunpack.c.h.b16 %v3777
    %v4477 = vunpack.c.l.b16 %v3778
    %v4478 = vunpack.c.h.b16 %v3778
    %v4479 = vunpack.c.l.b16 %v3779
    %v4480 = vunpack.c.h.b16 %v3779
    %v4481 = vunpack.c.l.b16 %v3780
    %v4482 = vunpack.c.h.b16 %v3780
    %v4483 = vunpack.c.l.b16 %v3781
    %v4484 = vunpack.c.h.b16 %v3781
    %v4485 = vunpack.c.l.b16 %v3782
    %v4486 = vunpack.c.h.b16 %v3782
    %v4487 = vunpack.c.l.b16 %v3783
    %v4488 = vunpack.c.h.b16 %v3783
    %v4489 = vunpack.c.l.b16 %v3784
    %v4490 = vunpack.c.h.b16 %v3784
    %v4491 = vunpack.c.l.b16 %v3785
    %v4492 = vunpack.c.h.b16 %v3785
    %v4493 = vunpack.c.l.b16 %v3786
    %v4494 = vunpack.c.h.b16 %v3786
    %v4495 = vunpack.c.l.b16 %v3787
    %v4496 = vunpack.c.h.b16 %v3787
    %v4497 = vunpack.c.l.b16 %v3788
    %v4498 = vunpack.c.h.b16 %v3788
    %v4499 = vunpack.c.l.b16 %v3789
    %v4500 = vunpack.c.h.b16 %v3789
    %v4501 = vunpack.c.l.b16 %v3790
    %v4502 = vunpack.c.h.b16 %v3790
    %v4503 = vunpack.c.l.b16 %v3791
    %v4504 = vunpack.c.h.b16 %v3791
    %v4505 = vunpack.c.l.b16 %v3792
    %v4506 = vunpack.c.h.b16 %v3792
    %v4507 = vunpack.c.l.b16 %v3793
    %v4508 = vunpack.c.h.b16 %v3793
    %v4509 = vunpack.c.l.b16 %v3794
    %v4510 = vunpack.c.h.b16 %v3794
    %v4511 = vunpack.c.l.b16 %v3795
    %v4512 = vunpack.c.h.b16 %v3795
    %v4513 = vunpack.c.l.b16 %v3796
    %v4514 = vunpack.c.h.b16 %v3796
    %v4515 = vunpack.c.l.b16 %v3797
    %v4516 = vunpack.c.h.b16 %v3797
    %v4517 = vunpack.c.l.b16 %v3798
    %v4518 = vunpack.c.h.b16 %v3798
    %v4519 = vunpack.c.l.b16 %v3799
    %v4520 = vunpack.c.h.b16 %v3799
    %v4521 = vunpack.c.l.b16 %v3800
    %v4522 = vunpack.c.h.b16 %v3800
    %v4523 = vunpack.c.l.b16 %v3801
    %v4524 = vunpack.c.h.b16 %v3801
    %v4525 = vunpack.c.l.b16 %v3802
    %v4526 = vunpack.c.h.b16 %v3802
    %v4527 = vunpack.c.l.b16 %v3803
    %v4528 = vunpack.c.h.b16 %v3803
    %v4529 = vunpack.c.l.b16 %v3804
    %v4530 = vunpack.c.h.b16 %v3804
    %v4531 = vunpack.c.l.b16 %v3805
    %v4532 = vunpack.c.h.b16 %v3805
    %v4533 = vunpack.c.l.b16 %v3806
    %v4534 = vunpack.c.h.b16 %v3806
    %v4535 = vunpack.c.l.b16 %v3807
    %v4536 = vunpack.c.h.b16 %v3807
    %v4537 = vunpack.c.l.b16 %v3808
    %v4538 = vunpack.c.h.b16 %v3808
    %v4539 = vunpack.c.l.b16 %v3809
    %v4540 = vunpack.c.h.b16 %v3809
    %v4541 = vunpack.c.l.b16 %v3810
    %v4542 = vunpack.c.h.b16 %v3810
    %v4543 = vunpack.c.l.b16 %v3811
    %v4544 = vunpack.c.h.b16 %v3811
    %v4545 = vunpack.c.l.b16 %v3812
    %v4546 = vunpack.c.h.b16 %v3812
    %v4547 = vunpack.c.l.b16 %v3813
    %v4548 = vunpack.c.h.b16 %v3813
    %v4549 = vunpack.c.l.b16 %v3814
    %v4550 = vunpack.c.h.b16 %v3814
    %v4551 = vunpack.c.l.b16 %v3815
    %v4552 = vunpack.c.h.b16 %v3815
    %v4553 = vunpack.c.l.b16 %v3816
    %v4554 = vunpack.c.h.b16 %v3816
    %v4555 = vunpack.c.l.b16 %v3817
    %v4556 = vunpack.c.h.b16 %v3817
    %v4557 = vunpack.c.l.b16 %v3818
    %v4558 = vunpack.c.h.b16 %v3818
    %v4559 = vunpack.c.l.b16 %v3819
    %v4560 = vunpack.c.h.b16 %v3819
    %v4561 = vunpack.c.l.b16 %v3820
    %v4562 = vunpack.c.h.b16 %v3820
    %v4563 = vunpack.c.l.b16 %v3821
    %v4564 = vunpack.c.h.b16 %v3821
    %v4565 = vunpack.c.l.b16 %v3822
    %v4566 = vunpack.c.h.b16 %v3822
    %v4567 = vunpack.c.l.b16 %v3823
    %v4568 = vunpack.c.h.b16 %v3823
    %v4569 = vunpack.c.l.b16 %v3824
    %v4570 = vunpack.c.h.b16 %v3824
    %v4571 = vunpack.c.l.b16 %v3825
    %v4572 = vunpack.c.h.b16 %v3825
    %v4573 = vunpack.c.l.b16 %v3826
    %v4574 = vunpack.c.h.b16 %v3826
    %v4575 = vunpack.c.l.b16 %v3827
    %v4576 = vunpack.c.h.b16 %v3827
    %v4577 = vunpack.c.l.b16 %v3828
    %v4578 = vunpack.c.h.b16 %v3828
    %v4579 = vunpack.c.l.b16 %v3829
    %v4580 = vunpack.c.h.b16 %v3829
    %v4581 = vunpack.c.l.b16 %v3830
    %v4582 = vunpack.c.h.b16 %v3830
    %v4583 = vunpack.c.l.b16 %v3831
    %v4584 = vunpack.c.h.b16 %v3831
    %v4585 = vunpack.c.l.b16 %v3832
    %v4586 = vunpack.c.h.b16 %v3832
    %v4587 = vunpack.c.l.b16 %v3833
    %v4588 = vunpack.c.h.b16 %v3833
    %v4589 = vunpack.c.l.b16 %v3834
    %v4590 = vunpack.c.h.b16 %v3834
    %v4591 = vunpack.c.l.b16 %v3835
    %v4592 = vunpack.c.h.b16 %v3835
    %v4593 = vunpack.c.l.b16 %v3836
    %v4594 = vunpack.c.h.b16 %v3836
    %v4595 = vunpack.c.l.b16 %v3837
    %v4596 = vunpack.c.h.b16 %v3837
    %v4597 = vunpack.c.l.b16 %v3838
    %v4598 = vunpack.c.h.b16 %v3838
    %v4599 = vunpack.c.l.b16 %v3839
    %v4600 = vunpack.c.h.b16 %v3839
    %v4601 = vunpack.c.l.b16 %v3840
    %v4602 = vunpack.c.h.b16 %v3840
    %v4603 = vunpack.c.l.b16 %v3841
    %v4604 = vunpack.c.h.b16 %v3841
    %v4605 = vunpack.c.l.b16 %v3842
    %v4606 = vunpack.c.h.b16 %v3842
    %v4607 = vunpack.c.l.b16 %v3843
    %v4608 = vunpack.c.h.b16 %v3843
    %v4609 = vunpack.c.l.b16 %v3844
    %v4610 = vunpack.c.h.b16 %v3844
    %v4611 = vunpack.c.l.b16 %v3845
    %v4612 = vunpack.c.h.b16 %v3845
    %v4613 = vunpack.c.l.b16 %v3846
    %v4614 = vunpack.c.h.b16 %v3846
    %v4615 = vunpack.c.l.b16 %v3847
    %v4616 = vunpack.c.h.b16 %v3847
    %v4617 = vunpack.c.l.b16 %v3848
    %v4618 = vunpack.c.h.b16 %v3848
    %v4619 = vunpack.c.l.b16 %v3849
    %v4620 = vunpack.c.h.b16 %v3849
    %v4621 = vunpack.c.l.b16 %v3850
    %v4622 = vunpack.c.h.b16 %v3850
    %v4623 = vunpack.c.l.b16 %v3851
    %v4624 = vunpack.c.h.b16 %v3851
    %v4625 = vunpack.c.l.b16 %v3852
    %v4626 = vunpack.c.h.b16 %v3852
    %v4627 = vunpack.c.l.b16 %v3853
    %v4628 = vunpack.c.h.b16 %v3853
    %v4629 = vunpack.c.l.b16 %v3854
    %v4630 = vunpack.c.h.b16 %v3854
    %v4631 = vunpack.c.l.b16 %v3855
    %v4632 = vunpack.c.h.b16 %v3855
    %v4633 = vunpack.c.l.b16 %v3856
    %v4634 = vunpack.c.h.b16 %v3856
    %v4635 = vunpack.c.l.b16 %v3857
    %v4636 = vunpack.c.h.b16 %v3857
    %v4637 = vunpack.c.l.b16 %v3858
    %v4638 = vunpack.c.h.b16 %v3858
    %v4639 = vunpack.c.l.b16 %v3859
    %v4640 = vunpack.c.h.b16 %v3859
    %v4641 = vunpack.c.l.b16 %v3860
    %v4642 = vunpack.c.h.b16 %v3860
    %v4643 = vunpack.c.l.b16 %v3861
    %v4644 = vunpack.c.h.b16 %v3861
    %v4645 = vunpack.c.l.b16 %v3862
    %v4646 = vunpack.c.h.b16 %v3862
    %v4647 = vunpack.c.l.b16 %v3863
    %v4648 = vunpack.c.h.b16 %v3863
    %v4649 = vunpack.c.l.b16 %v3864
    %v4650 = vunpack.c.h.b16 %v3864
    %v4651 = vpack.c.b16 %v4147, %v4139
    %v4652 = vpack.c.b16 %v4148, %v4140
    %v4653 = vpack.c.b16 %v4149, %v4141
    %v4654 = vpack.c.b16 %v4150, %v4142
    %v4655 = vpack.c.b16 %v4151, %v4143
    %v4656 = vpack.c.b16 %v4152, %v4144
    %v4657 = vpack.c.b16 %v4153, %v4145
    %v4658 = vpack.c.b16 %v4154, %v4146
    %v4659 = vpack.c.b16 %v4163, %v4155
    %v4660 = vpack.c.b16 %v4164, %v4156
    %v4661 = vpack.c.b16 %v4165, %v4157
    %v4662 = vpack.c.b16 %v4166, %v4158
    %v4663 = vpack.c.b16 %v4167, %v4159
    %v4664 = vpack.c.b16 %v4168, %v4160
    %v4665 = vpack.c.b16 %v4169, %v4161
    %v4666 = vpack.c.b16 %v4170, %v4162
    %v4667 = vpack.c.b16 %v4179, %v4171
    %v4668 = vpack.c.b16 %v4180, %v4172
    %v4669 = vpack.c.b16 %v4181, %v4173
    %v4670 = vpack.c.b16 %v4182, %v4174
    %v4671 = vpack.c.b16 %v4183, %v4175
    %v4672 = vpack.c.b16 %v4184, %v4176
    %v4673 = vpack.c.b16 %v4185, %v4177
    %v4674 = vpack.c.b16 %v4186, %v4178
    %v4675 = vpack.c.b16 %v4195, %v4187
    %v4676 = vpack.c.b16 %v4196, %v4188
    %v4677 = vpack.c.b16 %v4197, %v4189
    %v4678 = vpack.c.b16 %v4198, %v4190
    %v4679 = vpack.c.b16 %v4199, %v4191
    %v4680 = vpack.c.b16 %v4200, %v4192
    %v4681 = vpack.c.b16 %v4201, %v4193
    %v4682 = vpack.c.b16 %v4202, %v4194
    %v4683 = vpack.c.b16 %v4211, %v4203
    %v4684 = vpack.c.b16 %v4212, %v4204
    %v4685 = vpack.c.b16 %v4213, %v4205
    %v4686 = vpack.c.b16 %v4214, %v4206
    %v4687 = vpack.c.b16 %v4215, %v4207
    %v4688 = vpack.c.b16 %v4216, %v4208
    %v4689 = vpack.c.b16 %v4217, %v4209
    %v4690 = vpack.c.b16 %v4218, %v4210
    %v4691 = vpack.c.b16 %v4227, %v4219
    %v4692 = vpack.c.b16 %v4228, %v4220
    %v4693 = vpack.c.b16 %v4229, %v4221
    %v4694 = vpack.c.b16 %v4230, %v4222
    %v4695 = vpack.c.b16 %v4231, %v4223
    %v4696 = vpack.c.b16 %v4232, %v4224
    %v4697 = vpack.c.b16 %v4233, %v4225
    %v4698 = vpack.c.b16 %v4234, %v4226
    %v4699 = vpack.c.b16 %v4243, %v4235
    %v4700 = vpack.c.b16 %v4244, %v4236
    %v4701 = vpack.c.b16 %v4245, %v4237
    %v4702 = vpack.c.b16 %v4246, %v4238
    %v4703 = vpack.c.b16 %v4247, %v4239
    %v4704 = vpack.c.b16 %v4248, %v4240
    %v4705 = vpack.c.b16 %v4249, %v4241
    %v4706 = vpack.c.b16 %v4250, %v4242
    %v4707 = vpack.c.b16 %v4259, %v4251
    %v4708 = vpack.c.b16 %v4260, %v4252
    %v4709 = vpack.c.b16 %v4261, %v4253
    %v4710 = vpack.c.b16 %v4262, %v4254
    %v4711 = vpack.c.b16 %v4263, %v4255
    %v4712 = vpack.c.b16 %v4264, %v4256
    %v4713 = vpack.c.b16 %v4265, %v4257
    %v4714 = vpack.c.b16 %v4266, %v4258
    %v4715 = vpack.c.b16 %v4275, %v4267
    %v4716 = vpack.c.b16 %v4276, %v4268
    %v4717 = vpack.c.b16 %v4277, %v4269
    %v4718 = vpack.c.b16 %v4278, %v4270
    %v4719 = vpack.c.b16 %v4279, %v4271
    %v4720 = vpack.c.b16 %v4280, %v4272
    %v4721 = vpack.c.b16 %v4281, %v4273
    %v4722 = vpack.c.b16 %v4282, %v4274
    %v4723 = vpack.c.b16 %v4291, %v4283
    %v4724 = vpack.c.b16 %v4292, %v4284
    %v4725 = vpack.c.b16 %v4293, %v4285
    %v4726 = vpack.c.b16 %v4294, %v4286
    %v4727 = vpack.c.b16 %v4295, %v4287
    %v4728 = vpack.c.b16 %v4296, %v4288
    %v4729 = vpack.c.b16 %v4297, %v4289
    %v4730 = vpack.c.b16 %v4298, %v4290
    %v4731 = vpack.c.b16 %v4307, %v4299
    %v4732 = vpack.c.b16 %v4308, %v4300
    %v4733 = vpack.c.b16 %v4309, %v4301
    %v4734 = vpack.c.b16 %v4310, %v4302
    %v4735 = vpack.c.b16 %v4311, %v4303
    %v4736 = vpack.c.b16 %v4312, %v4304
    %v4737 = vpack.c.b16 %v4313, %v4305
    %v4738 = vpack.c.b16 %v4314, %v4306
    %v4739 = vpack.c.b16 %v4323, %v4315
    %v4740 = vpack.c.b16 %v4324, %v4316
    %v4741 = vpack.c.b16 %v4325, %v4317
    %v4742 = vpack.c.b16 %v4326, %v4318
    %v4743 = vpack.c.b16 %v4327, %v4319
    %v4744 = vpack.c.b16 %v4328, %v4320
    %v4745 = vpack.c.b16 %v4329, %v4321
    %v4746 = vpack.c.b16 %v4330, %v4322
    %v4747 = vpack.c.b16 %v4339, %v4331
    %v4748 = vpack.c.b16 %v4340, %v4332
    %v4749 = vpack.c.b16 %v4341, %v4333
    %v4750 = vpack.c.b16 %v4342, %v4334
    %v4751 = vpack.c.b16 %v4343, %v4335
    %v4752 = vpack.c.b16 %v4344, %v4336
    %v4753 = vpack.c.b16 %v4345, %v4337
    %v4754 = vpack.c.b16 %v4346, %v4338
    %v4755 = vpack.c.b16 %v4355, %v4347
    %v4756 = vpack.c.b16 %v4356, %v4348
    %v4757 = vpack.c.b16 %v4357, %v4349
    %v4758 = vpack.c.b16 %v4358, %v4350
    %v4759 = vpack.c.b16 %v4359, %v4351
    %v4760 = vpack.c.b16 %v4360, %v4352
    %v4761 = vpack.c.b16 %v4361, %v4353
    %v4762 = vpack.c.b16 %v4362, %v4354
    %v4763 = vpack.c.b16 %v4371, %v4363
    %v4764 = vpack.c.b16 %v4372, %v4364
    %v4765 = vpack.c.b16 %v4373, %v4365
    %v4766 = vpack.c.b16 %v4374, %v4366
    %v4767 = vpack.c.b16 %v4375, %v4367
    %v4768 = vpack.c.b16 %v4376, %v4368
    %v4769 = vpack.c.b16 %v4377, %v4369
    %v4770 = vpack.c.b16 %v4378, %v4370
    %v4771 = vpack.c.b16 %v4387, %v4379
    %v4772 = vpack.c.b16 %v4388, %v4380
    %v4773 = vpack.c.b16 %v4389, %v4381
    %v4774 = vpack.c.b16 %v4390, %v4382
    %v4775 = vpack.c.b16 %v4391, %v4383
    %v4776 = vpack.c.b16 %v4392, %v4384
    %v4777 = vpack.c.b16 %v4393, %v4385
    %v4778 = vpack.c.b16 %v4394, %v4386
    %v4779 = vpack.c.b16 %v4403, %v4395
    %v4780 = vpack.c.b16 %v4404, %v4396
    %v4781 = vpack.c.b16 %v4405, %v4397
    %v4782 = vpack.c.b16 %v4406, %v4398
    %v4783 = vpack.c.b16 %v4407, %v4399
    %v4784 = vpack.c.b16 %v4408, %v4400
    %v4785 = vpack.c.b16 %v4409, %v4401
    %v4786 = vpack.c.b16 %v4410, %v4402
    %v4787 = vpack.c.b16 %v4419, %v4411
    %v4788 = vpack.c.b16 %v4420, %v4412
    %v4789 = vpack.c.b16 %v4421, %v4413
    %v4790 = vpack.c.b16 %v4422, %v4414
    %v4791 = vpack.c.b16 %v4423, %v4415
    %v4792 = vpack.c.b16 %v4424, %v4416
    %v4793 = vpack.c.b16 %v4425, %v4417
    %v4794 = vpack.c.b16 %v4426, %v4418
    %v4795 = vpack.c.b16 %v4435, %v4427
    %v4796 = vpack.c.b16 %v4436, %v4428
    %v4797 = vpack.c.b16 %v4437, %v4429
    %v4798 = vpack.c.b16 %v4438, %v4430
    %v4799 = vpack.c.b16 %v4439, %v4431
    %v4800 = vpack.c.b16 %v4440, %v4432
    %v4801 = vpack.c.b16 %v4441, %v4433
    %v4802 = vpack.c.b16 %v4442, %v4434
    %v4803 = vpack.c.b16 %v4451, %v4443
    %v4804 = vpack.c.b16 %v4452, %v4444
    %v4805 = vpack.c.b16 %v4453, %v4445
    %v4806 = vpack.c.b16 %v4454, %v4446
    %v4807 = vpack.c.b16 %v4455, %v4447
    %v4808 = vpack.c.b16 %v4456, %v4448
    %v4809 = vpack.c.b16 %v4457, %v4449
    %v4810 = vpack.c.b16 %v4458, %v4450
    %v4811 = vpack.c.b16 %v4467, %v4459
    %v4812 = vpack.c.b16 %v4468, %v4460
    %v4813 = vpack.c.b16 %v4469, %v4461
    %v4814 = vpack.c.b16 %v4470, %v4462
    %v4815 = vpack.c.b16 %v4471, %v4463
    %v4816 = vpack.c.b16 %v4472, %v4464
    %v4817 = vpack.c.b16 %v4473, %v4465
    %v4818 = vpack.c.b16 %v4474, %v4466
    %v4819 = vpack.c.b16 %v4483, %v4475
    %v4820 = vpack.c.b16 %v4484, %v4476
    %v4821 = vpack.c.b16 %v4485, %v4477
    %v4822 = vpack.c.b16 %v4486, %v4478
    %v4823 = vpack.c.b16 %v4487, %v4479
    %v4824 = vpack.c.b16 %v4488, %v4480
    %v4825 = vpack.c.b16 %v4489, %v4481
    %v4826 = vpack.c.b16 %v4490, %v4482
    %v4827 = vpack.c.b16 %v4499, %v4491
    %v4828 = vpack.c.b16 %v4500, %v4492
    %v4829 = vpack.c.b16 %v4501, %v4493
    %v4830 = vpack.c.b16 %v4502, %v4494
    %v4831 = vpack.c.b16 %v4503, %v4495
    %v4832 = vpack.c.b16 %v4504, %v4496
    %v4833 = vpack.c.b16 %v4505, %v4497
    %v4834 = vpack.c.b16 %v4506, %v4498
    %v4835 = vpack.c.b16 %v4515, %v4507
    %v4836 = vpack.c.b16 %v4516, %v4508
    %v4837 = vpack.c.b16 %v4517, %v4509
    %v4838 = vpack.c.b16 %v4518, %v4510
    %v4839 = vpack.c.b16 %v4519, %v4511
    %v4840 = vpack.c.b16 %v4520, %v4512
    %v4841 = vpack.c.b16 %v4521, %v4513
    %v4842 = vpack.c.b16 %v4522, %v4514
    %v4843 = vpack.c.b16 %v4531, %v4523
    %v4844 = vpack.c.b16 %v4532, %v4524
    %v4845 = vpack.c.b16 %v4533, %v4525
    %v4846 = vpack.c.b16 %v4534, %v4526
    %v4847 = vpack.c.b16 %v4535, %v4527
    %v4848 = vpack.c.b16 %v4536, %v4528
    %v4849 = vpack.c.b16 %v4537, %v4529
    %v4850 = vpack.c.b16 %v4538, %v4530
    %v4851 = vpack.c.b16 %v4547, %v4539
    %v4852 = vpack.c.b16 %v4548, %v4540
    %v4853 = vpack.c.b16 %v4549, %v4541
    %v4854 = vpack.c.b16 %v4550, %v4542
    %v4855 = vpack.c.b16 %v4551, %v4543
    %v4856 = vpack.c.b16 %v4552, %v4544
    %v4857 = vpack.c.b16 %v4553, %v4545
    %v4858 = vpack.c.b16 %v4554, %v4546
    %v4859 = vpack.c.b16 %v4563, %v4555
    %v4860 = vpack.c.b16 %v4564, %v4556
    %v4861 = vpack.c.b16 %v4565, %v4557
    %v4862 = vpack.c.b16 %v4566, %v4558
    %v4863 = vpack.c.b16 %v4567, %v4559
    %v4864 = vpack.c.b16 %v4568, %v4560
    %v4865 = vpack.c.b16 %v4569, %v4561
    %v4866 = vpack.c.b16 %v4570, %v4562
    %v4867 = vpack.c.b16 %v4579, %v4571
    %v4868 = vpack.c.b16 %v4580, %v4572
    %v4869 = vpack.c.b16 %v4581, %v4573
    %v4870 = vpack.c.b16 %v4582, %v4574
    %v4871 = vpack.c.b16 %v4583, %v4575
    %v4872 = vpack.c.b16 %v4584, %v4576
    %v4873 = vpack.c.b16 %v4585, %v4577
    %v4874 = vpack.c.b16 %v4586, %v4578
    %v4875 = vpack.c.b16 %v4595, %v4587
    %v4876 = vpack.c.b16 %v4596, %v4588
    %v4877 = vpack.c.b16 %v4597, %v4589
    %v4878 = vpack.c.b16 %v4598, %v4590
    %v4879 = vpack.c.b16 %v4599, %v4591
    %v4880 = vpack.c.b16 %v4600, %v4592
    %v4881 = vpack.c.b16 %v4601, %v4593
    %v4882 = vpack.c.b16 %v4602, %v4594
    %v4883 = vpack.c.b16 %v4611, %v4603
    %v4884 = vpack.c.b16 %v4612, %v4604
    %v4885 = vpack.c.b16 %v4613, %v4605
    %v4886 = vpack.c.b16 %v4614, %v4606
    %v4887 = vpack.c.b16 %v4615, %v4607
    %v4888 = vpack.c.b16 %v4616, %v4608
    %v4889 = vpack.c.b16 %v4617, %v4609
    %v4890 = vpack.c.b16 %v4618, %v4610
    %v4891 = vpack.c.b16 %v4627, %v4619
    %v4892 = vpack.c.b16 %v4628, %v4620
    %v4893 = vpack.c.b16 %v4629, %v4621
    %v4894 = vpack.c.b16 %v4630, %v4622
    %v4895 = vpack.c.b16 %v4631, %v4623
    %v4896 = vpack.c.b16 %v4632, %v4624
    %v4897 = vpack.c.b16 %v4633, %v4625
    %v4898 = vpack.c.b16 %v4634, %v4626
    %v4899 = vpack.c.b16 %v4643, %v4635
    %v4900 = vpack.c.b16 %v4644, %v4636
    %v4901 = vpack.c.b16 %v4645, %v4637
    %v4902 = vpack.c.b16 %v4646, %v4638
    %v4903 = vpack.c.b16 %v4647, %v4639
    %v4904 = vpack.c.b16 %v4648, %v4640
    %v4905 = vpack.c.b16 %v4649, %v4641
    %v4906 = vpack.c.b16 %v4650, %v4642
    %5163 = vmatpush.bf16.msra.mxu0 %v4707
    %5164 = vmatpush.bf16.msra.mxu0 %v4699
    %5165 = vmatpush.bf16.msra.mxu0 %v4691
    %5166 = vmatpush.bf16.msra.mxu0 %v4683
    %5167 = vmatpush.bf16.msra.mxu0 %v4675
    %5168 = vmatpush.bf16.msra.mxu0 %v4667
    %5169 = vmatpush.bf16.msra.mxu0 %v4659
    %5170 = vmatpush.bf16.msra.mxu0 %v4651
    %5171 = vmatmul.bf16.gmra.mxu0 %v3605
    %v5172 = vpop.f32.mrf.mxu0
    %v5173 = vadd.f32 %v3867, %v5172
    %v5174 = vpop.f32.mrf.mxu0
    %5175 = vdwg.mxu0
    %5176 = vmatpush.bf16.msra.mxu0 %v4771
    %5177 = vmatpush.bf16.msra.mxu0 %v4763
    %5178 = vmatpush.bf16.msra.mxu0 %v4755
    %5179 = vmatpush.bf16.msra.mxu0 %v4747
    %5180 = vmatpush.bf16.msra.mxu0 %v4739
    %5181 = vmatpush.bf16.msra.mxu0 %v4731
    %5182 = vmatpush.bf16.msra.mxu0 %v4723
    %5183 = vmatpush.bf16.msra.mxu0 %v4715
    %5184 = vmatmul.bf16.gmra.mxu0 %v3606
    %v5185 = vpop.f32.mrf.mxu0
    %v5186 = vadd.f32 %v5173, %v5185
    %v5187 = vpop.f32.mrf.mxu0
    %5188 = vdwg.mxu0
    %5189 = vmatpush.bf16.msra.mxu0 %v4835
    %5190 = vmatpush.bf16.msra.mxu0 %v4827
    %5191 = vmatpush.bf16.msra.mxu0 %v4819
    %5192 = vmatpush.bf16.msra.mxu0 %v4811
    %5193 = vmatpush.bf16.msra.mxu0 %v4803
    %5194 = vmatpush.bf16.msra.mxu0 %v4795
    %5195 = vmatpush.bf16.msra.mxu0 %v4787
    %5196 = vmatpush.bf16.msra.mxu0 %v4779
    %5197 = vmatmul.bf16.gmra.mxu0 %v3607
    %v5198 = vpop.f32.mrf.mxu0
    %v5199 = vadd.f32 %v5186, %v5198
    %v5200 = vpop.f32.mrf.mxu0
    %5201 = vdwg.mxu0
    %5202 = vmatpush.bf16.msra.mxu0 %v4899
    %5203 = vmatpush.bf16.msra.mxu0 %v4891
    %5204 = vmatpush.bf16.msra.mxu0 %v4883
    %5205 = vmatpush.bf16.msra.mxu0 %v4875
    %5206 = vmatpush.bf16.msra.mxu0 %v4867
    %5207 = vmatpush.bf16.msra.mxu0 %v4859
    %5208 = vmatpush.bf16.msra.mxu0 %v4851
    %5209 = vmatpush.bf16.msra.mxu0 %v4843
    %5210 = vmatmul.bf16.gmra.mxu0 %v3608
    %v5211 = vpop.f32.mrf.mxu0
    %v5212 = vadd.f32 %v5199, %v5211
    %v5213 = vpop.f32.mrf.mxu0
    %5214 = vdwg.mxu0
    %5215 = vmatpush.bf16.msra.mxu0 %v4708
    %5216 = vmatpush.bf16.msra.mxu0 %v4700
    %5217 = vmatpush.bf16.msra.mxu0 %v4692
    %5218 = vmatpush.bf16.msra.mxu0 %v4684
    %5219 = vmatpush.bf16.msra.mxu0 %v4676
    %5220 = vmatpush.bf16.msra.mxu0 %v4668
    %5221 = vmatpush.bf16.msra.mxu0 %v4660
    %5222 = vmatpush.bf16.msra.mxu0 %v4652
    %5223 = vmatmul.bf16.gmra.mxu0 %v3605
    %v5224 = vpop.f32.mrf.mxu0
    %v5225 = vadd.f32 %v3868, %v5224
    %v5226 = vpop.f32.mrf.mxu0
    %5227 = vdwg.mxu0
    %5228 = vmatpush.bf16.msra.mxu0 %v4772
    %5229 = vmatpush.bf16.msra.mxu0 %v4764
    %5230 = vmatpush.bf16.msra.mxu0 %v4756
    %5231 = vmatpush.bf16.msra.mxu0 %v4748
    %5232 = vmatpush.bf16.msra.mxu0 %v4740
    %5233 = vmatpush.bf16.msra.mxu0 %v4732
    %5234 = vmatpush.bf16.msra.mxu0 %v4724
    %5235 = vmatpush.bf16.msra.mxu0 %v4716
    %5236 = vmatmul.bf16.gmra.mxu0 %v3606
    %v5237 = vpop.f32.mrf.mxu0
    %v5238 = vadd.f32 %v5225, %v5237
    %v5239 = vpop.f32.mrf.mxu0
    %5240 = vdwg.mxu0
    %5241 = vmatpush.bf16.msra.mxu0 %v4836
    %5242 = vmatpush.bf16.msra.mxu0 %v4828
    %5243 = vmatpush.bf16.msra.mxu0 %v4820
    %5244 = vmatpush.bf16.msra.mxu0 %v4812
    %5245 = vmatpush.bf16.msra.mxu0 %v4804
    %5246 = vmatpush.bf16.msra.mxu0 %v4796
    %5247 = vmatpush.bf16.msra.mxu0 %v4788
    %5248 = vmatpush.bf16.msra.mxu0 %v4780
    %5249 = vmatmul.bf16.gmra.mxu0 %v3607
    %v5250 = vpop.f32.mrf.mxu0
    %v5251 = vadd.f32 %v5238, %v5250
    %v5252 = vpop.f32.mrf.mxu0
    %5253 = vdwg.mxu0
    %5254 = vmatpush.bf16.msra.mxu0 %v4900
    %5255 = vmatpush.bf16.msra.mxu0 %v4892
    %5256 = vmatpush.bf16.msra.mxu0 %v4884
    %5257 = vmatpush.bf16.msra.mxu0 %v4876
    %5258 = vmatpush.bf16.msra.mxu0 %v4868
    %5259 = vmatpush.bf16.msra.mxu0 %v4860
    %5260 = vmatpush.bf16.msra.mxu0 %v4852
    %5261 = vmatpush.bf16.msra.mxu0 %v4844
    %5262 = vmatmul.bf16.gmra.mxu0 %v3608
    %v5263 = vpop.f32.mrf.mxu0
    %v5264 = vadd.f32 %v5251, %v5263
    %v5265 = vpop.f32.mrf.mxu0
    %5266 = vdwg.mxu0
    %5267 = vmatpush.bf16.msra.mxu0 %v4709
    %5268 = vmatpush.bf16.msra.mxu0 %v4701
    %5269 = vmatpush.bf16.msra.mxu0 %v4693
    %5270 = vmatpush.bf16.msra.mxu0 %v4685
    %5271 = vmatpush.bf16.msra.mxu0 %v4677
    %5272 = vmatpush.bf16.msra.mxu0 %v4669
    %5273 = vmatpush.bf16.msra.mxu0 %v4661
    %5274 = vmatpush.bf16.msra.mxu0 %v4653
    %5275 = vmatmul.bf16.gmra.mxu0 %v3605
    %v5276 = vpop.f32.mrf.mxu0
    %v5277 = vadd.f32 %v3869, %v5276
    %v5278 = vpop.f32.mrf.mxu0
    %5279 = vdwg.mxu0
    %5280 = vmatpush.bf16.msra.mxu0 %v4773
    %5281 = vmatpush.bf16.msra.mxu0 %v4765
    %5282 = vmatpush.bf16.msra.mxu0 %v4757
    %5283 = vmatpush.bf16.msra.mxu0 %v4749
    %5284 = vmatpush.bf16.msra.mxu0 %v4741
    %5285 = vmatpush.bf16.msra.mxu0 %v4733
    %5286 = vmatpush.bf16.msra.mxu0 %v4725
    %5287 = vmatpush.bf16.msra.mxu0 %v4717
    %5288 = vmatmul.bf16.gmra.mxu0 %v3606
    %v5289 = vpop.f32.mrf.mxu0
    %v5290 = vadd.f32 %v5277, %v5289
    %v5291 = vpop.f32.mrf.mxu0
    %5292 = vdwg.mxu0
    %5293 = vmatpush.bf16.msra.mxu0 %v4837
    %5294 = vmatpush.bf16.msra.mxu0 %v4829
    %5295 = vmatpush.bf16.msra.mxu0 %v4821
    %5296 = vmatpush.bf16.msra.mxu0 %v4813
    %5297 = vmatpush.bf16.msra.mxu0 %v4805
    %5298 = vmatpush.bf16.msra.mxu0 %v4797
    %5299 = vmatpush.bf16.msra.mxu0 %v4789
    %5300 = vmatpush.bf16.msra.mxu0 %v4781
    %5301 = vmatmul.bf16.gmra.mxu0 %v3607
    %v5302 = vpop.f32.mrf.mxu0
    %v5303 = vadd.f32 %v5290, %v5302
    %v5304 = vpop.f32.mrf.mxu0
    %5305 = vdwg.mxu0
    %5306 = vmatpush.bf16.msra.mxu0 %v4901
    %5307 = vmatpush.bf16.msra.mxu0 %v4893
    %5308 = vmatpush.bf16.msra.mxu0 %v4885
    %5309 = vmatpush.bf16.msra.mxu0 %v4877
    %5310 = vmatpush.bf16.msra.mxu0 %v4869
    %5311 = vmatpush.bf16.msra.mxu0 %v4861
    %5312 = vmatpush.bf16.msra.mxu0 %v4853
    %5313 = vmatpush.bf16.msra.mxu0 %v4845
    %5314 = vmatmul.bf16.gmra.mxu0 %v3608
    %v5315 = vpop.f32.mrf.mxu0
    %v5316 = vadd.f32 %v5303, %v5315
    %v5317 = vpop.f32.mrf.mxu0
    %5318 = vdwg.mxu0
    %5319 = vmatpush.bf16.msra.mxu0 %v4710
    %5320 = vmatpush.bf16.msra.mxu0 %v4702
    %5321 = vmatpush.bf16.msra.mxu0 %v4694
    %5322 = vmatpush.bf16.msra.mxu0 %v4686
    %5323 = vmatpush.bf16.msra.mxu0 %v4678
    %5324 = vmatpush.bf16.msra.mxu0 %v4670
    %5325 = vmatpush.bf16.msra.mxu0 %v4662
    %5326 = vmatpush.bf16.msra.mxu0 %v4654
    %5327 = vmatmul.bf16.gmra.mxu0 %v3605
    %v5328 = vpop.f32.mrf.mxu0
    %v5329 = vadd.f32 %v3870, %v5328
    %v5330 = vpop.f32.mrf.mxu0
    %5331 = vdwg.mxu0
    %5332 = vmatpush.bf16.msra.mxu0 %v4774
    %5333 = vmatpush.bf16.msra.mxu0 %v4766
    %5334 = vmatpush.bf16.msra.mxu0 %v4758
    %5335 = vmatpush.bf16.msra.mxu0 %v4750
    %5336 = vmatpush.bf16.msra.mxu0 %v4742
    %5337 = vmatpush.bf16.msra.mxu0 %v4734
    %5338 = vmatpush.bf16.msra.mxu0 %v4726
    %5339 = vmatpush.bf16.msra.mxu0 %v4718
    %5340 = vmatmul.bf16.gmra.mxu0 %v3606
    %v5341 = vpop.f32.mrf.mxu0
    %v5342 = vadd.f32 %v5329, %v5341
    %v5343 = vpop.f32.mrf.mxu0
    %5344 = vdwg.mxu0
    %5345 = vmatpush.bf16.msra.mxu0 %v4838
    %5346 = vmatpush.bf16.msra.mxu0 %v4830
    %5347 = vmatpush.bf16.msra.mxu0 %v4822
    %5348 = vmatpush.bf16.msra.mxu0 %v4814
    %5349 = vmatpush.bf16.msra.mxu0 %v4806
    %5350 = vmatpush.bf16.msra.mxu0 %v4798
    %5351 = vmatpush.bf16.msra.mxu0 %v4790
    %5352 = vmatpush.bf16.msra.mxu0 %v4782
    %5353 = vmatmul.bf16.gmra.mxu0 %v3607
    %v5354 = vpop.f32.mrf.mxu0
    %v5355 = vadd.f32 %v5342, %v5354
    %v5356 = vpop.f32.mrf.mxu0
    %5357 = vdwg.mxu0
    %5358 = vmatpush.bf16.msra.mxu0 %v4902
    %5359 = vmatpush.bf16.msra.mxu0 %v4894
    %5360 = vmatpush.bf16.msra.mxu0 %v4886
    %5361 = vmatpush.bf16.msra.mxu0 %v4878
    %5362 = vmatpush.bf16.msra.mxu0 %v4870
    %5363 = vmatpush.bf16.msra.mxu0 %v4862
    %5364 = vmatpush.bf16.msra.mxu0 %v4854
    %5365 = vmatpush.bf16.msra.mxu0 %v4846
    %5366 = vmatmul.bf16.gmra.mxu0 %v3608
    %v5367 = vpop.f32.mrf.mxu0
    %v5368 = vadd.f32 %v5355, %v5367
    %v5369 = vpop.f32.mrf.mxu0
    %5370 = vdwg.mxu0
    %5371 = vmatpush.bf16.msra.mxu0 %v4711
    %5372 = vmatpush.bf16.msra.mxu0 %v4703
    %5373 = vmatpush.bf16.msra.mxu0 %v4695
    %5374 = vmatpush.bf16.msra.mxu0 %v4687
    %5375 = vmatpush.bf16.msra.mxu0 %v4679
    %5376 = vmatpush.bf16.msra.mxu0 %v4671
    %5377 = vmatpush.bf16.msra.mxu0 %v4663
    %5378 = vmatpush.bf16.msra.mxu0 %v4655
    %5379 = vmatmul.bf16.gmra.mxu0 %v3605
    %v5380 = vpop.f32.mrf.mxu0
    %v5381 = vadd.f32 %v3871, %v5380
    %v5382 = vpop.f32.mrf.mxu0
    %5383 = vdwg.mxu0
    %5384 = vmatpush.bf16.msra.mxu0 %v4775
    %5385 = vmatpush.bf16.msra.mxu0 %v4767
    %5386 = vmatpush.bf16.msra.mxu0 %v4759
    %5387 = vmatpush.bf16.msra.mxu0 %v4751
    %5388 = vmatpush.bf16.msra.mxu0 %v4743
    %5389 = vmatpush.bf16.msra.mxu0 %v4735
    %5390 = vmatpush.bf16.msra.mxu0 %v4727
    %5391 = vmatpush.bf16.msra.mxu0 %v4719
    %5392 = vmatmul.bf16.gmra.mxu0 %v3606
    %v5393 = vpop.f32.mrf.mxu0
    %v5394 = vadd.f32 %v5381, %v5393
    %v5395 = vpop.f32.mrf.mxu0
    %5396 = vdwg.mxu0
    %5397 = vmatpush.bf16.msra.mxu0 %v4839
    %5398 = vmatpush.bf16.msra.mxu0 %v4831
    %5399 = vmatpush.bf16.msra.mxu0 %v4823
    %5400 = vmatpush.bf16.msra.mxu0 %v4815
    %5401 = vmatpush.bf16.msra.mxu0 %v4807
    %5402 = vmatpush.bf16.msra.mxu0 %v4799
    %5403 = vmatpush.bf16.msra.mxu0 %v4791
    %5404 = vmatpush.bf16.msra.mxu0 %v4783
    %5405 = vmatmul.bf16.gmra.mxu0 %v3607
    %v5406 = vpop.f32.mrf.mxu0
    %v5407 = vadd.f32 %v5394, %v5406
    %v5408 = vpop.f32.mrf.mxu0
    %5409 = vdwg.mxu0
    %5410 = vmatpush.bf16.msra.mxu0 %v4903
    %5411 = vmatpush.bf16.msra.mxu0 %v4895
    %5412 = vmatpush.bf16.msra.mxu0 %v4887
    %5413 = vmatpush.bf16.msra.mxu0 %v4879
    %5414 = vmatpush.bf16.msra.mxu0 %v4871
    %5415 = vmatpush.bf16.msra.mxu0 %v4863
    %5416 = vmatpush.bf16.msra.mxu0 %v4855
    %5417 = vmatpush.bf16.msra.mxu0 %v4847
    %5418 = vmatmul.bf16.gmra.mxu0 %v3608
    %v5419 = vpop.f32.mrf.mxu0
    %v5420 = vadd.f32 %v5407, %v5419
    %v5421 = vpop.f32.mrf.mxu0
    %5422 = vdwg.mxu0
    %5423 = vmatpush.bf16.msra.mxu0 %v4712
    %5424 = vmatpush.bf16.msra.mxu0 %v4704
    %5425 = vmatpush.bf16.msra.mxu0 %v4696
    %5426 = vmatpush.bf16.msra.mxu0 %v4688
    %5427 = vmatpush.bf16.msra.mxu0 %v4680
    %5428 = vmatpush.bf16.msra.mxu0 %v4672
    %5429 = vmatpush.bf16.msra.mxu0 %v4664
    %5430 = vmatpush.bf16.msra.mxu0 %v4656
    %5431 = vmatmul.bf16.gmra.mxu0 %v3605
    %v5432 = vpop.f32.mrf.mxu0
    %v5433 = vadd.f32 %v3872, %v5432
    %v5434 = vpop.f32.mrf.mxu0
    %5435 = vdwg.mxu0
    %5436 = vmatpush.bf16.msra.mxu0 %v4776
    %5437 = vmatpush.bf16.msra.mxu0 %v4768
    %5438 = vmatpush.bf16.msra.mxu0 %v4760
    %5439 = vmatpush.bf16.msra.mxu0 %v4752
    %5440 = vmatpush.bf16.msra.mxu0 %v4744
    %5441 = vmatpush.bf16.msra.mxu0 %v4736
    %5442 = vmatpush.bf16.msra.mxu0 %v4728
    %5443 = vmatpush.bf16.msra.mxu0 %v4720
    %5444 = vmatmul.bf16.gmra.mxu0 %v3606
    %v5445 = vpop.f32.mrf.mxu0
    %v5446 = vadd.f32 %v5433, %v5445
    %v5447 = vpop.f32.mrf.mxu0
    %5448 = vdwg.mxu0
    %5449 = vmatpush.bf16.msra.mxu0 %v4840
    %5450 = vmatpush.bf16.msra.mxu0 %v4832
    %5451 = vmatpush.bf16.msra.mxu0 %v4824
    %5452 = vmatpush.bf16.msra.mxu0 %v4816
    %5453 = vmatpush.bf16.msra.mxu0 %v4808
    %5454 = vmatpush.bf16.msra.mxu0 %v4800
    %5455 = vmatpush.bf16.msra.mxu0 %v4792
    %5456 = vmatpush.bf16.msra.mxu0 %v4784
    %5457 = vmatmul.bf16.gmra.mxu0 %v3607
    %v5458 = vpop.f32.mrf.mxu0
    %v5459 = vadd.f32 %v5446, %v5458
    %v5460 = vpop.f32.mrf.mxu0
    %5461 = vdwg.mxu0
    %5462 = vmatpush.bf16.msra.mxu0 %v4904
    %5463 = vmatpush.bf16.msra.mxu0 %v4896
    %5464 = vmatpush.bf16.msra.mxu0 %v4888
    %5465 = vmatpush.bf16.msra.mxu0 %v4880
    %5466 = vmatpush.bf16.msra.mxu0 %v4872
    %5467 = vmatpush.bf16.msra.mxu0 %v4864
    %5468 = vmatpush.bf16.msra.mxu0 %v4856
    %5469 = vmatpush.bf16.msra.mxu0 %v4848
    %5470 = vmatmul.bf16.gmra.mxu0 %v3608
    %v5471 = vpop.f32.mrf.mxu0
    %v5472 = vadd.f32 %v5459, %v5471
    %v5473 = vpop.f32.mrf.mxu0
    %5474 = vdwg.mxu0
    %5475 = vmatpush.bf16.msra.mxu0 %v4713
    %5476 = vmatpush.bf16.msra.mxu0 %v4705
    %5477 = vmatpush.bf16.msra.mxu0 %v4697
    %5478 = vmatpush.bf16.msra.mxu0 %v4689
    %5479 = vmatpush.bf16.msra.mxu0 %v4681
    %5480 = vmatpush.bf16.msra.mxu0 %v4673
    %5481 = vmatpush.bf16.msra.mxu0 %v4665
    %5482 = vmatpush.bf16.msra.mxu0 %v4657
    %5483 = vmatmul.bf16.gmra.mxu0 %v3605
    %v5484 = vpop.f32.mrf.mxu0
    %v5485 = vadd.f32 %v3873, %v5484
    %v5486 = vpop.f32.mrf.mxu0
    %5487 = vdwg.mxu0
    %5488 = vmatpush.bf16.msra.mxu0 %v4777
    %5489 = vmatpush.bf16.msra.mxu0 %v4769
    %5490 = vmatpush.bf16.msra.mxu0 %v4761
    %5491 = vmatpush.bf16.msra.mxu0 %v4753
    %5492 = vmatpush.bf16.msra.mxu0 %v4745
    %5493 = vmatpush.bf16.msra.mxu0 %v4737
    %5494 = vmatpush.bf16.msra.mxu0 %v4729
    %5495 = vmatpush.bf16.msra.mxu0 %v4721
    %5496 = vmatmul.bf16.gmra.mxu0 %v3606
    %v5497 = vpop.f32.mrf.mxu0
    %v5498 = vadd.f32 %v5485, %v5497
    %v5499 = vpop.f32.mrf.mxu0
    %5500 = vdwg.mxu0
    %5501 = vmatpush.bf16.msra.mxu0 %v4841
    %5502 = vmatpush.bf16.msra.mxu0 %v4833
    %5503 = vmatpush.bf16.msra.mxu0 %v4825
    %5504 = vmatpush.bf16.msra.mxu0 %v4817
    %5505 = vmatpush.bf16.msra.mxu0 %v4809
    %5506 = vmatpush.bf16.msra.mxu0 %v4801
    %5507 = vmatpush.bf16.msra.mxu0 %v4793
    %5508 = vmatpush.bf16.msra.mxu0 %v4785
    %5509 = vmatmul.bf16.gmra.mxu0 %v3607
    %v5510 = vpop.f32.mrf.mxu0
    %v5511 = vadd.f32 %v5498, %v5510
    %v5512 = vpop.f32.mrf.mxu0
    %5513 = vdwg.mxu0
    %5514 = vmatpush.bf16.msra.mxu0 %v4905
    %5515 = vmatpush.bf16.msra.mxu0 %v4897
    %5516 = vmatpush.bf16.msra.mxu0 %v4889
    %5517 = vmatpush.bf16.msra.mxu0 %v4881
    %5518 = vmatpush.bf16.msra.mxu0 %v4873
    %5519 = vmatpush.bf16.msra.mxu0 %v4865
    %5520 = vmatpush.bf16.msra.mxu0 %v4857
    %5521 = vmatpush.bf16.msra.mxu0 %v4849
    %5522 = vmatmul.bf16.gmra.mxu0 %v3608
    %v5523 = vpop.f32.mrf.mxu0
    %v5524 = vadd.f32 %v5511, %v5523
    %v5525 = vpop.f32.mrf.mxu0
    %5526 = vdwg.mxu0
    %5527 = vmatpush.bf16.msra.mxu0 %v4714
    %5528 = vmatpush.bf16.msra.mxu0 %v4706
    %5529 = vmatpush.bf16.msra.mxu0 %v4698
    %5530 = vmatpush.bf16.msra.mxu0 %v4690
    %5531 = vmatpush.bf16.msra.mxu0 %v4682
    %5532 = vmatpush.bf16.msra.mxu0 %v4674
    %5533 = vmatpush.bf16.msra.mxu0 %v4666
    %5534 = vmatpush.bf16.msra.mxu0 %v4658
    %5535 = vmatmul.bf16.gmra.mxu0 %v3605
    %v5536 = vpop.f32.mrf.mxu0
    %v5537 = vadd.f32 %v3874, %v5536
    %v5538 = vpop.f32.mrf.mxu0
    %5539 = vdwg.mxu0
    %5540 = vmatpush.bf16.msra.mxu0 %v4778
    %5541 = vmatpush.bf16.msra.mxu0 %v4770
    %5542 = vmatpush.bf16.msra.mxu0 %v4762
    %5543 = vmatpush.bf16.msra.mxu0 %v4754
    %5544 = vmatpush.bf16.msra.mxu0 %v4746
    %5545 = vmatpush.bf16.msra.mxu0 %v4738
    %5546 = vmatpush.bf16.msra.mxu0 %v4730
    %5547 = vmatpush.bf16.msra.mxu0 %v4722
    %5548 = vmatmul.bf16.gmra.mxu0 %v3606
    %v5549 = vpop.f32.mrf.mxu0
    %v5550 = vadd.f32 %v5537, %v5549
    %v5551 = vpop.f32.mrf.mxu0
    %5552 = vdwg.mxu0
    %5553 = vmatpush.bf16.msra.mxu0 %v4842
    %5554 = vmatpush.bf16.msra.mxu0 %v4834
    %5555 = vmatpush.bf16.msra.mxu0 %v4826
    %5556 = vmatpush.bf16.msra.mxu0 %v4818
    %5557 = vmatpush.bf16.msra.mxu0 %v4810
    %5558 = vmatpush.bf16.msra.mxu0 %v4802
    %5559 = vmatpush.bf16.msra.mxu0 %v4794
    %5560 = vmatpush.bf16.msra.mxu0 %v4786
    %5561 = vmatmul.bf16.gmra.mxu0 %v3607
    %v5562 = vpop.f32.mrf.mxu0
    %v5563 = vadd.f32 %v5550, %v5562
    %v5564 = vpop.f32.mrf.mxu0
    %5565 = vdwg.mxu0
    %5566 = vmatpush.bf16.msra.mxu0 %v4906
    %5567 = vmatpush.bf16.msra.mxu0 %v4898
    %5568 = vmatpush.bf16.msra.mxu0 %v4890
    %5569 = vmatpush.bf16.msra.mxu0 %v4882
    %5570 = vmatpush.bf16.msra.mxu0 %v4874
    %5571 = vmatpush.bf16.msra.mxu0 %v4866
    %5572 = vmatpush.bf16.msra.mxu0 %v4858
    %5573 = vmatpush.bf16.msra.mxu0 %v4850
    %5574 = vmatmul.bf16.gmra.mxu0 %v3608
    %v5575 = vpop.f32.mrf.mxu0
    %v5576 = vadd.f32 %v5563, %v5575
    %v5577 = vpop.f32.mrf.mxu0
    %5578 = vdwg.mxu0
    %v5579 = vtanh.pop %v5212
    %v5580 = vtanh.pop %v5264
    %v5581 = vtanh.pop %v5316
    %v5582 = vtanh.pop %v5368
    %v5583 = vtanh.pop %v5420
    %v5584 = vtanh.pop %v5472
    %v5585 = vtanh.pop %v5524
    %v5586 = vtanh.pop %v5576
    %v5587 = vpack.c.bf16 %v5579, %v5579
    %v5588 = vpack.c.bf16 %v5580, %v5580
    %v5589 = vpack.c.bf16 %v5581, %v5581
    %v5590 = vpack.c.bf16 %v5582, %v5582
    %v5591 = vpack.c.bf16 %v5583, %v5583
    %v5592 = vpack.c.bf16 %v5584, %v5584
    %v5593 = vpack.c.bf16 %v5585, %v5585
    %v5594 = vpack.c.bf16 %v5586, %v5586
    %v5595 = vld [vmem:[%s11] sm:$0xff]
    %v5596 = vld [vmem:[%s11 + $0x8] sm:$0xff]
    %v5597 = vld [vmem:[%s11 + $0x10] sm:$0xff]
    %v5598 = vld [vmem:[%s11 + $0x18] sm:$0xff]
    %v5599 = vld [vmem:[%s11 + $0x20] sm:$0xff]
    %v5600 = vld [vmem:[%s11 + $0x28] sm:$0xff]
    %v5601 = vld [vmem:[%s11 + $0x30] sm:$0xff]
    %v5602 = vld [vmem:[%s11 + $0x38] sm:$0xff]
    %v5603 = vld [vmem:[%s11 + $0x40] sm:$0xff]
    %v5604 = vld [vmem:[%s11 + $0x48] sm:$0xff]
    %v5605 = vld [vmem:[%s11 + $0x50] sm:$0xff]
    %v5606 = vld [vmem:[%s11 + $0x58] sm:$0xff]
    %v5607 = vld [vmem:[%s11 + $0x60] sm:$0xff]
    %v5608 = vld [vmem:[%s11 + $0x68] sm:$0xff]
    %v5609 = vld [vmem:[%s11 + $0x70] sm:$0xff]
    %v5610 = vld [vmem:[%s11 + $0x78] sm:$0xff]
    %v5611 = vld [vmem:[%s11 + $0x80] sm:$0xff]
    %v5612 = vld [vmem:[%s11 + $0x88] sm:$0xff]
    %v5613 = vld [vmem:[%s11 + $0x90] sm:$0xff]
    %v5614 = vld [vmem:[%s11 + $0x98] sm:$0xff]
    %v5615 = vld [vmem:[%s11 + $0xa0] sm:$0xff]
    %v5616 = vld [vmem:[%s11 + $0xa8] sm:$0xff]
    %v5617 = vld [vmem:[%s11 + $0xb0] sm:$0xff]
    %v5618 = vld [vmem:[%s11 + $0xb8] sm:$0xff]
    %v5619 = vld [vmem:[%s11 + $0xc0] sm:$0xff]
    %v5620 = vld [vmem:[%s11 + $0xc8] sm:$0xff]
    %v5621 = vld [vmem:[%s11 + $0xd0] sm:$0xff]
    %v5622 = vld [vmem:[%s11 + $0xd8] sm:$0xff]
    %v5623 = vld [vmem:[%s11 + $0xe0] sm:$0xff]
    %v5624 = vld [vmem:[%s11 + $0xe8] sm:$0xff]
    %v5625 = vld [vmem:[%s11 + $0xf0] sm:$0xff]
    %v5626 = vld [vmem:[%s11 + $0xf8] sm:$0xff]
    %v5627 = vld [vmem:[%s11 + $0x100] sm:$0xff]
    %v5628 = vld [vmem:[%s11 + $0x108] sm:$0xff]
    %v5629 = vld [vmem:[%s11 + $0x110] sm:$0xff]
    %v5630 = vld [vmem:[%s11 + $0x118] sm:$0xff]
    %v5631 = vld [vmem:[%s11 + $0x120] sm:$0xff]
    %v5632 = vld [vmem:[%s11 + $0x128] sm:$0xff]
    %v5633 = vld [vmem:[%s11 + $0x130] sm:$0xff]
    %v5634 = vld [vmem:[%s11 + $0x138] sm:$0xff]
    %v5635 = vld [vmem:[%s11 + $0x140] sm:$0xff]
    %v5636 = vld [vmem:[%s11 + $0x148] sm:$0xff]
    %v5637 = vld [vmem:[%s11 + $0x150] sm:$0xff]
    %v5638 = vld [vmem:[%s11 + $0x158] sm:$0xff]
    %v5639 = vld [vmem:[%s11 + $0x160] sm:$0xff]
    %v5640 = vld [vmem:[%s11 + $0x168] sm:$0xff]
    %v5641 = vld [vmem:[%s11 + $0x170] sm:$0xff]
    %v5642 = vld [vmem:[%s11 + $0x178] sm:$0xff]
    %v5643 = vld [vmem:[%s11 + $0x180] sm:$0xff]
    %v5644 = vld [vmem:[%s11 + $0x188] sm:$0xff]
    %v5645 = vld [vmem:[%s11 + $0x190] sm:$0xff]
    %v5646 = vld [vmem:[%s11 + $0x198] sm:$0xff]
    %v5647 = vld [vmem:[%s11 + $0x1a0] sm:$0xff]
    %v5648 = vld [vmem:[%s11 + $0x1a8] sm:$0xff]
    %v5649 = vld [vmem:[%s11 + $0x1b0] sm:$0xff]
    %v5650 = vld [vmem:[%s11 + $0x1b8] sm:$0xff]
    %v5651 = vld [vmem:[%s11 + $0x1c0] sm:$0xff]
    %v5652 = vld [vmem:[%s11 + $0x1c8] sm:$0xff]
    %v5653 = vld [vmem:[%s11 + $0x1d0] sm:$0xff]
    %v5654 = vld [vmem:[%s11 + $0x1d8] sm:$0xff]
    %v5655 = vld [vmem:[%s11 + $0x1e0] sm:$0xff]
    %v5656 = vld [vmem:[%s11 + $0x1e8] sm:$0xff]
    %v5657 = vld [vmem:[%s11 + $0x1f0] sm:$0xff]
    %v5658 = vld [vmem:[%s11 + $0x1f8] sm:$0xff]
    %v5659 = vld [vmem:[%s11 + $0x200] sm:$0xff]
    %v5660 = vld [vmem:[%s11 + $0x208] sm:$0xff]
    %v5661 = vld [vmem:[%s11 + $0x210] sm:$0xff]
    %v5662 = vld [vmem:[%s11 + $0x218] sm:$0xff]
    %v5663 = vld [vmem:[%s11 + $0x220] sm:$0xff]
    %v5664 = vld [vmem:[%s11 + $0x228] sm:$0xff]
    %v5665 = vld [vmem:[%s11 + $0x230] sm:$0xff]
    %v5666 = vld [vmem:[%s11 + $0x238] sm:$0xff]
    %v5667 = vld [vmem:[%s11 + $0x240] sm:$0xff]
    %v5668 = vld [vmem:[%s11 + $0x248] sm:$0xff]
    %v5669 = vld [vmem:[%s11 + $0x250] sm:$0xff]
    %v5670 = vld [vmem:[%s11 + $0x258] sm:$0xff]
    %v5671 = vld [vmem:[%s11 + $0x260] sm:$0xff]
    %v5672 = vld [vmem:[%s11 + $0x268] sm:$0xff]
    %v5673 = vld [vmem:[%s11 + $0x270] sm:$0xff]
    %v5674 = vld [vmem:[%s11 + $0x278] sm:$0xff]
    %v5675 = vld [vmem:[%s11 + $0x280] sm:$0xff]
    %v5676 = vld [vmem:[%s11 + $0x288] sm:$0xff]
    %v5677 = vld [vmem:[%s11 + $0x290] sm:$0xff]
    %v5678 = vld [vmem:[%s11 + $0x298] sm:$0xff]
    %v5679 = vld [vmem:[%s11 + $0x2a0] sm:$0xff]
    %v5680 = vld [vmem:[%s11 + $0x2a8] sm:$0xff]
    %v5681 = vld [vmem:[%s11 + $0x2b0] sm:$0xff]
    %v5682 = vld [vmem:[%s11 + $0x2b8] sm:$0xff]
    %v5683 = vld [vmem:[%s11 + $0x2c0] sm:$0xff]
    %v5684 = vld [vmem:[%s11 + $0x2c8] sm:$0xff]
    %v5685 = vld [vmem:[%s11 + $0x2d0] sm:$0xff]
    %v5686 = vld [vmem:[%s11 + $0x2d8] sm:$0xff]
    %v5687 = vld [vmem:[%s11 + $0x2e0] sm:$0xff]
    %v5688 = vld [vmem:[%s11 + $0x2e8] sm:$0xff]
    %v5689 = vld [vmem:[%s11 + $0x2f0] sm:$0xff]
    %v5690 = vld [vmem:[%s11 + $0x2f8] sm:$0xff]
    %v5691 = vld [vmem:[%s11 + $0x300] sm:$0xff]
    %v5692 = vld [vmem:[%s11 + $0x308] sm:$0xff]
    %v5693 = vld [vmem:[%s11 + $0x310] sm:$0xff]
    %v5694 = vld [vmem:[%s11 + $0x318] sm:$0xff]
    %v5695 = vld [vmem:[%s11 + $0x320] sm:$0xff]
    %v5696 = vld [vmem:[%s11 + $0x328] sm:$0xff]
    %v5697 = vld [vmem:[%s11 + $0x330] sm:$0xff]
    %v5698 = vld [vmem:[%s11 + $0x338] sm:$0xff]
    %v5699 = vld [vmem:[%s11 + $0x340] sm:$0xff]
    %v5700 = vld [vmem:[%s11 + $0x348] sm:$0xff]
    %v5701 = vld [vmem:[%s11 + $0x350] sm:$0xff]
    %v5702 = vld [vmem:[%s11 + $0x358] sm:$0xff]
    %v5703 = vld [vmem:[%s11 + $0x360] sm:$0xff]
    %v5704 = vld [vmem:[%s11 + $0x368] sm:$0xff]
    %v5705 = vld [vmem:[%s11 + $0x370] sm:$0xff]
    %v5706 = vld [vmem:[%s11 + $0x378] sm:$0xff]
    %v5707 = vld [vmem:[%s11 + $0x380] sm:$0xff]
    %v5708 = vld [vmem:[%s11 + $0x388] sm:$0xff]
    %v5709 = vld [vmem:[%s11 + $0x390] sm:$0xff]
    %v5710 = vld [vmem:[%s11 + $0x398] sm:$0xff]
    %v5711 = vld [vmem:[%s11 + $0x3a0] sm:$0xff]
    %v5712 = vld [vmem:[%s11 + $0x3a8] sm:$0xff]
    %v5713 = vld [vmem:[%s11 + $0x3b0] sm:$0xff]
    %v5714 = vld [vmem:[%s11 + $0x3b8] sm:$0xff]
    %v5715 = vld [vmem:[%s11 + $0x3c0] sm:$0xff]
    %v5716 = vld [vmem:[%s11 + $0x3c8] sm:$0xff]
    %v5717 = vld [vmem:[%s11 + $0x3d0] sm:$0xff]
    %v5718 = vld [vmem:[%s11 + $0x3d8] sm:$0xff]
    %v5719 = vld [vmem:[%s11 + $0x3e0] sm:$0xff]
    %v5720 = vld [vmem:[%s11 + $0x3e8] sm:$0xff]
    %v5721 = vld [vmem:[%s11 + $0x3f0] sm:$0xff]
    %v5722 = vld [vmem:[%s11 + $0x3f8] sm:$0xff]
    %v5723 = vld [vmem:[%s12] sm:$0x3]
    %v5725 = vperm.slane %v5723, 0
    %v5726 = vperm.slane %v5723, 1
    %v5857 = vunpack.c.l.b16 %v5595
    %v5858 = vunpack.c.h.b16 %v5595
    %v5859 = vunpack.c.l.b16 %v5596
    %v5860 = vunpack.c.h.b16 %v5596
    %v5861 = vunpack.c.l.b16 %v5597
    %v5862 = vunpack.c.h.b16 %v5597
    %v5863 = vunpack.c.l.b16 %v5598
    %v5864 = vunpack.c.h.b16 %v5598
    %v5865 = vunpack.c.l.b16 %v5599
    %v5866 = vunpack.c.h.b16 %v5599
    %v5867 = vunpack.c.l.b16 %v5600
    %v5868 = vunpack.c.h.b16 %v5600
    %v5869 = vunpack.c.l.b16 %v5601
    %v5870 = vunpack.c.h.b16 %v5601
    %v5871 = vunpack.c.l.b16 %v5602
    %v5872 = vunpack.c.h.b16 %v5602
    %v5873 = vunpack.c.l.b16 %v5603
    %v5874 = vunpack.c.h.b16 %v5603
    %v5875 = vunpack.c.l.b16 %v5604
    %v5876 = vunpack.c.h.b16 %v5604
    %v5877 = vunpack.c.l.b16 %v5605
    %v5878 = vunpack.c.h.b16 %v5605
    %v5879 = vunpack.c.l.b16 %v5606
    %v5880 = vunpack.c.h.b16 %v5606
    %v5881 = vunpack.c.l.b16 %v5607
    %v5882 = vunpack.c.h.b16 %v5607
    %v5883 = vunpack.c.l.b16 %v5608
    %v5884 = vunpack.c.h.b16 %v5608
    %v5885 = vunpack.c.l.b16 %v5609
    %v5886 = vunpack.c.h.b16 %v5609
    %v5887 = vunpack.c.l.b16 %v5610
    %v5888 = vunpack.c.h.b16 %v5610
    %v5889 = vunpack.c.l.b16 %v5611
    %v5890 = vunpack.c.h.b16 %v5611
    %v5891 = vunpack.c.l.b16 %v5612
    %v5892 = vunpack.c.h.b16 %v5612
    %v5893 = vunpack.c.l.b16 %v5613
    %v5894 = vunpack.c.h.b16 %v5613
    %v5895 = vunpack.c.l.b16 %v5614
    %v5896 = vunpack.c.h.b16 %v5614
    %v5897 = vunpack.c.l.b16 %v5615
    %v5898 = vunpack.c.h.b16 %v5615
    %v5899 = vunpack.c.l.b16 %v5616
    %v5900 = vunpack.c.h.b16 %v5616
    %v5901 = vunpack.c.l.b16 %v5617
    %v5902 = vunpack.c.h.b16 %v5617
    %v5903 = vunpack.c.l.b16 %v5618
    %v5904 = vunpack.c.h.b16 %v5618
    %v5905 = vunpack.c.l.b16 %v5619
    %v5906 = vunpack.c.h.b16 %v5619
    %v5907 = vunpack.c.l.b16 %v5620
    %v5908 = vunpack.c.h.b16 %v5620
    %v5909 = vunpack.c.l.b16 %v5621
    %v5910 = vunpack.c.h.b16 %v5621
    %v5911 = vunpack.c.l.b16 %v5622
    %v5912 = vunpack.c.h.b16 %v5622
    %v5913 = vunpack.c.l.b16 %v5623
    %v5914 = vunpack.c.h.b16 %v5623
    %v5915 = vunpack.c.l.b16 %v5624
    %v5916 = vunpack.c.h.b16 %v5624
    %v5917 = vunpack.c.l.b16 %v5625
    %v5918 = vunpack.c.h.b16 %v5625
    %v5919 = vunpack.c.l.b16 %v5626
    %v5920 = vunpack.c.h.b16 %v5626
    %v5921 = vunpack.c.l.b16 %v5627
    %v5922 = vunpack.c.h.b16 %v5627
    %v5923 = vunpack.c.l.b16 %v5628
    %v5924 = vunpack.c.h.b16 %v5628
    %v5925 = vunpack.c.l.b16 %v5629
    %v5926 = vunpack.c.h.b16 %v5629
    %v5927 = vunpack.c.l.b16 %v5630
    %v5928 = vunpack.c.h.b16 %v5630
    %v5929 = vunpack.c.l.b16 %v5631
    %v5930 = vunpack.c.h.b16 %v5631
    %v5931 = vunpack.c.l.b16 %v5632
    %v5932 = vunpack.c.h.b16 %v5632
    %v5933 = vunpack.c.l.b16 %v5633
    %v5934 = vunpack.c.h.b16 %v5633
    %v5935 = vunpack.c.l.b16 %v5634
    %v5936 = vunpack.c.h.b16 %v5634
    %v5937 = vunpack.c.l.b16 %v5635
    %v5938 = vunpack.c.h.b16 %v5635
    %v5939 = vunpack.c.l.b16 %v5636
    %v5940 = vunpack.c.h.b16 %v5636
    %v5941 = vunpack.c.l.b16 %v5637
    %v5942 = vunpack.c.h.b16 %v5637
    %v5943 = vunpack.c.l.b16 %v5638
    %v5944 = vunpack.c.h.b16 %v5638
    %v5945 = vunpack.c.l.b16 %v5639
    %v5946 = vunpack.c.h.b16 %v5639
    %v5947 = vunpack.c.l.b16 %v5640
    %v5948 = vunpack.c.h.b16 %v5640
    %v5949 = vunpack.c.l.b16 %v5641
    %v5950 = vunpack.c.h.b16 %v5641
    %v5951 = vunpack.c.l.b16 %v5642
    %v5952 = vunpack.c.h.b16 %v5642
    %v5953 = vunpack.c.l.b16 %v5643
    %v5954 = vunpack.c.h.b16 %v5643
    %v5955 = vunpack.c.l.b16 %v5644
    %v5956 = vunpack.c.h.b16 %v5644
    %v5957 = vunpack.c.l.b16 %v5645
    %v5958 = vunpack.c.h.b16 %v5645
    %v5959 = vunpack.c.l.b16 %v5646
    %v5960 = vunpack.c.h.b16 %v5646
    %v5961 = vunpack.c.l.b16 %v5647
    %v5962 = vunpack.c.h.b16 %v5647
    %v5963 = vunpack.c.l.b16 %v5648
    %v5964 = vunpack.c.h.b16 %v5648
    %v5965 = vunpack.c.l.b16 %v5649
    %v5966 = vunpack.c.h.b16 %v5649
    %v5967 = vunpack.c.l.b16 %v5650
    %v5968 = vunpack.c.h.b16 %v5650
    %v5969 = vunpack.c.l.b16 %v5651
    %v5970 = vunpack.c.h.b16 %v5651
    %v5971 = vunpack.c.l.b16 %v5652
    %v5972 = vunpack.c.h.b16 %v5652
    %v5973 = vunpack.c.l.b16 %v5653
    %v5974 = vunpack.c.h.b16 %v5653
    %v5975 = vunpack.c.l.b16 %v5654
    %v5976 = vunpack.c.h.b16 %v5654
    %v5977 = vunpack.c.l.b16 %v5655
    %v5978 = vunpack.c.h.b16 %v5655
    %v5979 = vunpack.c.l.b16 %v5656
    %v5980 = vunpack.c.h.b16 %v5656
    %v5981 = vunpack.c.l.b16 %v5657
    %v5982 = vunpack.c.h.b16 %v5657
    %v5983 = vunpack.c.l.b16 %v5658
    %v5984 = vunpack.c.h.b16 %v5658
    %v5985 = vunpack.c.l.b16 %v5659
    %v5986 = vunpack.c.h.b16 %v5659
    %v5987 = vunpack.c.l.b16 %v5660
    %v5988 = vunpack.c.h.b16 %v5660
    %v5989 = vunpack.c.l.b16 %v5661
    %v5990 = vunpack.c.h.b16 %v5661
    %v5991 = vunpack.c.l.b16 %v5662
    %v5992 = vunpack.c.h.b16 %v5662
    %v5993 = vunpack.c.l.b16 %v5663
    %v5994 = vunpack.c.h.b16 %v5663
    %v5995 = vunpack.c.l.b16 %v5664
    %v5996 = vunpack.c.h.b16 %v5664
    %v5997 = vunpack.c.l.b16 %v5665
    %v5998 = vunpack.c.h.b16 %v5665
    %v5999 = vunpack.c.l.b16 %v5666
    %v6000 = vunpack.c.h.b16 %v5666
    %v6001 = vunpack.c.l.b16 %v5667
    %v6002 = vunpack.c.h.b16 %v5667
    %v6003 = vunpack.c.l.b16 %v5668
    %v6004 = vunpack.c.h.b16 %v5668
    %v6005 = vunpack.c.l.b16 %v5669
    %v6006 = vunpack.c.h.b16 %v5669
    %v6007 = vunpack.c.l.b16 %v5670
    %v6008 = vunpack.c.h.b16 %v5670
    %v6009 = vunpack.c.l.b16 %v5671
    %v6010 = vunpack.c.h.b16 %v5671
    %v6011 = vunpack.c.l.b16 %v5672
    %v6012 = vunpack.c.h.b16 %v5672
    %v6013 = vunpack.c.l.b16 %v5673
    %v6014 = vunpack.c.h.b16 %v5673
    %v6015 = vunpack.c.l.b16 %v5674
    %v6016 = vunpack.c.h.b16 %v5674
    %v6017 = vunpack.c.l.b16 %v5675
    %v6018 = vunpack.c.h.b16 %v5675
    %v6019 = vunpack.c.l.b16 %v5676
    %v6020 = vunpack.c.h.b16 %v5676
    %v6021 = vunpack.c.l.b16 %v5677
    %v6022 = vunpack.c.h.b16 %v5677
    %v6023 = vunpack.c.l.b16 %v5678
    %v6024 = vunpack.c.h.b16 %v5678
    %v6025 = vunpack.c.l.b16 %v5679
    %v6026 = vunpack.c.h.b16 %v5679
    %v6027 = vunpack.c.l.b16 %v5680
    %v6028 = vunpack.c.h.b16 %v5680
    %v6029 = vunpack.c.l.b16 %v5681
    %v6030 = vunpack.c.h.b16 %v5681
    %v6031 = vunpack.c.l.b16 %v5682
    %v6032 = vunpack.c.h.b16 %v5682
    %v6033 = vunpack.c.l.b16 %v5683
    %v6034 = vunpack.c.h.b16 %v5683
    %v6035 = vunpack.c.l.b16 %v5684
    %v6036 = vunpack.c.h.b16 %v5684
    %v6037 = vunpack.c.l.b16 %v5685
    %v6038 = vunpack.c.h.b16 %v5685
    %v6039 = vunpack.c.l.b16 %v5686
    %v6040 = vunpack.c.h.b16 %v5686
    %v6041 = vunpack.c.l.b16 %v5687
    %v6042 = vunpack.c.h.b16 %v5687
    %v6043 = vunpack.c.l.b16 %v5688
    %v6044 = vunpack.c.h.b16 %v5688
    %v6045 = vunpack.c.l.b16 %v5689
    %v6046 = vunpack.c.h.b16 %v5689
    %v6047 = vunpack.c.l.b16 %v5690
    %v6048 = vunpack.c.h.b16 %v5690
    %v6049 = vunpack.c.l.b16 %v5691
    %v6050 = vunpack.c.h.b16 %v5691
    %v6051 = vunpack.c.l.b16 %v5692
    %v6052 = vunpack.c.h.b16 %v5692
    %v6053 = vunpack.c.l.b16 %v5693
    %v6054 = vunpack.c.h.b16 %v5693
    %v6055 = vunpack.c.l.b16 %v5694
    %v6056 = vunpack.c.h.b16 %v5694
    %v6057 = vunpack.c.l.b16 %v5695
    %v6058 = vunpack.c.h.b16 %v5695
    %v6059 = vunpack.c.l.b16 %v5696
    %v6060 = vunpack.c.h.b16 %v5696
    %v6061 = vunpack.c.l.b16 %v5697
    %v6062 = vunpack.c.h.b16 %v5697
    %v6063 = vunpack.c.l.b16 %v5698
    %v6064 = vunpack.c.h.b16 %v5698
    %v6065 = vunpack.c.l.b16 %v5699
    %v6066 = vunpack.c.h.b16 %v5699
    %v6067 = vunpack.c.l.b16 %v5700
    %v6068 = vunpack.c.h.b16 %v5700
    %v6069 = vunpack.c.l.b16 %v5701
    %v6070 = vunpack.c.h.b16 %v5701
    %v6071 = vunpack.c.l.b16 %v5702
    %v6072 = vunpack.c.h.b16 %v5702
    %v6073 = vunpack.c.l.b16 %v5703
    %v6074 = vunpack.c.h.b16 %v5703
    %v6075 = vunpack.c.l.b16 %v5704
    %v6076 = vunpack.c.h.b16 %v5704
    %v6077 = vunpack.c.l.b16 %v5705
    %v6078 = vunpack.c.h.b16 %v5705
    %v6079 = vunpack.c.l.b16 %v5706
    %v6080 = vunpack.c.h.b16 %v5706
    %v6081 = vunpack.c.l.b16 %v5707
    %v6082 = vunpack.c.h.b16 %v5707
    %v6083 = vunpack.c.l.b16 %v5708
    %v6084 = vunpack.c.h.b16 %v5708
    %v6085 = vunpack.c.l.b16 %v5709
    %v6086 = vunpack.c.h.b16 %v5709
    %v6087 = vunpack.c.l.b16 %v5710
    %v6088 = vunpack.c.h.b16 %v5710
    %v6089 = vunpack.c.l.b16 %v5711
    %v6090 = vunpack.c.h.b16 %v5711
    %v6091 = vunpack.c.l.b16 %v5712
    %v6092 = vunpack.c.h.b16 %v5712
    %v6093 = vunpack.c.l.b16 %v5713
    %v6094 = vunpack.c.h.b16 %v5713
    %v6095 = vunpack.c.l.b16 %v5714
    %v6096 = vunpack.c.h.b16 %v5714
    %v6097 = vunpack.c.l.b16 %v5715
    %v6098 = vunpack.c.h.b16 %v5715
    %v6099 = vunpack.c.l.b16 %v5716
    %v6100 = vunpack.c.h.b16 %v5716
    %v6101 = vunpack.c.l.b16 %v5717
    %v6102 = vunpack.c.h.b16 %v5717
    %v6103 = vunpack.c.l.b16 %v5718
    %v6104 = vunpack.c.h.b16 %v5718
    %v6105 = vunpack.c.l.b16 %v5719
    %v6106 = vunpack.c.h.b16 %v5719
    %v6107 = vunpack.c.l.b16 %v5720
    %v6108 = vunpack.c.h.b16 %v5720
    %v6109 = vunpack.c.l.b16 %v5721
    %v6110 = vunpack.c.h.b16 %v5721
    %v6111 = vunpack.c.l.b16 %v5722
    %v6112 = vunpack.c.h.b16 %v5722
    %v6113 = vpack.c.b16 %v5859, %v5857
    %v6114 = vpack.c.b16 %v5860, %v5858
    %v6115 = vpack.c.b16 %v5863, %v5861
    %v6116 = vpack.c.b16 %v5864, %v5862
    %v6117 = vpack.c.b16 %v5867, %v5865
    %v6118 = vpack.c.b16 %v5868, %v5866
    %v6119 = vpack.c.b16 %v5871, %v5869
    %v6120 = vpack.c.b16 %v5872, %v5870
    %v6121 = vpack.c.b16 %v5875, %v5873
    %v6122 = vpack.c.b16 %v5876, %v5874
    %v6123 = vpack.c.b16 %v5879, %v5877
    %v6124 = vpack.c.b16 %v5880, %v5878
    %v6125 = vpack.c.b16 %v5883, %v5881
    %v6126 = vpack.c.b16 %v5884, %v5882
    %v6127 = vpack.c.b16 %v5887, %v5885
    %v6128 = vpack.c.b16 %v5888, %v5886
    %v6129 = vpack.c.b16 %v5891, %v5889
    %v6130 = vpack.c.b16 %v5892, %v5890
    %v6131 = vpack.c.b16 %v5895, %v5893
    %v6132 = vpack.c.b16 %v5896, %v5894
    %v6133 = vpack.c.b16 %v5899, %v5897
    %v6134 = vpack.c.b16 %v5900, %v5898
    %v6135 = vpack.c.b16 %v5903, %v5901
    %v6136 = vpack.c.b16 %v5904, %v5902
    %v6137 = vpack.c.b16 %v5907, %v5905
    %v6138 = vpack.c.b16 %v5908, %v5906
    %v6139 = vpack.c.b16 %v5911, %v5909
    %v6140 = vpack.c.b16 %v5912, %v5910
    %v6141 = vpack.c.b16 %v5915, %v5913
    %v6142 = vpack.c.b16 %v5916, %v5914
    %v6143 = vpack.c.b16 %v5919, %v5917
    %v6144 = vpack.c.b16 %v5920, %v5918
    %v6145 = vpack.c.b16 %v5923, %v5921
    %v6146 = vpack.c.b16 %v5924, %v5922
    %v6147 = vpack.c.b16 %v5927, %v5925
    %v6148 = vpack.c.b16 %v5928, %v5926
    %v6149 = vpack.c.b16 %v5931, %v5929
    %v6150 = vpack.c.b16 %v5932, %v5930
    %v6151 = vpack.c.b16 %v5935, %v5933
    %v6152 = vpack.c.b16 %v5936, %v5934
    %v6153 = vpack.c.b16 %v5939, %v5937
    %v6154 = vpack.c.b16 %v5940, %v5938
    %v6155 = vpack.c.b16 %v5943, %v5941
    %v6156 = vpack.c.b16 %v5944, %v5942
    %v6157 = vpack.c.b16 %v5947, %v5945
    %v6158 = vpack.c.b16 %v5948, %v5946
    %v6159 = vpack.c.b16 %v5951, %v5949
    %v6160 = vpack.c.b16 %v5952, %v5950
    %v6161 = vpack.c.b16 %v5955, %v5953
    %v6162 = vpack.c.b16 %v5956, %v5954
    %v6163 = vpack.c.b16 %v5959, %v5957
    %v6164 = vpack.c.b16 %v5960, %v5958
    %v6165 = vpack.c.b16 %v5963, %v5961
    %v6166 = vpack.c.b16 %v5964, %v5962
    %v6167 = vpack.c.b16 %v5967, %v5965
    %v6168 = vpack.c.b16 %v5968, %v5966
    %v6169 = vpack.c.b16 %v5971, %v5969
    %v6170 = vpack.c.b16 %v5972, %v5970
    %v6171 = vpack.c.b16 %v5975, %v5973
    %v6172 = vpack.c.b16 %v5976, %v5974
    %v6173 = vpack.c.b16 %v5979, %v5977
    %v6174 = vpack.c.b16 %v5980, %v5978
    %v6175 = vpack.c.b16 %v5983, %v5981
    %v6176 = vpack.c.b16 %v5984, %v5982
    %v6177 = vpack.c.b16 %v5987, %v5985
    %v6178 = vpack.c.b16 %v5988, %v5986
    %v6179 = vpack.c.b16 %v5991, %v5989
    %v6180 = vpack.c.b16 %v5992, %v5990
    %v6181 = vpack.c.b16 %v5995, %v5993
    %v6182 = vpack.c.b16 %v5996, %v5994
    %v6183 = vpack.c.b16 %v5999, %v5997
    %v6184 = vpack.c.b16 %v6000, %v5998
    %v6185 = vpack.c.b16 %v6003, %v6001
    %v6186 = vpack.c.b16 %v6004, %v6002
    %v6187 = vpack.c.b16 %v6007, %v6005
    %v6188 = vpack.c.b16 %v6008, %v6006
    %v6189 = vpack.c.b16 %v6011, %v6009
    %v6190 = vpack.c.b16 %v6012, %v6010
    %v6191 = vpack.c.b16 %v6015, %v6013
    %v6192 = vpack.c.b16 %v6016, %v6014
    %v6193 = vpack.c.b16 %v6019, %v6017
    %v6194 = vpack.c.b16 %v6020, %v6018
    %v6195 = vpack.c.b16 %v6023, %v6021
    %v6196 = vpack.c.b16 %v6024, %v6022
    %v6197 = vpack.c.b16 %v6027, %v6025
    %v6198 = vpack.c.b16 %v6028, %v6026
    %v6199 = vpack.c.b16 %v6031, %v6029
    %v6200 = vpack.c.b16 %v6032, %v6030
    %v6201 = vpack.c.b16 %v6035, %v6033
    %v6202 = vpack.c.b16 %v6036, %v6034
    %v6203 = vpack.c.b16 %v6039, %v6037
    %v6204 = vpack.c.b16 %v6040, %v6038
    %v6205 = vpack.c.b16 %v6043, %v6041
    %v6206 = vpack.c.b16 %v6044, %v6042
    %v6207 = vpack.c.b16 %v6047, %v6045
    %v6208 = vpack.c.b16 %v6048, %v6046
    %v6209 = vpack.c.b16 %v6051, %v6049
    %v6210 = vpack.c.b16 %v6052, %v6050
    %v6211 = vpack.c.b16 %v6055, %v6053
    %v6212 = vpack.c.b16 %v6056, %v6054
    %v6213 = vpack.c.b16 %v6059, %v6057
    %v6214 = vpack.c.b16 %v6060, %v6058
    %v6215 = vpack.c.b16 %v6063, %v6061
    %v6216 = vpack.c.b16 %v6064, %v6062
    %v6217 = vpack.c.b16 %v6067, %v6065
    %v6218 = vpack.c.b16 %v6068, %v6066
    %v6219 = vpack.c.b16 %v6071, %v6069
    %v6220 = vpack.c.b16 %v6072, %v6070
    %v6221 = vpack.c.b16 %v6075, %v6073
    %v6222 = vpack.c.b16 %v6076, %v6074
    %v6223 = vpack.c.b16 %v6079, %v6077
    %v6224 = vpack.c.b16 %v6080, %v6078
    %v6225 = vpack.c.b16 %v6083, %v6081
    %v6226 = vpack.c.b16 %v6084, %v6082
    %v6227 = vpack.c.b16 %v6087, %v6085
    %v6228 = vpack.c.b16 %v6088, %v6086
    %v6229 = vpack.c.b16 %v6091, %v6089
    %v6230 = vpack.c.b16 %v6092, %v6090
    %v6231 = vpack.c.b16 %v6095, %v6093
    %v6232 = vpack.c.b16 %v6096, %v6094
    %v6233 = vpack.c.b16 %v6099, %v6097
    %v6234 = vpack.c.b16 %v6100, %v6098
    %v6235 = vpack.c.b16 %v6103, %v6101
    %v6236 = vpack.c.b16 %v6104, %v6102
    %v6237 = vpack.c.b16 %v6107, %v6105
    %v6238 = vpack.c.b16 %v6108, %v6106
    %v6239 = vpack.c.b16 %v6111, %v6109
    %v6240 = vpack.c.b16 %v6112, %v6110
    %6369 = vmatpush.bf16.msra.mxu0 %v6127
    %6370 = vmatpush.bf16.msra.mxu0 %v6125
    %6371 = vmatpush.bf16.msra.mxu0 %v6123
    %6372 = vmatpush.bf16.msra.mxu0 %v6121
    %6373 = vmatpush.bf16.msra.mxu0 %v6119
    %6374 = vmatpush.bf16.msra.mxu0 %v6117
    %6375 = vmatpush.bf16.msra.mxu0 %v6115
    %6376 = vmatpush.bf16.msra.mxu0 %v6113
    %6377 = vmatmul.bf16.gmra.mxu0 %v5587
    %v6378 = vpop.f32.mrf.mxu0
    %v6379 = vadd.f32 %v5725, %v6378
    %v6380 = vpop.f32.mrf.mxu0
    %6381 = vdwg.mxu0
    %6382 = vmatpush.bf16.msra.mxu0 %v6143
    %6383 = vmatpush.bf16.msra.mxu0 %v6141
    %6384 = vmatpush.bf16.msra.mxu0 %v6139
    %6385 = vmatpush.bf16.msra.mxu0 %v6137
    %6386 = vmatpush.bf16.msra.mxu0 %v6135
    %6387 = vmatpush.bf16.msra.mxu0 %v6133
    %6388 = vmatpush.bf16.msra.mxu0 %v6131
    %6389 = vmatpush.bf16.msra.mxu0 %v6129
    %6390 = vmatmul.bf16.gmra.mxu0 %v5588
    %v6391 = vpop.f32.mrf.mxu0
    %v6392 = vadd.f32 %v6379, %v6391
    %v6393 = vpop.f32.mrf.mxu0
    %6394 = vdwg.mxu0
    %6395 = vmatpush.bf16.msra.mxu0 %v6159
    %6396 = vmatpush.bf16.msra.mxu0 %v6157
    %6397 = vmatpush.bf16.msra.mxu0 %v6155
    %6398 = vmatpush.bf16.msra.mxu0 %v6153
    %6399 = vmatpush.bf16.msra.mxu0 %v6151
    %6400 = vmatpush.bf16.msra.mxu0 %v6149
    %6401 = vmatpush.bf16.msra.mxu0 %v6147
    %6402 = vmatpush.bf16.msra.mxu0 %v6145
    %6403 = vmatmul.bf16.gmra.mxu0 %v5589
    %v6404 = vpop.f32.mrf.mxu0
    %v6405 = vadd.f32 %v6392, %v6404
    %v6406 = vpop.f32.mrf.mxu0
    %6407 = vdwg.mxu0
    %6408 = vmatpush.bf16.msra.mxu0 %v6175
    %6409 = vmatpush.bf16.msra.mxu0 %v6173
    %6410 = vmatpush.bf16.msra.mxu0 %v6171
    %6411 = vmatpush.bf16.msra.mxu0 %v6169
    %6412 = vmatpush.bf16.msra.mxu0 %v6167
    %6413 = vmatpush.bf16.msra.mxu0 %v6165
    %6414 = vmatpush.bf16.msra.mxu0 %v6163
    %6415 = vmatpush.bf16.msra.mxu0 %v6161
    %6416 = vmatmul.bf16.gmra.mxu0 %v5590
    %v6417 = vpop.f32.mrf.mxu0
    %v6418 = vadd.f32 %v6405, %v6417
    %v6419 = vpop.f32.mrf.mxu0
    %6420 = vdwg.mxu0
    %6421 = vmatpush.bf16.msra.mxu0 %v6191
    %6422 = vmatpush.bf16.msra.mxu0 %v6189
    %6423 = vmatpush.bf16.msra.mxu0 %v6187
    %6424 = vmatpush.bf16.msra.mxu0 %v6185
    %6425 = vmatpush.bf16.msra.mxu0 %v6183
    %6426 = vmatpush.bf16.msra.mxu0 %v6181
    %6427 = vmatpush.bf16.msra.mxu0 %v6179
    %6428 = vmatpush.bf16.msra.mxu0 %v6177
    %6429 = vmatmul.bf16.gmra.mxu0 %v5591
    %v6430 = vpop.f32.mrf.mxu0
    %v6431 = vadd.f32 %v6418, %v6430
    %v6432 = vpop.f32.mrf.mxu0
    %6433 = vdwg.mxu0
    %6434 = vmatpush.bf16.msra.mxu0 %v6207
    %6435 = vmatpush.bf16.msra.mxu0 %v6205
    %6436 = vmatpush.bf16.msra.mxu0 %v6203
    %6437 = vmatpush.bf16.msra.mxu0 %v6201
    %6438 = vmatpush.bf16.msra.mxu0 %v6199
    %6439 = vmatpush.bf16.msra.mxu0 %v6197
    %6440 = vmatpush.bf16.msra.mxu0 %v6195
    %6441 = vmatpush.bf16.msra.mxu0 %v6193
    %6442 = vmatmul.bf16.gmra.mxu0 %v5592
    %v6443 = vpop.f32.mrf.mxu0
    %v6444 = vadd.f32 %v6431, %v6443
    %v6445 = vpop.f32.mrf.mxu0
    %6446 = vdwg.mxu0
    %6447 = vmatpush.bf16.msra.mxu0 %v6223
    %6448 = vmatpush.bf16.msra.mxu0 %v6221
    %6449 = vmatpush.bf16.msra.mxu0 %v6219
    %6450 = vmatpush.bf16.msra.mxu0 %v6217
    %6451 = vmatpush.bf16.msra.mxu0 %v6215
    %6452 = vmatpush.bf16.msra.mxu0 %v6213
    %6453 = vmatpush.bf16.msra.mxu0 %v6211
    %6454 = vmatpush.bf16.msra.mxu0 %v6209
    %6455 = vmatmul.bf16.gmra.mxu0 %v5593
    %v6456 = vpop.f32.mrf.mxu0
    %v6457 = vadd.f32 %v6444, %v6456
    %v6458 = vpop.f32.mrf.mxu0
    %6459 = vdwg.mxu0
    %6460 = vmatpush.bf16.msra.mxu0 %v6239
    %6461 = vmatpush.bf16.msra.mxu0 %v6237
    %6462 = vmatpush.bf16.msra.mxu0 %v6235
    %6463 = vmatpush.bf16.msra.mxu0 %v6233
    %6464 = vmatpush.bf16.msra.mxu0 %v6231
    %6465 = vmatpush.bf16.msra.mxu0 %v6229
    %6466 = vmatpush.bf16.msra.mxu0 %v6227
    %6467 = vmatpush.bf16.msra.mxu0 %v6225
    %6468 = vmatmul.bf16.gmra.mxu0 %v5594
    %v6469 = vpop.f32.mrf.mxu0
    %v6470 = vadd.f32 %v6457, %v6469
    %v6471 = vpop.f32.mrf.mxu0
    %6472 = vdwg.mxu0
    %6473 = vmatpush.bf16.msra.mxu0 %v6128
    %6474 = vmatpush.bf16.msra.mxu0 %v6126
    %6475 = vmatpush.bf16.msra.mxu0 %v6124
    %6476 = vmatpush.bf16.msra.mxu0 %v6122
    %6477 = vmatpush.bf16.msra.mxu0 %v6120
    %6478 = vmatpush.bf16.msra.mxu0 %v6118
    %6479 = vmatpush.bf16.msra.mxu0 %v6116
    %6480 = vmatpush.bf16.msra.mxu0 %v6114
    %6481 = vmatmul.bf16.gmra.mxu0 %v5587
    %v6482 = vpop.f32.mrf.mxu0
    %v6483 = vadd.f32 %v5726, %v6482
    %v6484 = vpop.f32.mrf.mxu0
    %6485 = vdwg.mxu0
    %6486 = vmatpush.bf16.msra.mxu0 %v6144
    %6487 = vmatpush.bf16.msra.mxu0 %v6142
    %6488 = vmatpush.bf16.msra.mxu0 %v6140
    %6489 = vmatpush.bf16.msra.mxu0 %v6138
    %6490 = vmatpush.bf16.msra.mxu0 %v6136
    %6491 = vmatpush.bf16.msra.mxu0 %v6134
    %6492 = vmatpush.bf16.msra.mxu0 %v6132
    %6493 = vmatpush.bf16.msra.mxu0 %v6130
    %6494 = vmatmul.bf16.gmra.mxu0 %v5588
    %v6495 = vpop.f32.mrf.mxu0
    %v6496 = vadd.f32 %v6483, %v6495
    %v6497 = vpop.f32.mrf.mxu0
    %6498 = vdwg.mxu0
    %6499 = vmatpush.bf16.msra.mxu0 %v6160
    %6500 = vmatpush.bf16.msra.mxu0 %v6158
    %6501 = vmatpush.bf16.msra.mxu0 %v6156
    %6502 = vmatpush.bf16.msra.mxu0 %v6154
    %6503 = vmatpush.bf16.msra.mxu0 %v6152
    %6504 = vmatpush.bf16.msra.mxu0 %v6150
    %6505 = vmatpush.bf16.msra.mxu0 %v6148
    %6506 = vmatpush.bf16.msra.mxu0 %v6146
    %6507 = vmatmul.bf16.gmra.mxu0 %v5589
    %v6508 = vpop.f32.mrf.mxu0
    %v6509 = vadd.f32 %v6496, %v6508
    %v6510 = vpop.f32.mrf.mxu0
    %6511 = vdwg.mxu0
    %6512 = vmatpush.bf16.msra.mxu0 %v6176
    %6513 = vmatpush.bf16.msra.mxu0 %v6174
    %6514 = vmatpush.bf16.msra.mxu0 %v6172
    %6515 = vmatpush.bf16.msra.mxu0 %v6170
    %6516 = vmatpush.bf16.msra.mxu0 %v6168
    %6517 = vmatpush.bf16.msra.mxu0 %v6166
    %6518 = vmatpush.bf16.msra.mxu0 %v6164
    %6519 = vmatpush.bf16.msra.mxu0 %v6162
    %6520 = vmatmul.bf16.gmra.mxu0 %v5590
    %v6521 = vpop.f32.mrf.mxu0
    %v6522 = vadd.f32 %v6509, %v6521
    %v6523 = vpop.f32.mrf.mxu0
    %6524 = vdwg.mxu0
    %6525 = vmatpush.bf16.msra.mxu0 %v6192
    %6526 = vmatpush.bf16.msra.mxu0 %v6190
    %6527 = vmatpush.bf16.msra.mxu0 %v6188
    %6528 = vmatpush.bf16.msra.mxu0 %v6186
    %6529 = vmatpush.bf16.msra.mxu0 %v6184
    %6530 = vmatpush.bf16.msra.mxu0 %v6182
    %6531 = vmatpush.bf16.msra.mxu0 %v6180
    %6532 = vmatpush.bf16.msra.mxu0 %v6178
    %6533 = vmatmul.bf16.gmra.mxu0 %v5591
    %v6534 = vpop.f32.mrf.mxu0
    %v6535 = vadd.f32 %v6522, %v6534
    %v6536 = vpop.f32.mrf.mxu0
    %6537 = vdwg.mxu0
    %6538 = vmatpush.bf16.msra.mxu0 %v6208
    %6539 = vmatpush.bf16.msra.mxu0 %v6206
    %6540 = vmatpush.bf16.msra.mxu0 %v6204
    %6541 = vmatpush.bf16.msra.mxu0 %v6202
    %6542 = vmatpush.bf16.msra.mxu0 %v6200
    %6543 = vmatpush.bf16.msra.mxu0 %v6198
    %6544 = vmatpush.bf16.msra.mxu0 %v6196
    %6545 = vmatpush.bf16.msra.mxu0 %v6194
    %6546 = vmatmul.bf16.gmra.mxu0 %v5592
    %v6547 = vpop.f32.mrf.mxu0
    %v6548 = vadd.f32 %v6535, %v6547
    %v6549 = vpop.f32.mrf.mxu0
    %6550 = vdwg.mxu0
    %6551 = vmatpush.bf16.msra.mxu0 %v6224
    %6552 = vmatpush.bf16.msra.mxu0 %v6222
    %6553 = vmatpush.bf16.msra.mxu0 %v6220
    %6554 = vmatpush.bf16.msra.mxu0 %v6218
    %6555 = vmatpush.bf16.msra.mxu0 %v6216
    %6556 = vmatpush.bf16.msra.mxu0 %v6214
    %6557 = vmatpush.bf16.msra.mxu0 %v6212
    %6558 = vmatpush.bf16.msra.mxu0 %v6210
    %6559 = vmatmul.bf16.gmra.mxu0 %v5593
    %v6560 = vpop.f32.mrf.mxu0
    %v6561 = vadd.f32 %v6548, %v6560
    %v6562 = vpop.f32.mrf.mxu0
    %6563 = vdwg.mxu0
    %6564 = vmatpush.bf16.msra.mxu0 %v6240
    %6565 = vmatpush.bf16.msra.mxu0 %v6238
    %6566 = vmatpush.bf16.msra.mxu0 %v6236
    %6567 = vmatpush.bf16.msra.mxu0 %v6234
    %6568 = vmatpush.bf16.msra.mxu0 %v6232
    %6569 = vmatpush.bf16.msra.mxu0 %v6230
    %6570 = vmatpush.bf16.msra.mxu0 %v6228
    %6571 = vmatpush.bf16.msra.mxu0 %v6226
    %6572 = vmatmul.bf16.gmra.mxu0 %v5594
    %v6573 = vpop.f32.mrf.mxu0
    %v6574 = vadd.f32 %v6561, %v6573
    %v6575 = vpop.f32.mrf.mxu0
    %6576 = vdwg.mxu0
    %v6577 = vpack.c.bf16 %v6574, %v6470
    %6578 = vst [vmem:[#allocation2] sm:$0xff] %v6577
    // Predicated region
    $region54: #{autoencoder_forward.1} parent=1 // pred_check
      _
    $region55: #{autoencoder_forward.1} parent=1 // pred_check_branch
      %6580 = sbr.rel (0) target = $region57
    $region56: #{autoencoder_forward.1} parent=1 // pred_region
      %6582 = vsyncadd [#allocation3], 0
      %s6584 = sshll.u32 [#allocation2], 4
      %s6585 = int_to_ptr.vmem [resolvable:$true] %s6584
      %s6586 = sshll.u32 %s13, 4
      %s6587 = int_to_ptr.hbm [resolvable:$true] %s6586
      %6589 = dma.vmem_to_hbm [thread:$0]  %s6585, 128, %s6587, [#allocation3]
    $region57: #{autoencoder_forward.1} parent=1 // pred_fallthru
      _
    // Predicated region
    $region58: #{autoencoder_forward.1} parent=1 // pred_check
      _
    $region59: #{autoencoder_forward.1} parent=1 // pred_check_branch
      %6591 = sbr.rel (0) target = $region61
    $region60: #{autoencoder_forward.1} parent=1 // pred_region
      %6593 = vsyncadd [#allocation5], 0
      %s6595 = sshll.u32 [#allocation4], 4
      %s6596 = int_to_ptr.vmem [resolvable:$true] %s6595
      %s6597 = sshll.u32 %s14, 4
      %s6598 = int_to_ptr.hbm [resolvable:$true] %s6597
      %6600 = dma.vmem_to_hbm [thread:$0]  %s6596, 64, %s6598, [#allocation5]
    $region61: #{autoencoder_forward.1} parent=1 // pred_fallthru
      _
    // Predicated region
    $region62: #{autoencoder_forward.1} parent=1 // pred_check
      _
    $region63: #{autoencoder_forward.1} parent=1 // pred_check_branch
      %6602 = sbr.rel (0) target = $region65
    $region64: #{autoencoder_forward.1} parent=1 // pred_region
      %6604 = dma.done [#allocation3], 128
    $region65: #{autoencoder_forward.1} parent=1 // pred_fallthru
      _
    // Predicated region
    $region66: #{autoencoder_forward.1} parent=1 // pred_check
      _
    $region67: #{autoencoder_forward.1} parent=1 // pred_check_branch
      %6606 = sbr.rel (0) target = $region69
    $region68: #{autoencoder_forward.1} parent=1 // pred_region
      %6608 = dma.done [#allocation5], 64
    $region69: #{autoencoder_forward.1} parent=1 // pred_fallthru
      _
    %6609 = vsyncpa [#allocation3], 1
    %6610 = vsyncpa [#allocation5], 1

</llo_original>
